<compile_context>
chip_gen: v5e
topology: v5e:2x2
jax: 0.10.0
libtpu: 0.0.40
codegen_flags: <defaults>
</compile_context>

<pallas_src>
import jax
import jax.numpy as jnp
from jax.experimental import pallas as pl
from jax.experimental.pallas import tpu as pltpu

EPS = 1e-5                       # PyTorch BatchNorm2d default eps
VMEM_LIMIT_BYTES = 48 * 1024 * 1024   # headroom under v7x's 64 MiB physical VMEM


# --------------------------------------------------------------------------
# Kernels
# --------------------------------------------------------------------------

def _zero_halo_and_fill(pad_ref, interior, H, W, C):
    """Write `interior` (H,W,C) into pad_ref (H+2,W+2,C); zero only the halo."""
    Hp, Wp = H + 2, W + 2
    zrow = jnp.zeros((1, Wp, C), jnp.float32)
    zcol = jnp.zeros((Hp, 1, C), jnp.float32)
    pad_ref[0:1, :, :] = zrow
    pad_ref[H + 1:H + 2, :, :] = zrow
    pad_ref[:, 0:1, :] = zcol
    pad_ref[:, W + 1:W + 2, :] = zcol
    pad_ref[1:H + 1, 1:W + 1, :] = interior


def _im2col_conv(pad_ref, patch_ref, w_ref, H, W, Cin):
    """3x3 conv: build (H*W, 9*Cin) patches in scratch, one MXU matmul."""
    apad = pad_ref[...]                               # (H+2, W+2, Cin)
    for j in range(9):
        kh, kw = divmod(j, 3)
        patch_ref[:, j * Cin:(j + 1) * Cin] = (
            apad[kh:kh + H, kw:kw + W, :].reshape(H * W, Cin))
    return jnp.dot(patch_ref[...], w_ref[...],
                   preferred_element_type=jnp.float32)  # (H*W, Cout)


def _write_stats(stat_ref, y, Cout):
    """Single-pass BN partials: per-tile sum and sum-of-squares."""
    stat_ref[0:1, 0:1, :] = jnp.sum(y, axis=0, keepdims=True).reshape(1, 1, Cout)
    stat_ref[0:1, 1:2, :] = jnp.sum(y * y, axis=0, keepdims=True).reshape(1, 1, Cout)


def conv1_kernel(x_ref, w1_ref, y1_ref, stat1_ref, xpad_ref, patch_ref):
    """conv1 on one image + BN1 partial sums.

    x_ref   : (1, H, W, Cin)        w1_ref : (9*Cin, Cout)
    y1_ref  : (1, H, W, Cout)       stat1_ref : (1, 2, Cout)
    xpad_ref: VMEM (H+2, W+2, Cin)  patch_ref : VMEM (H*W, 9*Cin)
    """
    _, H, W, Cin = x_ref.shape
    Cout = w1_ref.shape[1]
    _zero_halo_and_fill(xpad_ref, x_ref[...].reshape(H, W, Cin), H, W, Cin)
    y = _im2col_conv(xpad_ref, patch_ref, w1_ref, H, W, Cin)
    _write_stats(stat1_ref, y, Cout)
    y1_ref[...] = y.reshape(1, H, W, Cout)


def conv2_kernel(y1_ref, scale1_ref, shift1_ref, w2_ref,
                 y2_ref, stat2_ref, apad_ref, patch_ref):
    """Fused BN1-affine + ReLU, then conv2 + BN2 partial sums (one image).

    y1_ref  : (1, H, W, C)   scale1/shift1 : (1, C)   w2_ref : (9*C, C)
    y2_ref  : (1, H, W, C)   stat2_ref : (1, 2, C)
    apad_ref: VMEM (H+2, W+2, C)   patch_ref : VMEM (H*W, 9*C)
    """
    _, H, W, C = y1_ref.shape
    a = y1_ref[...].reshape(H, W, C) * scale1_ref[...] + shift1_ref[...]
    a = jnp.maximum(a, 0.0)                            # post-BN1 ReLU
    _zero_halo_and_fill(apad_ref, a, H, W, C)          # zero-pad for conv2
    y = _im2col_conv(apad_ref, patch_ref, w2_ref, H, W, C)
    _write_stats(stat2_ref, y, C)
    y2_ref[...] = y.reshape(1, H, W, C)


def epilogue_kernel(y2_ref, x_ref, scale2_ref, shift2_ref, o_ref):
    """Fused BN2-affine + residual add + ReLU (pure VPU, one image)."""
    y = y2_ref[...] * scale2_ref[...] + shift2_ref[...] + x_ref[...]
    o_ref[...] = jnp.maximum(y, 0.0)


# --------------------------------------------------------------------------
# Wrapper
# --------------------------------------------------------------------------

def _finalize_bn(stat_partials, gamma, beta, count):
    """Fold per-image sum/sumsq into an affine (scale, shift) pair."""
    s = jnp.sum(stat_partials, axis=0)                 # (2, C)
    mean = s[0] / count
    var = jnp.maximum(s[1] / count - mean * mean, 0.0)  # biased var (training BN)
    inv = jax.lax.rsqrt(var + EPS)
    scale = gamma * inv
    shift = beta - mean * scale
    C = scale.shape[0]
    return scale.reshape(1, C), shift.reshape(1, C)


@jax.jit
def basic_block(x_nchw, w1, g1, b1, w2, g2, b2):
    """x_nchw: (N, C, H, W) float32 -> (N, C, H, W) float32."""
    N, Cin, H, W = x_nchw.shape
    Cout = w1.shape[-1]
    assert Cin == Cout, "identity residual requires in_channels == out_channels"

    x = jnp.transpose(x_nchw, (0, 2, 3, 1)).astype(jnp.float32)   # NHWC
    w1m = w1.reshape(9 * Cin, Cout).astype(jnp.float32)           # (kh,kw,ci) x co
    w2m = w2.reshape(9 * Cout, Cout).astype(jnp.float32)
    count = float(N * H * W)

    cparams = pltpu.CompilerParams(
        dimension_semantics=("parallel",),             # megacore split over N
        vmem_limit_bytes=VMEM_LIMIT_BYTES)

    def act_spec(C):
        return pl.BlockSpec((1, H, W, C), lambda n: (n, 0, 0, 0))

    def resident_spec(shape):                          # weights / gamma-beta affine
        return pl.BlockSpec(shape, lambda n: (0,) * len(shape))

    stat_spec = pl.BlockSpec((1, 2, Cout), lambda n: (n, 0, 0))

    # ---- phase 1: conv1 + BN1 partial sums ------------------------------
    y1, stat1 = pl.pallas_call(
        conv1_kernel,
        grid=(N,),
        in_specs=[act_spec(Cin), resident_spec((9 * Cin, Cout))],
        out_specs=(act_spec(Cout), stat_spec),
        out_shape=(jax.ShapeDtypeStruct((N, H, W, Cout), jnp.float32),
                   jax.ShapeDtypeStruct((N, 2, Cout), jnp.float32)),
        scratch_shapes=[pltpu.VMEM((H + 2, W + 2, Cin), jnp.float32),
                        pltpu.VMEM((H * W, 9 * Cin), jnp.float32)],
        compiler_params=cparams,
    )(x, w1m)

    scale1, shift1 = _finalize_bn(stat1, g1, b1, count)

    # ---- phase 2: BN1 + ReLU + conv2 + BN2 partial sums -----------------
    y2, stat2 = pl.pallas_call(
        conv2_kernel,
        grid=(N,),
        in_specs=[act_spec(Cout), resident_spec((1, Cout)),
                  resident_spec((1, Cout)), resident_spec((9 * Cout, Cout))],
        out_specs=(act_spec(Cout), stat_spec),
        out_shape=(jax.ShapeDtypeStruct((N, H, W, Cout), jnp.float32),
                   jax.ShapeDtypeStruct((N, 2, Cout), jnp.float32)),
        scratch_shapes=[pltpu.VMEM((H + 2, W + 2, Cout), jnp.float32),
                        pltpu.VMEM((H * W, 9 * Cout), jnp.float32)],
        compiler_params=cparams,
    )(y1, scale1, shift1, w2m)

    scale2, shift2 = _finalize_bn(stat2, g2, b2, count)

    # ---- phase 3: BN2 + residual add + ReLU ------------------------------
    out_nhwc = pl.pallas_call(
        epilogue_kernel,
        grid=(N,),
        in_specs=[act_spec(Cout), act_spec(Cin),
                  resident_spec((1, Cout)), resident_spec((1, Cout))],
        out_specs=act_spec(Cout),
        out_shape=jax.ShapeDtypeStruct((N, H, W, Cout), jnp.float32),
        compiler_params=cparams,
    )(y2, x, scale2, shift2)

    return jnp.transpose(out_nhwc, (0, 3, 1, 2))       # NHWC -> NCHW


# --------------------------------------------------------------------------
# Reference + test harness
# --------------------------------------------------------------------------

def reference_basic_block(x_nchw, w1, g1, b1, w2, g2, b2):
    """Pure-JAX (XLA) reference of the PyTorch BasicBlock forward."""
    x = jnp.transpose(x_nchw, (0, 2, 3, 1)).astype(jnp.float32)

    def conv(a, w):
        return jax.lax.conv_general_dilated(
            a, w, window_strides=(1, 1), padding=((1, 1), (1, 1)),
            dimension_numbers=("NHWC", "HWIO", "NHWC"))

    def bn(a, g, b):
        mean = jnp.mean(a, axis=(0, 1, 2))
        var = jnp.mean((a - mean) ** 2, axis=(0, 1, 2))   # biased (training mode)
        return (a - mean) * jax.lax.rsqrt(var + EPS) * g + b

    out = jnp.maximum(bn(conv(x, w1), g1, b1), 0.0)
    out = bn(conv(out, w2), g2, b2)
    out = jnp.maximum(out + x, 0.0)
    return jnp.transpose(out, (0, 3, 1, 2))


def init_params(key, in_channels, out_channels):
    """Conv weights stored HWIO (kh, kw, Cin, Cout); BN gamma=1, beta=0."""
    k1, k2 = jax.random.split(key)
    fan_in1 = 3 * 3 * in_channels
    fan_in2 = 3 * 3 * out_channels
    w1 = jax.random.normal(k1, (3, 3, in_channels, out_channels),
                           jnp.float32) * (2.0 / fan_in1) ** 0.5
    w2 = jax.random.normal(k2, (3, 3, out_channels, out_channels),
                           jnp.float32) * (2.0 / fan_in2) ** 0.5
    g1 = jnp.ones((out_channels,), jnp.float32)
    b1 = jnp.zeros((out_channels,), jnp.float32)
    g2 = jnp.ones((out_channels,), jnp.float32)
    b2 = jnp.zeros((out_channels,), jnp.float32)
    return w1, g1, b1, w2, g2, b2


if __name__ == "__main__":
    # Small shapes: batch=2, channels=8 (in == out, stride=1), spatial 16x16.
    N, C, H, W = 2, 8, 16, 16
    key = jax.random.PRNGKey(0)
    kx, kp = jax.random.split(key)

    x = jax.random.normal(kx, (N, C, H, W), jnp.float32)   # NCHW, like PyTorch
    params = init_params(kp, C, C)

    out = basic_block(x, *params)
    out = jax.block_until_ready(out)

    ref = reference_basic_block(x, *params)
    max_err = float(jnp.max(jnp.abs(out - ref)))

    assert out.shape == (N, C, H, W), out.shape
    assert bool(jnp.all(out >= 0.0))          # final ReLU
    assert bool(jnp.all(jnp.isfinite(out)))
    assert max_err < 1e-3, f"mismatch vs reference: {max_err}"
    print("KERNEL_OK")
</pallas_src>

<mosaic_0001>
module attributes {stable_mosaic.version = 11 : i64} {
  func.func @conv1_kernel(%arg0: i32, %arg1: memref<1x16x16x8xf32, #tpu.memory_space<vmem>>, %arg2: memref<72x8xf32, #tpu.memory_space<vmem>>, %arg3: memref<1x16x16x8xf32, #tpu.memory_space<vmem>>, %arg4: memref<1x2x8xf32, #tpu.memory_space<vmem>>, %arg5: memref<18x18x8xf32, #tpu.memory_space<vmem>>, %arg6: memref<256x72xf32, #tpu.memory_space<vmem>>) attributes {dimension_semantics = [#tpu.dimension_semantics<parallel>], iteration_bounds = array<i64: 2>, scalar_prefetch = 0 : i64, scratch_operands = 2 : i64, tpu.core_type = #tpu.core_type<tc>, window_params = [{transform_indices = @transform_0, window_bounds = array<i64: 1, 16, 16, 8>}, {pipeline_mode = #tpu.pipeline_mode<synchronous>, transform_indices = @transform_1, window_bounds = array<i64: 72, 8>}, {transform_indices = @transform_2, window_bounds = array<i64: 1, 16, 16, 8>}, {transform_indices = @transform_3, window_bounds = array<i64: 1, 2, 8>}]} {
    %c0 = arith.constant 0 : index
    %c0_0 = arith.constant 0 : index
    %c0_1 = arith.constant 0 : index
    %c0_2 = arith.constant 0 : index
    %0 = vector.load %arg1[%c0, %c0_0, %c0_1, %c0_2] : memref<1x16x16x8xf32, #tpu.memory_space<vmem>>, vector<1x16x16x8xf32>
    %1 = vector.shape_cast %0 : vector<1x16x16x8xf32> to vector<16x16x8xf32>
    %cst = arith.constant 0.000000e+00 : f32
    %2 = vector.broadcast %cst : f32 to vector<1x18x8xf32>
    %cst_3 = arith.constant 0.000000e+00 : f32
    %3 = vector.broadcast %cst_3 : f32 to vector<18x1x8xf32>
    %c0_4 = arith.constant 0 : index
    %c0_5 = arith.constant 0 : index
    %c0_6 = arith.constant 0 : index
    %4 = vector.load %arg5[%c0_4, %c0_5, %c0_6] : memref<18x18x8xf32, #tpu.memory_space<vmem>>, vector<1x18x8xf32>
    tpu.vector_store %arg5[%c0_4, %c0_5, %c0_6], %2 {strides = array<i32>} : memref<18x18x8xf32, #tpu.memory_space<vmem>>, vector<1x18x8xf32>,
    %c17 = arith.constant 17 : index
    %c0_7 = arith.constant 0 : index
    %c0_8 = arith.constant 0 : index
    %5 = vector.load %arg5[%c17, %c0_7, %c0_8] : memref<18x18x8xf32, #tpu.memory_space<vmem>>, vector<1x18x8xf32>
    tpu.vector_store %arg5[%c17, %c0_7, %c0_8], %2 {strides = array<i32>} : memref<18x18x8xf32, #tpu.memory_space<vmem>>, vector<1x18x8xf32>,
    %c0_9 = arith.constant 0 : index
    %c0_10 = arith.constant 0 : index
    %c0_11 = arith.constant 0 : index
    %6 = vector.load %arg5[%c0_9, %c0_10, %c0_11] : memref<18x18x8xf32, #tpu.memory_space<vmem>>, vector<18x1x8xf32>
    tpu.vector_store %arg5[%c0_9, %c0_10, %c0_11], %3 {strides = array<i32>} : memref<18x18x8xf32, #tpu.memory_space<vmem>>, vector<18x1x8xf32>,
    %c0_12 = arith.constant 0 : index
    %c17_13 = arith.constant 17 : index
    %c0_14 = arith.constant 0 : index
    %7 = vector.load %arg5[%c0_12, %c17_13, %c0_14] : memref<18x18x8xf32, #tpu.memory_space<vmem>>, vector<18x1x8xf32>
    tpu.vector_store %arg5[%c0_12, %c17_13, %c0_14], %3 {strides = array<i32>} : memref<18x18x8xf32, #tpu.memory_space<vmem>>, vector<18x1x8xf32>,
    %c1 = arith.constant 1 : index
    %c1_15 = arith.constant 1 : index
    %c0_16 = arith.constant 0 : index
    %8 = vector.load %arg5[%c1, %c1_15, %c0_16] : memref<18x18x8xf32, #tpu.memory_space<vmem>>, vector<16x16x8xf32>
    tpu.vector_store %arg5[%c1, %c1_15, %c0_16], %1 {strides = array<i32>} : memref<18x18x8xf32, #tpu.memory_space<vmem>>, vector<16x16x8xf32>,
    %c0_17 = arith.constant 0 : index
    %c0_18 = arith.constant 0 : index
    %c0_19 = arith.constant 0 : index
    %9 = vector.load %arg5[%c0_17, %c0_18, %c0_19] : memref<18x18x8xf32, #tpu.memory_space<vmem>>, vector<18x18x8xf32>
    %10 = vector.extract_strided_slice %9 {offsets = [0, 0, 0], sizes = [16, 16, 8], strides = [1, 1, 1]} : vector<18x18x8xf32> to vector<16x16x8xf32>
    %11 = vector.shape_cast %10 : vector<16x16x8xf32> to vector<256x8xf32>
    %c0_20 = arith.constant 0 : index
    %c0_21 = arith.constant 0 : index
    %12 = vector.load %arg6[%c0_20, %c0_21] : memref<256x72xf32, #tpu.memory_space<vmem>>, vector<256x8xf32>
    tpu.vector_store %arg6[%c0_20, %c0_21], %11 {strides = array<i32>} : memref<256x72xf32, #tpu.memory_space<vmem>>, vector<256x8xf32>,
    %13 = vector.extract_strided_slice %9 {offsets = [0, 1, 0], sizes = [16, 16, 8], strides = [1, 1, 1]} : vector<18x18x8xf32> to vector<16x16x8xf32>
    %14 = vector.shape_cast %13 : vector<16x16x8xf32> to vector<256x8xf32>
    %c0_22 = arith.constant 0 : index
    %c8 = arith.constant 8 : index
    %15 = vector.load %arg6[%c0_22, %c8] : memref<256x72xf32, #tpu.memory_space<vmem>>, vector<256x8xf32>
    tpu.vector_store %arg6[%c0_22, %c8], %14 {strides = array<i32>} : memref<256x72xf32, #tpu.memory_space<vmem>>, vector<256x8xf32>,
    %16 = vector.extract_strided_slice %9 {offsets = [0, 2, 0], sizes = [16, 16, 8], strides = [1, 1, 1]} : vector<18x18x8xf32> to vector<16x16x8xf32>
    %17 = vector.shape_cast %16 : vector<16x16x8xf32> to vector<256x8xf32>
    %c0_23 = arith.constant 0 : index
    %c16 = arith.constant 16 : index
    %18 = vector.load %arg6[%c0_23, %c16] : memref<256x72xf32, #tpu.memory_space<vmem>>, vector<256x8xf32>
    tpu.vector_store %arg6[%c0_23, %c16], %17 {strides = array<i32>} : memref<256x72xf32, #tpu.memory_space<vmem>>, vector<256x8xf32>,
    %19 = vector.extract_strided_slice %9 {offsets = [1, 0, 0], sizes = [16, 16, 8], strides = [1, 1, 1]} : vector<18x18x8xf32> to vector<16x16x8xf32>
    %20 = vector.shape_cast %19 : vector<16x16x8xf32> to vector<256x8xf32>
    %c0_24 = arith.constant 0 : index
    %c24 = arith.constant 24 : index
    %21 = vector.load %arg6[%c0_24, %c24] : memref<256x72xf32, #tpu.memory_space<vmem>>, vector<256x8xf32>
    tpu.vector_store %arg6[%c0_24, %c24], %20 {strides = array<i32>} : memref<256x72xf32, #tpu.memory_space<vmem>>, vector<256x8xf32>,
    %22 = vector.extract_strided_slice %9 {offsets = [1, 1, 0], sizes = [16, 16, 8], strides = [1, 1, 1]} : vector<18x18x8xf32> to vector<16x16x8xf32>
    %23 = vector.shape_cast %22 : vector<16x16x8xf32> to vector<256x8xf32>
    %c0_25 = arith.constant 0 : index
    %c32 = arith.constant 32 : index
    %24 = vector.load %arg6[%c0_25, %c32] : memref<256x72xf32, #tpu.memory_space<vmem>>, vector<256x8xf32>
    tpu.vector_store %arg6[%c0_25, %c32], %23 {strides = array<i32>} : memref<256x72xf32, #tpu.memory_space<vmem>>, vector<256x8xf32>,
    %25 = vector.extract_strided_slice %9 {offsets = [1, 2, 0], sizes = [16, 16, 8], strides = [1, 1, 1]} : vector<18x18x8xf32> to vector<16x16x8xf32>
    %26 = vector.shape_cast %25 : vector<16x16x8xf32> to vector<256x8xf32>
    %c0_26 = arith.constant 0 : index
    %c40 = arith.constant 40 : index
    %27 = vector.load %arg6[%c0_26, %c40] : memref<256x72xf32, #tpu.memory_space<vmem>>, vector<256x8xf32>
    tpu.vector_store %arg6[%c0_26, %c40], %26 {strides = array<i32>} : memref<256x72xf32, #tpu.memory_space<vmem>>, vector<256x8xf32>,
    %28 = vector.extract_strided_slice %9 {offsets = [2, 0, 0], sizes = [16, 16, 8], strides = [1, 1, 1]} : vector<18x18x8xf32> to vector<16x16x8xf32>
    %29 = vector.shape_cast %28 : vector<16x16x8xf32> to vector<256x8xf32>
    %c0_27 = arith.constant 0 : index
    %c48 = arith.constant 48 : index
    %30 = vector.load %arg6[%c0_27, %c48] : memref<256x72xf32, #tpu.memory_space<vmem>>, vector<256x8xf32>
    tpu.vector_store %arg6[%c0_27, %c48], %29 {strides = array<i32>} : memref<256x72xf32, #tpu.memory_space<vmem>>, vector<256x8xf32>,
    %31 = vector.extract_strided_slice %9 {offsets = [2, 1, 0], sizes = [16, 16, 8], strides = [1, 1, 1]} : vector<18x18x8xf32> to vector<16x16x8xf32>
    %32 = vector.shape_cast %31 : vector<16x16x8xf32> to vector<256x8xf32>
    %c0_28 = arith.constant 0 : index
    %c56 = arith.constant 56 : index
    %33 = vector.load %arg6[%c0_28, %c56] : memref<256x72xf32, #tpu.memory_space<vmem>>, vector<256x8xf32>
    tpu.vector_store %arg6[%c0_28, %c56], %32 {strides = array<i32>} : memref<256x72xf32, #tpu.memory_space<vmem>>, vector<256x8xf32>,
    %34 = vector.extract_strided_slice %9 {offsets = [2, 2, 0], sizes = [16, 16, 8], strides = [1, 1, 1]} : vector<18x18x8xf32> to vector<16x16x8xf32>
    %35 = vector.shape_cast %34 : vector<16x16x8xf32> to vector<256x8xf32>
    %c0_29 = arith.constant 0 : index
    %c64 = arith.constant 64 : index
    %36 = vector.load %arg6[%c0_29, %c64] : memref<256x72xf32, #tpu.memory_space<vmem>>, vector<256x8xf32>
    tpu.vector_store %arg6[%c0_29, %c64], %35 {strides = array<i32>} : memref<256x72xf32, #tpu.memory_space<vmem>>, vector<256x8xf32>,
    %c0_30 = arith.constant 0 : index
    %c0_31 = arith.constant 0 : index
    %37 = vector.load %arg6[%c0_30, %c0_31] : memref<256x72xf32, #tpu.memory_space<vmem>>, vector<256x72xf32>
    %c0_32 = arith.constant 0 : index
    %c0_33 = arith.constant 0 : index
    %38 = vector.load %arg2[%c0_32, %c0_33] : memref<72x8xf32, #tpu.memory_space<vmem>>, vector<72x8xf32>
    %cst_34 = arith.constant dense<0.000000e+00> : vector<256x8xf32>
    %39 = tpu.matmul %37, %38, %cst_34 {dimension_numbers = #tpu.dot_dimension_numbers<[1], [0], [0], [1], [0, 0, 1, 1], [], []>} : vector<256x72xf32>, vector<72x8xf32>, vector<256x8xf32> -> vector<256x8xf32>
    %cst_35 = arith.constant dense<0.000000e+00> : vector<8xf32>
    %40 = vector.multi_reduction <add>, %39, %cst_35 [0] : vector<256x8xf32> to vector<8xf32>
    %41 = vector.shape_cast %40 : vector<8xf32> to vector<1x8xf32>
    %42 = vector.shape_cast %41 : vector<1x8xf32> to vector<1x1x8xf32>
    %c0_36 = arith.constant 0 : index
    %c0_37 = arith.constant 0 : index
    %c0_38 = arith.constant 0 : index
    %43 = vector.load %arg4[%c0_36, %c0_37, %c0_38] : memref<1x2x8xf32, #tpu.memory_space<vmem>>, vector<1x1x8xf32>
    tpu.vector_store %arg4[%c0_36, %c0_37, %c0_38], %42 {strides = array<i32>} : memref<1x2x8xf32, #tpu.memory_space<vmem>>, vector<1x1x8xf32>,
    %44 = arith.mulf %39, %39 : vector<256x8xf32>
    %cst_39 = arith.constant dense<0.000000e+00> : vector<8xf32>
    %45 = vector.multi_reduction <add>, %44, %cst_39 [0] : vector<256x8xf32> to vector<8xf32>
    %46 = vector.shape_cast %45 : vector<8xf32> to vector<1x8xf32>
    %47 = vector.shape_cast %46 : vector<1x8xf32> to vector<1x1x8xf32>
    %c0_40 = arith.constant 0 : index
    %c1_41 = arith.constant 1 : index
    %c0_42 = arith.constant 0 : index
    %48 = vector.load %arg4[%c0_40, %c1_41, %c0_42] : memref<1x2x8xf32, #tpu.memory_space<vmem>>, vector<1x1x8xf32>
    tpu.vector_store %arg4[%c0_40, %c1_41, %c0_42], %47 {strides = array<i32>} : memref<1x2x8xf32, #tpu.memory_space<vmem>>, vector<1x1x8xf32>,
    %49 = vector.shape_cast %39 : vector<256x8xf32> to vector<1x16x16x8xf32>
    %c0_43 = arith.constant 0 : index
    %c0_44 = arith.constant 0 : index
    %c0_45 = arith.constant 0 : index
    %c0_46 = arith.constant 0 : index
    %50 = vector.load %arg3[%c0_43, %c0_44, %c0_45, %c0_46] : memref<1x16x16x8xf32, #tpu.memory_space<vmem>>, vector<1x16x16x8xf32>
    tpu.vector_store %arg3[%c0_43, %c0_44, %c0_45, %c0_46], %49 {strides = array<i32>} : memref<1x16x16x8xf32, #tpu.memory_space<vmem>>, vector<1x16x16x8xf32>,
    return
  }
  func.func @transform_0(%arg0: i32) -> (i32, i32, i32, i32) {
    %c0_i32 = arith.constant 0 : i32
    %c0_i32_0 = arith.constant 0 : i32
    %c0_i32_1 = arith.constant 0 : i32
    %c0_i32_2 = arith.constant 0 : i32
    return %arg0, %c0_i32, %c0_i32_0, %c0_i32_1 : i32, i32, i32, i32
  }
  func.func @transform_1(%arg0: i32) -> (i32, i32) {
    %c0_i32 = arith.constant 0 : i32
    %c0_i32_0 = arith.constant 0 : i32
    %c0_i32_1 = arith.constant 0 : i32
    return %c0_i32, %c0_i32_0 : i32, i32
  }
  func.func @transform_2(%arg0: i32) -> (i32, i32, i32, i32) {
    %c0_i32 = arith.constant 0 : i32
    %c0_i32_0 = arith.constant 0 : i32
    %c0_i32_1 = arith.constant 0 : i32
    %c0_i32_2 = arith.constant 0 : i32
    return %arg0, %c0_i32, %c0_i32_0, %c0_i32_1 : i32, i32, i32, i32
  }
  func.func @transform_3(%arg0: i32) -> (i32, i32, i32) {
    %c0_i32 = arith.constant 0 : i32
    %c0_i32_0 = arith.constant 0 : i32
    %c0_i32_1 = arith.constant 0 : i32
    return %arg0, %c0_i32, %c0_i32_0 : i32, i32, i32
  }
}

module attributes {stable_mosaic.version = 11 : i64} {
  func.func @epilogue_kernel(%arg0: i32, %arg1: memref<1x16x16x8xf32, #tpu.memory_space<vmem>>, %arg2: memref<1x16x16x8xf32, #tpu.memory_space<vmem>>, %arg3: memref<1x8xf32, #tpu.memory_space<vmem>>, %arg4: memref<1x8xf32, #tpu.memory_space<vmem>>, %arg5: memref<1x16x16x8xf32, #tpu.memory_space<vmem>>) attributes {dimension_semantics = [#tpu.dimension_semantics<parallel>], iteration_bounds = array<i64: 2>, scalar_prefetch = 0 : i64, scratch_operands = 0 : i64, tpu.core_type = #tpu.core_type<tc>, window_params = [{transform_indices = @transform_0, window_bounds = array<i64: 1, 16, 16, 8>}, {transform_indices = @transform_1, window_bounds = array<i64: 1, 16, 16, 8>}, {pipeline_mode = #tpu.pipeline_mode<synchronous>, transform_indices = @transform_2, window_bounds = array<i64: 1, 8>}, {pipeline_mode = #tpu.pipeline_mode<synchronous>, transform_indices = @transform_3, window_bounds = array<i64: 1, 8>}, {transform_indices = @transform_4, window_bounds = array<i64: 1, 16, 16, 8>}]} {
    %c0 = arith.constant 0 : index
    %c0_0 = arith.constant 0 : index
    %c0_1 = arith.constant 0 : index
    %c0_2 = arith.constant 0 : index
    %0 = vector.load %arg1[%c0, %c0_0, %c0_1, %c0_2] : memref<1x16x16x8xf32, #tpu.memory_space<vmem>>, vector<1x16x16x8xf32>
    %c0_3 = arith.constant 0 : index
    %c0_4 = arith.constant 0 : index
    %1 = vector.load %arg3[%c0_3, %c0_4] : memref<1x8xf32, #tpu.memory_space<vmem>>, vector<1x8xf32>
    %2 = vector.shape_cast %1 : vector<1x8xf32> to vector<1x1x1x8xf32>
    %3 = vector.broadcast %2 : vector<1x1x1x8xf32> to vector<1x16x16x8xf32>
    %4 = arith.mulf %0, %3 : vector<1x16x16x8xf32>
    %c0_5 = arith.constant 0 : index
    %c0_6 = arith.constant 0 : index
    %5 = vector.load %arg4[%c0_5, %c0_6] : memref<1x8xf32, #tpu.memory_space<vmem>>, vector<1x8xf32>
    %6 = vector.shape_cast %5 : vector<1x8xf32> to vector<1x1x1x8xf32>
    %7 = vector.broadcast %6 : vector<1x1x1x8xf32> to vector<1x16x16x8xf32>
    %8 = arith.addf %4, %7 : vector<1x16x16x8xf32>
    %c0_7 = arith.constant 0 : index
    %c0_8 = arith.constant 0 : index
    %c0_9 = arith.constant 0 : index
    %c0_10 = arith.constant 0 : index
    %9 = vector.load %arg2[%c0_7, %c0_8, %c0_9, %c0_10] : memref<1x16x16x8xf32, #tpu.memory_space<vmem>>, vector<1x16x16x8xf32>
    %10 = arith.addf %8, %9 : vector<1x16x16x8xf32>
    %cst = arith.constant 0.000000e+00 : f32
    %11 = vector.broadcast %cst : f32 to vector<1x16x16x8xf32>
    %12 = arith.maximumf %10, %11 : vector<1x16x16x8xf32>
    %c0_11 = arith.constant 0 : index
    %c0_12 = arith.constant 0 : index
    %c0_13 = arith.constant 0 : index
    %c0_14 = arith.constant 0 : index
    %13 = vector.load %arg5[%c0_11, %c0_12, %c0_13, %c0_14] : memref<1x16x16x8xf32, #tpu.memory_space<vmem>>, vector<1x16x16x8xf32>
    tpu.vector_store %arg5[%c0_11, %c0_12, %c0_13, %c0_14], %12 {strides = array<i32>} : memref<1x16x16x8xf32, #tpu.memory_space<vmem>>, vector<1x16x16x8xf32>,
    return
  }
  func.func @transform_0(%arg0: i32) -> (i32, i32, i32, i32) {
    %c0_i32 = arith.constant 0 : i32
    %c0_i32_0 = arith.constant 0 : i32
    %c0_i32_1 = arith.constant 0 : i32
    %c0_i32_2 = arith.constant 0 : i32
    return %arg0, %c0_i32, %c0_i32_0, %c0_i32_1 : i32, i32, i32, i32
  }
  func.func @transform_1(%arg0: i32) -> (i32, i32, i32, i32) {
    %c0_i32 = arith.constant 0 : i32
    %c0_i32_0 = arith.constant 0 : i32
    %c0_i32_1 = arith.constant 0 : i32
    %c0_i32_2 = arith.constant 0 : i32
    return %arg0, %c0_i32, %c0_i32_0, %c0_i32_1 : i32, i32, i32, i32
  }
  func.func @transform_2(%arg0: i32) -> (i32, i32) {
    %c0_i32 = arith.constant 0 : i32
    %c0_i32_0 = arith.constant 0 : i32
    %c0_i32_1 = arith.constant 0 : i32
    return %c0_i32, %c0_i32_0 : i32, i32
  }
  func.func @transform_3(%arg0: i32) -> (i32, i32) {
    %c0_i32 = arith.constant 0 : i32
    %c0_i32_0 = arith.constant 0 : i32
    %c0_i32_1 = arith.constant 0 : i32
    return %c0_i32, %c0_i32_0 : i32, i32
  }
  func.func @transform_4(%arg0: i32) -> (i32, i32, i32, i32) {
    %c0_i32 = arith.constant 0 : i32
    %c0_i32_0 = arith.constant 0 : i32
    %c0_i32_1 = arith.constant 0 : i32
    %c0_i32_2 = arith.constant 0 : i32
    return %arg0, %c0_i32, %c0_i32_0, %c0_i32_1 : i32, i32, i32, i32
  }
}

module attributes {stable_mosaic.version = 11 : i64} {
  func.func @conv2_kernel(%arg0: i32, %arg1: memref<1x16x16x8xf32, #tpu.memory_space<vmem>>, %arg2: memref<1x8xf32, #tpu.memory_space<vmem>>, %arg3: memref<1x8xf32, #tpu.memory_space<vmem>>, %arg4: memref<72x8xf32, #tpu.memory_space<vmem>>, %arg5: memref<1x16x16x8xf32, #tpu.memory_space<vmem>>, %arg6: memref<1x2x8xf32, #tpu.memory_space<vmem>>, %arg7: memref<18x18x8xf32, #tpu.memory_space<vmem>>, %arg8: memref<256x72xf32, #tpu.memory_space<vmem>>) attributes {dimension_semantics = [#tpu.dimension_semantics<parallel>], iteration_bounds = array<i64: 2>, scalar_prefetch = 0 : i64, scratch_operands = 2 : i64, tpu.core_type = #tpu.core_type<tc>, window_params = [{transform_indices = @transform_0, window_bounds = array<i64: 1, 16, 16, 8>}, {pipeline_mode = #tpu.pipeline_mode<synchronous>, transform_indices = @transform_1, window_bounds = array<i64: 1, 8>}, {pipeline_mode = #tpu.pipeline_mode<synchronous>, transform_indices = @transform_2, window_bounds = array<i64: 1, 8>}, {pipeline_mode = #tpu.pipeline_mode<synchronous>, transform_indices = @transform_3, window_bounds = array<i64: 72, 8>}, {transform_indices = @transform_4, window_bounds = array<i64: 1, 16, 16, 8>}, {transform_indices = @transform_5, window_bounds = array<i64: 1, 2, 8>}]} {
    %c0 = arith.constant 0 : index
    %c0_0 = arith.constant 0 : index
    %c0_1 = arith.constant 0 : index
    %c0_2 = arith.constant 0 : index
    %0 = vector.load %arg1[%c0, %c0_0, %c0_1, %c0_2] : memref<1x16x16x8xf32, #tpu.memory_space<vmem>>, vector<1x16x16x8xf32>
    %1 = vector.shape_cast %0 : vector<1x16x16x8xf32> to vector<16x16x8xf32>
    %c0_3 = arith.constant 0 : index
    %c0_4 = arith.constant 0 : index
    %2 = vector.load %arg2[%c0_3, %c0_4] : memref<1x8xf32, #tpu.memory_space<vmem>>, vector<1x8xf32>
    %3 = vector.shape_cast %2 : vector<1x8xf32> to vector<1x1x8xf32>
    %4 = vector.broadcast %3 : vector<1x1x8xf32> to vector<16x16x8xf32>
    %5 = arith.mulf %1, %4 : vector<16x16x8xf32>
    %c0_5 = arith.constant 0 : index
    %c0_6 = arith.constant 0 : index
    %6 = vector.load %arg3[%c0_5, %c0_6] : memref<1x8xf32, #tpu.memory_space<vmem>>, vector<1x8xf32>
    %7 = vector.shape_cast %6 : vector<1x8xf32> to vector<1x1x8xf32>
    %8 = vector.broadcast %7 : vector<1x1x8xf32> to vector<16x16x8xf32>
    %9 = arith.addf %5, %8 : vector<16x16x8xf32>
    %cst = arith.constant 0.000000e+00 : f32
    %10 = vector.broadcast %cst : f32 to vector<16x16x8xf32>
    %11 = arith.maximumf %9, %10 : vector<16x16x8xf32>
    %cst_7 = arith.constant 0.000000e+00 : f32
    %12 = vector.broadcast %cst_7 : f32 to vector<1x18x8xf32>
    %cst_8 = arith.constant 0.000000e+00 : f32
    %13 = vector.broadcast %cst_8 : f32 to vector<18x1x8xf32>
    %c0_9 = arith.constant 0 : index
    %c0_10 = arith.constant 0 : index
    %c0_11 = arith.constant 0 : index
    %14 = vector.load %arg7[%c0_9, %c0_10, %c0_11] : memref<18x18x8xf32, #tpu.memory_space<vmem>>, vector<1x18x8xf32>
    tpu.vector_store %arg7[%c0_9, %c0_10, %c0_11], %12 {strides = array<i32>} : memref<18x18x8xf32, #tpu.memory_space<vmem>>, vector<1x18x8xf32>,
    %c17 = arith.constant 17 : index
    %c0_12 = arith.constant 0 : index
    %c0_13 = arith.constant 0 : index
    %15 = vector.load %arg7[%c17, %c0_12, %c0_13] : memref<18x18x8xf32, #tpu.memory_space<vmem>>, vector<1x18x8xf32>
    tpu.vector_store %arg7[%c17, %c0_12, %c0_13], %12 {strides = array<i32>} : memref<18x18x8xf32, #tpu.memory_space<vmem>>, vector<1x18x8xf32>,
    %c0_14 = arith.constant 0 : index
    %c0_15 = arith.constant 0 : index
    %c0_16 = arith.constant 0 : index
    %16 = vector.load %arg7[%c0_14, %c0_15, %c0_16] : memref<18x18x8xf32, #tpu.memory_space<vmem>>, vector<18x1x8xf32>
    tpu.vector_store %arg7[%c0_14, %c0_15, %c0_16], %13 {strides = array<i32>} : memref<18x18x8xf32, #tpu.memory_space<vmem>>, vector<18x1x8xf32>,
    %c0_17 = arith.constant 0 : index
    %c17_18 = arith.constant 17 : index
    %c0_19 = arith.constant 0 : index
    %17 = vector.load %arg7[%c0_17, %c17_18, %c0_19] : memref<18x18x8xf32, #tpu.memory_space<vmem>>, vector<18x1x8xf32>
    tpu.vector_store %arg7[%c0_17, %c17_18, %c0_19], %13 {strides = array<i32>} : memref<18x18x8xf32, #tpu.memory_space<vmem>>, vector<18x1x8xf32>,
    %c1 = arith.constant 1 : index
    %c1_20 = arith.constant 1 : index
    %c0_21 = arith.constant 0 : index
    %18 = vector.load %arg7[%c1, %c1_20, %c0_21] : memref<18x18x8xf32, #tpu.memory_space<vmem>>, vector<16x16x8xf32>
    tpu.vector_store %arg7[%c1, %c1_20, %c0_21], %11 {strides = array<i32>} : memref<18x18x8xf32, #tpu.memory_space<vmem>>, vector<16x16x8xf32>,
    %c0_22 = arith.constant 0 : index
    %c0_23 = arith.constant 0 : index
    %c0_24 = arith.constant 0 : index
    %19 = vector.load %arg7[%c0_22, %c0_23, %c0_24] : memref<18x18x8xf32, #tpu.memory_space<vmem>>, vector<18x18x8xf32>
    %20 = vector.extract_strided_slice %19 {offsets = [0, 0, 0], sizes = [16, 16, 8], strides = [1, 1, 1]} : vector<18x18x8xf32> to vector<16x16x8xf32>
    %21 = vector.shape_cast %20 : vector<16x16x8xf32> to vector<256x8xf32>
    %c0_25 = arith.constant 0 : index
    %c0_26 = arith.constant 0 : index
    %22 = vector.load %arg8[%c0_25, %c0_26] : memref<256x72xf32, #tpu.memory_space<vmem>>, vector<256x8xf32>
    tpu.vector_store %arg8[%c0_25, %c0_26], %21 {strides = array<i32>} : memref<256x72xf32, #tpu.memory_space<vmem>>, vector<256x8xf32>,
    %23 = vector.extract_strided_slice %19 {offsets = [0, 1, 0], sizes = [16, 16, 8], strides = [1, 1, 1]} : vector<18x18x8xf32> to vector<16x16x8xf32>
    %24 = vector.shape_cast %23 : vector<16x16x8xf32> to vector<256x8xf32>
    %c0_27 = arith.constant 0 : index
    %c8 = arith.constant 8 : index
    %25 = vector.load %arg8[%c0_27, %c8] : memref<256x72xf32, #tpu.memory_space<vmem>>, vector<256x8xf32>
    tpu.vector_store %arg8[%c0_27, %c8], %24 {strides = array<i32>} : memref<256x72xf32, #tpu.memory_space<vmem>>, vector<256x8xf32>,
    %26 = vector.extract_strided_slice %19 {offsets = [0, 2, 0], sizes = [16, 16, 8], strides = [1, 1, 1]} : vector<18x18x8xf32> to vector<16x16x8xf32>
    %27 = vector.shape_cast %26 : vector<16x16x8xf32> to vector<256x8xf32>
    %c0_28 = arith.constant 0 : index
    %c16 = arith.constant 16 : index
    %28 = vector.load %arg8[%c0_28, %c16] : memref<256x72xf32, #tpu.memory_space<vmem>>, vector<256x8xf32>
    tpu.vector_store %arg8[%c0_28, %c16], %27 {strides = array<i32>} : memref<256x72xf32, #tpu.memory_space<vmem>>, vector<256x8xf32>,
    %29 = vector.extract_strided_slice %19 {offsets = [1, 0, 0], sizes = [16, 16, 8], strides = [1, 1, 1]} : vector<18x18x8xf32> to vector<16x16x8xf32>
    %30 = vector.shape_cast %29 : vector<16x16x8xf32> to vector<256x8xf32>
    %c0_29 = arith.constant 0 : index
    %c24 = arith.constant 24 : index
    %31 = vector.load %arg8[%c0_29, %c24] : memref<256x72xf32, #tpu.memory_space<vmem>>, vector<256x8xf32>
    tpu.vector_store %arg8[%c0_29, %c24], %30 {strides = array<i32>} : memref<256x72xf32, #tpu.memory_space<vmem>>, vector<256x8xf32>,
    %32 = vector.extract_strided_slice %19 {offsets = [1, 1, 0], sizes = [16, 16, 8], strides = [1, 1, 1]} : vector<18x18x8xf32> to vector<16x16x8xf32>
    %33 = vector.shape_cast %32 : vector<16x16x8xf32> to vector<256x8xf32>
    %c0_30 = arith.constant 0 : index
    %c32 = arith.constant 32 : index
    %34 = vector.load %arg8[%c0_30, %c32] : memref<256x72xf32, #tpu.memory_space<vmem>>, vector<256x8xf32>
    tpu.vector_store %arg8[%c0_30, %c32], %33 {strides = array<i32>} : memref<256x72xf32, #tpu.memory_space<vmem>>, vector<256x8xf32>,
    %35 = vector.extract_strided_slice %19 {offsets = [1, 2, 0], sizes = [16, 16, 8], strides = [1, 1, 1]} : vector<18x18x8xf32> to vector<16x16x8xf32>
    %36 = vector.shape_cast %35 : vector<16x16x8xf32> to vector<256x8xf32>
    %c0_31 = arith.constant 0 : index
    %c40 = arith.constant 40 : index
    %37 = vector.load %arg8[%c0_31, %c40] : memref<256x72xf32, #tpu.memory_space<vmem>>, vector<256x8xf32>
    tpu.vector_store %arg8[%c0_31, %c40], %36 {strides = array<i32>} : memref<256x72xf32, #tpu.memory_space<vmem>>, vector<256x8xf32>,
    %38 = vector.extract_strided_slice %19 {offsets = [2, 0, 0], sizes = [16, 16, 8], strides = [1, 1, 1]} : vector<18x18x8xf32> to vector<16x16x8xf32>
    %39 = vector.shape_cast %38 : vector<16x16x8xf32> to vector<256x8xf32>
    %c0_32 = arith.constant 0 : index
    %c48 = arith.constant 48 : index
    %40 = vector.load %arg8[%c0_32, %c48] : memref<256x72xf32, #tpu.memory_space<vmem>>, vector<256x8xf32>
    tpu.vector_store %arg8[%c0_32, %c48], %39 {strides = array<i32>} : memref<256x72xf32, #tpu.memory_space<vmem>>, vector<256x8xf32>,
    %41 = vector.extract_strided_slice %19 {offsets = [2, 1, 0], sizes = [16, 16, 8], strides = [1, 1, 1]} : vector<18x18x8xf32> to vector<16x16x8xf32>
    %42 = vector.shape_cast %41 : vector<16x16x8xf32> to vector<256x8xf32>
    %c0_33 = arith.constant 0 : index
    %c56 = arith.constant 56 : index
    %43 = vector.load %arg8[%c0_33, %c56] : memref<256x72xf32, #tpu.memory_space<vmem>>, vector<256x8xf32>
    tpu.vector_store %arg8[%c0_33, %c56], %42 {strides = array<i32>} : memref<256x72xf32, #tpu.memory_space<vmem>>, vector<256x8xf32>,
    %44 = vector.extract_strided_slice %19 {offsets = [2, 2, 0], sizes = [16, 16, 8], strides = [1, 1, 1]} : vector<18x18x8xf32> to vector<16x16x8xf32>
    %45 = vector.shape_cast %44 : vector<16x16x8xf32> to vector<256x8xf32>
    %c0_34 = arith.constant 0 : index
    %c64 = arith.constant 64 : index
    %46 = vector.load %arg8[%c0_34, %c64] : memref<256x72xf32, #tpu.memory_space<vmem>>, vector<256x8xf32>
    tpu.vector_store %arg8[%c0_34, %c64], %45 {strides = array<i32>} : memref<256x72xf32, #tpu.memory_space<vmem>>, vector<256x8xf32>,
    %c0_35 = arith.constant 0 : index
    %c0_36 = arith.constant 0 : index
    %47 = vector.load %arg8[%c0_35, %c0_36] : memref<256x72xf32, #tpu.memory_space<vmem>>, vector<256x72xf32>
    %c0_37 = arith.constant 0 : index
    %c0_38 = arith.constant 0 : index
    %48 = vector.load %arg4[%c0_37, %c0_38] : memref<72x8xf32, #tpu.memory_space<vmem>>, vector<72x8xf32>
    %cst_39 = arith.constant dense<0.000000e+00> : vector<256x8xf32>
    %49 = tpu.matmul %47, %48, %cst_39 {dimension_numbers = #tpu.dot_dimension_numbers<[1], [0], [0], [1], [0, 0, 1, 1], [], []>} : vector<256x72xf32>, vector<72x8xf32>, vector<256x8xf32> -> vector<256x8xf32>
    %cst_40 = arith.constant dense<0.000000e+00> : vector<8xf32>
    %50 = vector.multi_reduction <add>, %49, %cst_40 [0] : vector<256x8xf32> to vector<8xf32>
    %51 = vector.shape_cast %50 : vector<8xf32> to vector<1x8xf32>
    %52 = vector.shape_cast %51 : vector<1x8xf32> to vector<1x1x8xf32>
    %c0_41 = arith.constant 0 : index
    %c0_42 = arith.constant 0 : index
    %c0_43 = arith.constant 0 : index
    %53 = vector.load %arg6[%c0_41, %c0_42, %c0_43] : memref<1x2x8xf32, #tpu.memory_space<vmem>>, vector<1x1x8xf32>
    tpu.vector_store %arg6[%c0_41, %c0_42, %c0_43], %52 {strides = array<i32>} : memref<1x2x8xf32, #tpu.memory_space<vmem>>, vector<1x1x8xf32>,
    %54 = arith.mulf %49, %49 : vector<256x8xf32>
    %cst_44 = arith.constant dense<0.000000e+00> : vector<8xf32>
    %55 = vector.multi_reduction <add>, %54, %cst_44 [0] : vector<256x8xf32> to vector<8xf32>
    %56 = vector.shape_cast %55 : vector<8xf32> to vector<1x8xf32>
    %57 = vector.shape_cast %56 : vector<1x8xf32> to vector<1x1x8xf32>
    %c0_45 = arith.constant 0 : index
    %c1_46 = arith.constant 1 : index
    %c0_47 = arith.constant 0 : index
    %58 = vector.load %arg6[%c0_45, %c1_46, %c0_47] : memref<1x2x8xf32, #tpu.memory_space<vmem>>, vector<1x1x8xf32>
    tpu.vector_store %arg6[%c0_45, %c1_46, %c0_47], %57 {strides = array<i32>} : memref<1x2x8xf32, #tpu.memory_space<vmem>>, vector<1x1x8xf32>,
    %59 = vector.shape_cast %49 : vector<256x8xf32> to vector<1x16x16x8xf32>
    %c0_48 = arith.constant 0 : index
    %c0_49 = arith.constant 0 : index
    %c0_50 = arith.constant 0 : index
    %c0_51 = arith.constant 0 : index
    %60 = vector.load %arg5[%c0_48, %c0_49, %c0_50, %c0_51] : memref<1x16x16x8xf32, #tpu.memory_space<vmem>>, vector<1x16x16x8xf32>
    tpu.vector_store %arg5[%c0_48, %c0_49, %c0_50, %c0_51], %59 {strides = array<i32>} : memref<1x16x16x8xf32, #tpu.memory_space<vmem>>, vector<1x16x16x8xf32>,
    return
  }
  func.func @transform_0(%arg0: i32) -> (i32, i32, i32, i32) {
    %c0_i32 = arith.constant 0 : i32
    %c0_i32_0 = arith.constant 0 : i32
    %c0_i32_1 = arith.constant 0 : i32
    %c0_i32_2 = arith.constant 0 : i32
    return %arg0, %c0_i32, %c0_i32_0, %c0_i32_1 : i32, i32, i32, i32
  }
  func.func @transform_1(%arg0: i32) -> (i32, i32) {
    %c0_i32 = arith.constant 0 : i32
    %c0_i32_0 = arith.constant 0 : i32
    %c0_i32_1 = arith.constant 0 : i32
    return %c0_i32, %c0_i32_0 : i32, i32
  }
  func.func @transform_2(%arg0: i32) -> (i32, i32) {
    %c0_i32 = arith.constant 0 : i32
    %c0_i32_0 = arith.constant 0 : i32
    %c0_i32_1 = arith.constant 0 : i32
    return %c0_i32, %c0_i32_0 : i32, i32
  }
  func.func @transform_3(%arg0: i32) -> (i32, i32) {
    %c0_i32 = arith.constant 0 : i32
    %c0_i32_0 = arith.constant 0 : i32
    %c0_i32_1 = arith.constant 0 : i32
    return %c0_i32, %c0_i32_0 : i32, i32
  }
  func.func @transform_4(%arg0: i32) -> (i32, i32, i32, i32) {
    %c0_i32 = arith.constant 0 : i32
    %c0_i32_0 = arith.constant 0 : i32
    %c0_i32_1 = arith.constant 0 : i32
    %c0_i32_2 = arith.constant 0 : i32
    return %arg0, %c0_i32, %c0_i32_0, %c0_i32_1 : i32, i32, i32, i32
  }
  func.func @transform_5(%arg0: i32) -> (i32, i32, i32) {
    %c0_i32 = arith.constant 0 : i32
    %c0_i32_0 = arith.constant 0 : i32
    %c0_i32_1 = arith.constant 0 : i32
    return %arg0, %c0_i32, %c0_i32_0 : i32, i32, i32
  }
}

</mosaic_0001>

<llo_original>
// kernel: basic_block.5
$region0: #{basic_block.5}
  #allocation0 [shape = 'u32[]', space=smem, size = 0x4, offset = 0x4, fixed_abs, tag = 'smem constant byte address 0x4 - core index']
  #allocation1 [shape = 'u32[72,128]{1,0:T(1,128)}', space=vmem, size = 0x9000, scoped, tag = 'internal scratch']
  %s0 = inlined_call_operand.vmem [shape: f32[2,16,16,8], index: 0, kind: input, shape index: {}]
  %s1 = inlined_call_operand.vmem [shape: f32[2,16,16,8], index: 1, kind: input, shape index: {}]
  %s2 = inlined_call_operand.vmem [shape: f32[1,8], index: 2, kind: input, shape index: {}]
  %s3 = inlined_call_operand.vmem [shape: f32[1,8], index: 3, kind: input, shape index: {}]
  %s4 = inlined_call_operand.vmem [shape: f32[2,16,16,8], index: 4, kind: output, shape index: {}]
  %s5 = sld [smem:[#allocation0]]
  $region49: #{basic_block.5} parent=0
    _
  %s7 = ssub.s32 1, %s5
  %s8 = scalar_select 0, %s7, %s5
  loop: start=0, step=1, limit=4
  $region2: #{basic_block.5} parent=0 // loop_pre_header
    _
  $region3: #{basic_block.5} parent=0 // loop_header
    %s10 = sphi 0, %s14
    %p11 = scmp.ge.s32.totalorder %s10, 4
    %s20 = sphi 0, %s22
    %s23 = sphi 0, %s20
    %s24 = sphi 0, %s23
    %s40 = sphi 0, %s24
    %s46 = sphi 0, %s48
    %s49 = sphi 0, %s46
    %s50 = sphi 0, %s49
    %s66 = sphi 0, %s50
    %s70 = sphi 0, %s70
    %s72 = sphi 0, %s70
    %s73 = sphi 0, %s72
    %s87 = sphi 0, %s73
    %s91 = sphi 0, %s91
    %s93 = sphi 0, %s91
    %s94 = sphi 0, %s93
    %s108 = sphi 0, %s94
    %s114 = sphi 0, %s116
    %s117 = sphi 0, %s114
    %s118 = sphi 0, %s117
    %s134 = sphi 0, %s118
  $region4: #{basic_block.5} parent=0 // loop_header_branch
    %13 = sbr.rel (%p11) target = $region8
  $region5: #{basic_block.5} parent=0 // loop_body
    %s15 = ssub.s32 %s10, 1
    %s16 = ssub.s32 %s10, 2
    %s17 = sadd.s32 %s10, 1
    %s18 = ssub.s32 %s10, %s17
    %p19 = scmp.eq.s32.totalorder %s18, 0
    %s21 = sadd.s32 %s20, 1
    %s22 = scalar_select %p19, %s20, %s21
    %p25 = pneg %p19
    %p26 = scmp.eq.s32.totalorder %s10, 1
    %p27 = por %p25, %p26
    %p28 = scmp.ne.s32.totalorder %s20, %s23
    %p29 = scmp.eq.s32.totalorder %s10, 0
    %p30 = por %p28, %p29
    %p31 = scmp.ne.s32.totalorder %s20, %s23
    %p32 = scmp.eq.s32.totalorder %s15, 1
    %p33 = por %p31, %p32
    %p34 = scmp.ne.s32.totalorder %s23, %s24
    %p35 = scmp.eq.s32.totalorder %s15, 0
    %p36 = por %p34, %p35
    %p37 = scmp.ne.s32.totalorder %s23, %s24
    %p38 = scmp.eq.s32.totalorder %s16, 1
    %p39 = por %p37, %p38
    %p41 = scmp.ne.s32.totalorder %s24, %s40
    %p42 = scmp.eq.s32.totalorder %s16, 0
    %p43 = por %p41, %p42
    %s44 = ssub.s32 %s10, %s17
    %p45 = scmp.eq.s32.totalorder %s44, 0
    %s47 = sadd.s32 %s46, 1
    %s48 = scalar_select %p45, %s46, %s47
    %p51 = pneg %p45
    %p52 = scmp.eq.s32.totalorder %s10, 1
    %p53 = por %p51, %p52
    %p54 = scmp.ne.s32.totalorder %s46, %s49
    %p55 = scmp.eq.s32.totalorder %s10, 0
    %p56 = por %p54, %p55
    %p57 = scmp.ne.s32.totalorder %s46, %s49
    %p58 = scmp.eq.s32.totalorder %s15, 1
    %p59 = por %p57, %p58
    %p60 = scmp.ne.s32.totalorder %s49, %s50
    %p61 = scmp.eq.s32.totalorder %s15, 0
    %p62 = por %p60, %p61
    %p63 = scmp.ne.s32.totalorder %s49, %s50
    %p64 = scmp.eq.s32.totalorder %s16, 1
    %p65 = por %p63, %p64
    %p67 = scmp.ne.s32.totalorder %s50, %s66
    %p68 = scmp.eq.s32.totalorder %s16, 0
    %p69 = por %p67, %p68
    %s71 = sadd.s32 %s70, 1
    %p74 = scmp.eq.s32.totalorder %s10, 1
    %p75 = scmp.ne.s32.totalorder %s70, %s72
    %p76 = scmp.eq.s32.totalorder %s10, 0
    %p77 = por %p75, %p76
    %p78 = scmp.ne.s32.totalorder %s70, %s72
    %p79 = scmp.eq.s32.totalorder %s15, 1
    %p80 = por %p78, %p79
    %p81 = scmp.ne.s32.totalorder %s72, %s73
    %p82 = scmp.eq.s32.totalorder %s15, 0
    %p83 = por %p81, %p82
    %p84 = scmp.ne.s32.totalorder %s72, %s73
    %p85 = scmp.eq.s32.totalorder %s16, 1
    %p86 = por %p84, %p85
    %p88 = scmp.ne.s32.totalorder %s73, %s87
    %p89 = scmp.eq.s32.totalorder %s16, 0
    %p90 = por %p88, %p89
    %s92 = sadd.s32 %s91, 1
    %p95 = scmp.eq.s32.totalorder %s10, 1
    %p96 = scmp.ne.s32.totalorder %s91, %s93
    %p97 = scmp.eq.s32.totalorder %s10, 0
    %p98 = por %p96, %p97
    %p99 = scmp.ne.s32.totalorder %s91, %s93
    %p100 = scmp.eq.s32.totalorder %s15, 1
    %p101 = por %p99, %p100
    %p102 = scmp.ne.s32.totalorder %s93, %s94
    %p103 = scmp.eq.s32.totalorder %s15, 0
    %p104 = por %p102, %p103
    %p105 = scmp.ne.s32.totalorder %s93, %s94
    %p106 = scmp.eq.s32.totalorder %s16, 1
    %p107 = por %p105, %p106
    %p109 = scmp.ne.s32.totalorder %s94, %s108
    %p110 = scmp.eq.s32.totalorder %s16, 0
    %p111 = por %p109, %p110
    %s112 = ssub.s32 %s10, %s17
    %p113 = scmp.eq.s32.totalorder %s112, 0
    %s115 = sadd.s32 %s114, 1
    %s116 = scalar_select %p113, %s114, %s115
    %p119 = pneg %p113
    %p120 = scmp.eq.s32.totalorder %s10, 1
    %p121 = por %p119, %p120
    %p122 = scmp.ne.s32.totalorder %s114, %s117
    %p123 = scmp.eq.s32.totalorder %s10, 0
    %p124 = por %p122, %p123
    %p125 = scmp.ne.s32.totalorder %s114, %s117
    %p126 = scmp.eq.s32.totalorder %s15, 1
    %p127 = por %p125, %p126
    %p128 = scmp.ne.s32.totalorder %s117, %s118
    %p129 = scmp.eq.s32.totalorder %s15, 0
    %p130 = por %p128, %p129
    %p131 = scmp.ne.s32.totalorder %s117, %s118
    %p132 = scmp.eq.s32.totalorder %s16, 1
    %p133 = por %p131, %p132
    %p135 = scmp.ne.s32.totalorder %s118, %s134
    %p136 = scmp.eq.s32.totalorder %s16, 0
    %p137 = por %p135, %p136
    %p138 = scmp.le.s32.totalorder 1, %s10
    %p139 = scmp.lt.s32.totalorder %s10, 3
    %p140 = pnand %p138, %p139
    %p141 = pneg %p140
    // Predicated region
    $region9: #{basic_block.5} parent=5 // pred_check
      _
    $region10: #{basic_block.5} parent=5 // pred_check_branch
      %143 = sbr.rel (%p140) target = $region12
    $region11: #{basic_block.5} parent=5 // pred_region
      %s144 = ssub.s32 %s10, 1
      // Predicated region
      $region13: #{basic_block.5} parent=11 // pred_check
        %p145 = pneg %p83
      $region14: #{basic_block.5} parent=11 // pred_check_branch
        %147 = sbr.rel (%p145) target = $region16
      $region15: #{basic_block.5} parent=11 // pred_region
        _
      $region16: #{basic_block.5} parent=11 // pred_fallthru
        _
      // Predicated region
      $region17: #{basic_block.5} parent=11 // pred_check
        %p148 = pneg %p104
      $region18: #{basic_block.5} parent=11 // pred_check_branch
        %150 = sbr.rel (%p148) target = $region20
      $region19: #{basic_block.5} parent=11 // pred_region
        _
      $region20: #{basic_block.5} parent=11 // pred_fallthru
        _
    $region12: #{basic_block.5} parent=5 // pred_fallthru
      _
    %p151 = scmp.lt.s32.totalorder %s10, 2
    // Predicated region
    $region21: #{basic_block.5} parent=5 // pred_check
      %p152 = pneg %p151
    $region22: #{basic_block.5} parent=5 // pred_check_branch
      %154 = sbr.rel (%p152) target = $region24
    $region23: #{basic_block.5} parent=5 // pred_region
      // Predicated region
      $region25: #{basic_block.5} parent=23 // pred_check
        %p155 = pneg %p30
      $region26: #{basic_block.5} parent=23 // pred_check_branch
        %157 = sbr.rel (%p155) target = $region28
      $region27: #{basic_block.5} parent=23 // pred_region
        %p158 = scmp.lt.s32.totalorder %s10, 1
        %s159 = scalar_select %p158, %s10, 1
        %s160 = smul.addr %s159, 32
        %s161 = smul.addr %s160, 8
        %s162 = scalar_lea.vmem %s0, %s161
      $region28: #{basic_block.5} parent=23 // pred_fallthru
        _
      // Predicated region
      $region29: #{basic_block.5} parent=23 // pred_check
        %p163 = pneg %p56
      $region30: #{basic_block.5} parent=23 // pred_check_branch
        %165 = sbr.rel (%p163) target = $region32
      $region31: #{basic_block.5} parent=23 // pred_region
        %p166 = scmp.lt.s32.totalorder %s10, 1
        %s167 = scalar_select %p166, %s10, 1
        %s168 = smul.addr %s167, 32
        %s169 = smul.addr %s168, 8
        %s170 = scalar_lea.vmem %s1, %s169
      $region32: #{basic_block.5} parent=23 // pred_fallthru
        _
    $region24: #{basic_block.5} parent=5 // pred_fallthru
      _
    %p171 = scmp.le.s32.totalorder 1, %s10
    %p172 = scmp.lt.s32.totalorder %s10, 3
    %p173 = pnand %p171, %p172
    %p174 = pneg %p173
    // Predicated region
    $region33: #{basic_block.5} parent=5 // pred_check
      _
    $region34: #{basic_block.5} parent=5 // pred_check_branch
      %176 = sbr.rel (%p173) target = $region36
    $region35: #{basic_block.5} parent=5 // pred_region
      %s177 = ssub.s32 %s10, 1
      %p178 = scmp.lt.s32.totalorder %s15, 1
      %s179 = scalar_select %p178, %s15, 1
      %s180 = smul.addr %s179, 32
      %s181 = smul.addr %s180, 8
      %s182 = scalar_lea.vmem %s0, %s181
      %p183 = pneg %p36
      %p184 = pneg %p33
      %p185 = scmp.lt.s32.totalorder %s15, 1
      %s186 = scalar_select %p185, %s15, 1
      %s187 = smul.addr %s186, 32
      %s188 = smul.addr %s187, 8
      %s189 = scalar_lea.vmem %s1, %s188
      %p190 = pneg %p62
      %p191 = pneg %p59
      %p192 = pneg %p83
      %p193 = pneg %p80
      %p194 = pneg %p104
      %p195 = pneg %p101
      %p196 = pneg %p130
      %p197 = pneg %p127
      %p198 = scmp.lt.s32.totalorder %s15, 1
      %s199 = scalar_select %p198, %s15, 1
      %s200 = smul.addr %s199, 32
      %s201 = smul.addr %s200, 8
      %s202 = scalar_lea.vmem %s4, %s201
      %p203 = scmp.lt.s32.totalorder %s15, 1
      %s204 = scalar_select %p203, %s15, 1
      %s205 = smul.addr %s204, 32
      %s206 = smul.addr %s205, 8
      %s207 = scalar_lea.vmem %s0, %s206
      %p208 = scmp.lt.s32.totalorder %s15, 1
      %s209 = scalar_select %p208, %s15, 1
      %s210 = smul.addr %s209, 32
      %s211 = smul.addr %s210, 8
      %s212 = scalar_lea.vmem %s1, %s211
      %p213 = scmp.lt.s32.totalorder %s15, 1
      %s214 = scalar_select %p213, %s15, 1
      %s215 = smul.addr %s214, 32
      %s216 = smul.addr %s215, 8
      %s217 = scalar_lea.vmem %s4, %s216
      %v218 = vld [vmem:[%s207] sm:$0xff]
      %v219 = vld [vmem:[%s207 + $0x8] sm:$0xff]
      %v220 = vld [vmem:[%s207 + $0x10] sm:$0xff]
      %v221 = vld [vmem:[%s207 + $0x18] sm:$0xff]
      %v222 = vld [vmem:[%s207 + $0x20] sm:$0xff]
      %v223 = vld [vmem:[%s207 + $0x28] sm:$0xff]
      %v224 = vld [vmem:[%s207 + $0x30] sm:$0xff]
      %v225 = vld [vmem:[%s207 + $0x38] sm:$0xff]
      %v226 = vld [vmem:[%s207 + $0x40] sm:$0xff]
      %v227 = vld [vmem:[%s207 + $0x48] sm:$0xff]
      %v228 = vld [vmem:[%s207 + $0x50] sm:$0xff]
      %v229 = vld [vmem:[%s207 + $0x58] sm:$0xff]
      %v230 = vld [vmem:[%s207 + $0x60] sm:$0xff]
      %v231 = vld [vmem:[%s207 + $0x68] sm:$0xff]
      %v232 = vld [vmem:[%s207 + $0x70] sm:$0xff]
      %v233 = vld [vmem:[%s207 + $0x78] sm:$0xff]
      %v234 = vld [vmem:[%s207 + $0x80] sm:$0xff]
      %v235 = vld [vmem:[%s207 + $0x88] sm:$0xff]
      %v236 = vld [vmem:[%s207 + $0x90] sm:$0xff]
      %v237 = vld [vmem:[%s207 + $0x98] sm:$0xff]
      %v238 = vld [vmem:[%s207 + $0xa0] sm:$0xff]
      %v239 = vld [vmem:[%s207 + $0xa8] sm:$0xff]
      %v240 = vld [vmem:[%s207 + $0xb0] sm:$0xff]
      %v241 = vld [vmem:[%s207 + $0xb8] sm:$0xff]
      %v242 = vld [vmem:[%s207 + $0xc0] sm:$0xff]
      %v243 = vld [vmem:[%s207 + $0xc8] sm:$0xff]
      %v244 = vld [vmem:[%s207 + $0xd0] sm:$0xff]
      %v245 = vld [vmem:[%s207 + $0xd8] sm:$0xff]
      %v246 = vld [vmem:[%s207 + $0xe0] sm:$0xff]
      %v247 = vld [vmem:[%s207 + $0xe8] sm:$0xff]
      %v248 = vld [vmem:[%s207 + $0xf0] sm:$0xff]
      %v249 = vld [vmem:[%s207 + $0xf8] sm:$0xff]
      %v250 = vld [vmem:[%s2] sm:$0x1]
      %v252 = vperm.slane %v250, 0
      %v254 = vmul.f32 %v218, %v252
      %v255 = vmul.f32 %v219, %v252
      %v256 = vmul.f32 %v220, %v252
      %v257 = vmul.f32 %v221, %v252
      %v258 = vmul.f32 %v222, %v252
      %v259 = vmul.f32 %v223, %v252
      %v260 = vmul.f32 %v224, %v252
      %v261 = vmul.f32 %v225, %v252
      %v262 = vmul.f32 %v226, %v252
      %v263 = vmul.f32 %v227, %v252
      %v264 = vmul.f32 %v228, %v252
      %v265 = vmul.f32 %v229, %v252
      %v266 = vmul.f32 %v230, %v252
      %v267 = vmul.f32 %v231, %v252
      %v268 = vmul.f32 %v232, %v252
      %v269 = vmul.f32 %v233, %v252
      %v270 = vmul.f32 %v234, %v252
      %v271 = vmul.f32 %v235, %v252
      %v272 = vmul.f32 %v236, %v252
      %v273 = vmul.f32 %v237, %v252
      %v274 = vmul.f32 %v238, %v252
      %v275 = vmul.f32 %v239, %v252
      %v276 = vmul.f32 %v240, %v252
      %v277 = vmul.f32 %v241, %v252
      %v278 = vmul.f32 %v242, %v252
      %v279 = vmul.f32 %v243, %v252
      %v280 = vmul.f32 %v244, %v252
      %v281 = vmul.f32 %v245, %v252
      %v282 = vmul.f32 %v246, %v252
      %v283 = vmul.f32 %v247, %v252
      %v284 = vmul.f32 %v248, %v252
      %v285 = vmul.f32 %v249, %v252
      %v286 = vld [vmem:[%s3] sm:$0x1]
      %v288 = vperm.slane %v286, 0
      %v290 = vadd.f32 %v254, %v288
      %v291 = vadd.f32 %v255, %v288
      %v292 = vadd.f32 %v256, %v288
      %v293 = vadd.f32 %v257, %v288
      %v294 = vadd.f32 %v258, %v288
      %v295 = vadd.f32 %v259, %v288
      %v296 = vadd.f32 %v260, %v288
      %v297 = vadd.f32 %v261, %v288
      %v298 = vadd.f32 %v262, %v288
      %v299 = vadd.f32 %v263, %v288
      %v300 = vadd.f32 %v264, %v288
      %v301 = vadd.f32 %v265, %v288
      %v302 = vadd.f32 %v266, %v288
      %v303 = vadd.f32 %v267, %v288
      %v304 = vadd.f32 %v268, %v288
      %v305 = vadd.f32 %v269, %v288
      %v306 = vadd.f32 %v270, %v288
      %v307 = vadd.f32 %v271, %v288
      %v308 = vadd.f32 %v272, %v288
      %v309 = vadd.f32 %v273, %v288
      %v310 = vadd.f32 %v274, %v288
      %v311 = vadd.f32 %v275, %v288
      %v312 = vadd.f32 %v276, %v288
      %v313 = vadd.f32 %v277, %v288
      %v314 = vadd.f32 %v278, %v288
      %v315 = vadd.f32 %v279, %v288
      %v316 = vadd.f32 %v280, %v288
      %v317 = vadd.f32 %v281, %v288
      %v318 = vadd.f32 %v282, %v288
      %v319 = vadd.f32 %v283, %v288
      %v320 = vadd.f32 %v284, %v288
      %v321 = vadd.f32 %v285, %v288
      %v322 = vld [vmem:[%s212] sm:$0xff]
      %v323 = vld [vmem:[%s212 + $0x8] sm:$0xff]
      %v324 = vld [vmem:[%s212 + $0x10] sm:$0xff]
      %v325 = vld [vmem:[%s212 + $0x18] sm:$0xff]
      %v326 = vld [vmem:[%s212 + $0x20] sm:$0xff]
      %v327 = vld [vmem:[%s212 + $0x28] sm:$0xff]
      %v328 = vld [vmem:[%s212 + $0x30] sm:$0xff]
      %v329 = vld [vmem:[%s212 + $0x38] sm:$0xff]
      %v330 = vld [vmem:[%s212 + $0x40] sm:$0xff]
      %v331 = vld [vmem:[%s212 + $0x48] sm:$0xff]
      %v332 = vld [vmem:[%s212 + $0x50] sm:$0xff]
      %v333 = vld [vmem:[%s212 + $0x58] sm:$0xff]
      %v334 = vld [vmem:[%s212 + $0x60] sm:$0xff]
      %v335 = vld [vmem:[%s212 + $0x68] sm:$0xff]
      %v336 = vld [vmem:[%s212 + $0x70] sm:$0xff]
      %v337 = vld [vmem:[%s212 + $0x78] sm:$0xff]
      %v338 = vld [vmem:[%s212 + $0x80] sm:$0xff]
      %v339 = vld [vmem:[%s212 + $0x88] sm:$0xff]
      %v340 = vld [vmem:[%s212 + $0x90] sm:$0xff]
      %v341 = vld [vmem:[%s212 + $0x98] sm:$0xff]
      %v342 = vld [vmem:[%s212 + $0xa0] sm:$0xff]
      %v343 = vld [vmem:[%s212 + $0xa8] sm:$0xff]
      %v344 = vld [vmem:[%s212 + $0xb0] sm:$0xff]
      %v345 = vld [vmem:[%s212 + $0xb8] sm:$0xff]
      %v346 = vld [vmem:[%s212 + $0xc0] sm:$0xff]
      %v347 = vld [vmem:[%s212 + $0xc8] sm:$0xff]
      %v348 = vld [vmem:[%s212 + $0xd0] sm:$0xff]
      %v349 = vld [vmem:[%s212 + $0xd8] sm:$0xff]
      %v350 = vld [vmem:[%s212 + $0xe0] sm:$0xff]
      %v351 = vld [vmem:[%s212 + $0xe8] sm:$0xff]
      %v352 = vld [vmem:[%s212 + $0xf0] sm:$0xff]
      %v353 = vld [vmem:[%s212 + $0xf8] sm:$0xff]
      %v354 = vadd.f32 %v290, %v322
      %v355 = vadd.f32 %v291, %v323
      %v356 = vadd.f32 %v292, %v324
      %v357 = vadd.f32 %v293, %v325
      %v358 = vadd.f32 %v294, %v326
      %v359 = vadd.f32 %v295, %v327
      %v360 = vadd.f32 %v296, %v328
      %v361 = vadd.f32 %v297, %v329
      %v362 = vadd.f32 %v298, %v330
      %v363 = vadd.f32 %v299, %v331
      %v364 = vadd.f32 %v300, %v332
      %v365 = vadd.f32 %v301, %v333
      %v366 = vadd.f32 %v302, %v334
      %v367 = vadd.f32 %v303, %v335
      %v368 = vadd.f32 %v304, %v336
      %v369 = vadd.f32 %v305, %v337
      %v370 = vadd.f32 %v306, %v338
      %v371 = vadd.f32 %v307, %v339
      %v372 = vadd.f32 %v308, %v340
      %v373 = vadd.f32 %v309, %v341
      %v374 = vadd.f32 %v310, %v342
      %v375 = vadd.f32 %v311, %v343
      %v376 = vadd.f32 %v312, %v344
      %v377 = vadd.f32 %v313, %v345
      %v378 = vadd.f32 %v314, %v346
      %v379 = vadd.f32 %v315, %v347
      %v380 = vadd.f32 %v316, %v348
      %v381 = vadd.f32 %v317, %v349
      %v382 = vadd.f32 %v318, %v350
      %v383 = vadd.f32 %v319, %v351
      %v384 = vadd.f32 %v320, %v352
      %v385 = vadd.f32 %v321, %v353
      %v386 = vmax.f32 %v354, 0.0
      %v387 = vmax.f32 %v355, 0.0
      %v388 = vmax.f32 %v356, 0.0
      %v389 = vmax.f32 %v357, 0.0
      %v390 = vmax.f32 %v358, 0.0
      %v391 = vmax.f32 %v359, 0.0
      %v392 = vmax.f32 %v360, 0.0
      %v393 = vmax.f32 %v361, 0.0
      %v394 = vmax.f32 %v362, 0.0
      %v395 = vmax.f32 %v363, 0.0
      %v396 = vmax.f32 %v364, 0.0
      %v397 = vmax.f32 %v365, 0.0
      %v398 = vmax.f32 %v366, 0.0
      %v399 = vmax.f32 %v367, 0.0
      %v400 = vmax.f32 %v368, 0.0
      %v401 = vmax.f32 %v369, 0.0
      %v402 = vmax.f32 %v370, 0.0
      %v403 = vmax.f32 %v371, 0.0
      %v404 = vmax.f32 %v372, 0.0
      %v405 = vmax.f32 %v373, 0.0
      %v406 = vmax.f32 %v374, 0.0
      %v407 = vmax.f32 %v375, 0.0
      %v408 = vmax.f32 %v376, 0.0
      %v409 = vmax.f32 %v377, 0.0
      %v410 = vmax.f32 %v378, 0.0
      %v411 = vmax.f32 %v379, 0.0
      %v412 = vmax.f32 %v380, 0.0
      %v413 = vmax.f32 %v381, 0.0
      %v414 = vmax.f32 %v382, 0.0
      %v415 = vmax.f32 %v383, 0.0
      %v416 = vmax.f32 %v384, 0.0
      %v417 = vmax.f32 %v385, 0.0
      %vm418 = vcmask 64512
      %419 = vst.msk [vmem:[%s217] sm:$0xff] %vm418, %v386
      %420 = vst.msk [vmem:[%s217 + $0x8] sm:$0xff] %vm418, %v387
      %421 = vst.msk [vmem:[%s217 + $0x10] sm:$0xff] %vm418, %v388
      %422 = vst.msk [vmem:[%s217 + $0x18] sm:$0xff] %vm418, %v389
      %423 = vst.msk [vmem:[%s217 + $0x20] sm:$0xff] %vm418, %v390
      %424 = vst.msk [vmem:[%s217 + $0x28] sm:$0xff] %vm418, %v391
      %425 = vst.msk [vmem:[%s217 + $0x30] sm:$0xff] %vm418, %v392
      %426 = vst.msk [vmem:[%s217 + $0x38] sm:$0xff] %vm418, %v393
      %427 = vst.msk [vmem:[%s217 + $0x40] sm:$0xff] %vm418, %v394
      %428 = vst.msk [vmem:[%s217 + $0x48] sm:$0xff] %vm418, %v395
      %429 = vst.msk [vmem:[%s217 + $0x50] sm:$0xff] %vm418, %v396
      %430 = vst.msk [vmem:[%s217 + $0x58] sm:$0xff] %vm418, %v397
      %431 = vst.msk [vmem:[%s217 + $0x60] sm:$0xff] %vm418, %v398
      %432 = vst.msk [vmem:[%s217 + $0x68] sm:$0xff] %vm418, %v399
      %433 = vst.msk [vmem:[%s217 + $0x70] sm:$0xff] %vm418, %v400
      %434 = vst.msk [vmem:[%s217 + $0x78] sm:$0xff] %vm418, %v401
      %435 = vst.msk [vmem:[%s217 + $0x80] sm:$0xff] %vm418, %v402
      %436 = vst.msk [vmem:[%s217 + $0x88] sm:$0xff] %vm418, %v403
      %437 = vst.msk [vmem:[%s217 + $0x90] sm:$0xff] %vm418, %v404
      %438 = vst.msk [vmem:[%s217 + $0x98] sm:$0xff] %vm418, %v405
      %439 = vst.msk [vmem:[%s217 + $0xa0] sm:$0xff] %vm418, %v406
      %440 = vst.msk [vmem:[%s217 + $0xa8] sm:$0xff] %vm418, %v407
      %441 = vst.msk [vmem:[%s217 + $0xb0] sm:$0xff] %vm418, %v408
      %442 = vst.msk [vmem:[%s217 + $0xb8] sm:$0xff] %vm418, %v409
      %443 = vst.msk [vmem:[%s217 + $0xc0] sm:$0xff] %vm418, %v410
      %444 = vst.msk [vmem:[%s217 + $0xc8] sm:$0xff] %vm418, %v411
      %445 = vst.msk [vmem:[%s217 + $0xd0] sm:$0xff] %vm418, %v412
      %446 = vst.msk [vmem:[%s217 + $0xd8] sm:$0xff] %vm418, %v413
      %447 = vst.msk [vmem:[%s217 + $0xe0] sm:$0xff] %vm418, %v414
      %448 = vst.msk [vmem:[%s217 + $0xe8] sm:$0xff] %vm418, %v415
      %449 = vst.msk [vmem:[%s217 + $0xf0] sm:$0xff] %vm418, %v416
      %450 = vst.msk [vmem:[%s217 + $0xf8] sm:$0xff] %vm418, %v417
      %p451 = scmp.lt.s32.totalorder %s15, 1
      %s452 = scalar_select %p451, %s15, 1
      %s453 = smul.addr %s452, 32
      %s454 = smul.addr %s453, 8
      %s455 = scalar_lea.vmem %s4, %s454
      // Predicated region
      $region37: #{basic_block.5} parent=35 // pred_check
        %p456 = pneg %p127
      $region38: #{basic_block.5} parent=35 // pred_check_branch
        %458 = sbr.rel (%p456) target = $region40
      $region39: #{basic_block.5} parent=35 // pred_region
        _
      $region40: #{basic_block.5} parent=35 // pred_fallthru
        _
    $region36: #{basic_block.5} parent=5 // pred_fallthru
      _
    %p459 = scmp.le.s32.totalorder 2, %s10
    // Predicated region
    $region41: #{basic_block.5} parent=5 // pred_check
      %p460 = pneg %p459
    $region42: #{basic_block.5} parent=5 // pred_check_branch
      %462 = sbr.rel (%p460) target = $region44
    $region43: #{basic_block.5} parent=5 // pred_region
      %s463 = ssub.s32 %s10, 2
      // Predicated region
      $region45: #{basic_block.5} parent=43 // pred_check
        %p464 = pneg %p133
      $region46: #{basic_block.5} parent=43 // pred_check_branch
        %466 = sbr.rel (%p464) target = $region48
      $region47: #{basic_block.5} parent=43 // pred_region
        %p467 = scmp.lt.s32.totalorder %s16, 1
        %s468 = scalar_select %p467, %s16, 1
        %s469 = smul.addr %s468, 32
        %s470 = smul.addr %s469, 8
        %s471 = scalar_lea.vmem %s4, %s470
      $region48: #{basic_block.5} parent=43 // pred_fallthru
        _
    $region44: #{basic_block.5} parent=5 // pred_fallthru
      _
  $region6: #{basic_block.5} parent=0 // loop_footer
    %s14 = sadd.s32 1, %s10
  $region7: #{basic_block.5} parent=0 // loop_footer_branch
    %9 = sbr.rel target = $region3
  $region8: #{basic_block.5} parent=0 // loop_exit
    _

// kernel: basic_block.3
$region0: #{basic_block.3}
  #allocation0 [shape = 'u32[]', space=smem, size = 0x4, offset = 0x4, fixed_abs, tag = 'smem constant byte address 0x4 - core index']
  #allocation1 [shape = 'u32[72,128]{1,0:T(1,128)}', space=vmem, size = 0x9000, scoped, tag = 'internal scratch']
  #allocation2 [shape = 'f32[18,18,8]{2,1,0:T(8,128)}', space=vmem, size = 0x36000, scoped, tag = 'scratch operand']
  #allocation3 [shape = 'f32[256,72]{1,0:T(8,128)}', space=vmem, size = 0x20000, scoped, tag = 'scratch operand']
  %s0 = inlined_call_operand.vmem [shape: f32[2,16,16,8], index: 0, kind: input, shape index: {}]
  %s1 = inlined_call_operand.vmem [shape: f32[72,8], index: 1, kind: input, shape index: {}]
  %s2 = inlined_call_operand.vmem [shape: f32[2,16,16,8], index: 2, kind: output, shape index: {0}]
  %s3 = inlined_call_operand.vmem [shape: f32[2,2,8], index: 3, kind: output, shape index: {1}]
  %4 = xla_tuple %s2, %s3
  %s5 = sld [smem:[#allocation0]]
  $region49: #{basic_block.3} parent=0
    _
  %s7 = ssub.s32 1, %s5
  %s8 = scalar_select 0, %s7, %s5
  loop: start=0, step=1, limit=4
  $region2: #{basic_block.3} parent=0 // loop_pre_header
    _
  $region3: #{basic_block.3} parent=0 // loop_header
    %s10 = sphi 0, %s14
    %p11 = scmp.ge.s32.totalorder %s10, 4
    %s20 = sphi 0, %s22
    %s23 = sphi 0, %s20
    %s24 = sphi 0, %s23
    %s40 = sphi 0, %s24
    %s44 = sphi 0, %s44
    %s46 = sphi 0, %s44
    %s47 = sphi 0, %s46
    %s61 = sphi 0, %s47
    %s67 = sphi 0, %s69
    %s70 = sphi 0, %s67
    %s71 = sphi 0, %s70
    %s87 = sphi 0, %s71
    %s93 = sphi 0, %s95
    %s96 = sphi 0, %s93
    %s97 = sphi 0, %s96
    %s113 = sphi 0, %s97
  $region4: #{basic_block.3} parent=0 // loop_header_branch
    %13 = sbr.rel (%p11) target = $region8
  $region5: #{basic_block.3} parent=0 // loop_body
    %s15 = ssub.s32 %s10, 1
    %s16 = ssub.s32 %s10, 2
    %s17 = sadd.s32 %s10, 1
    %s18 = ssub.s32 %s10, %s17
    %p19 = scmp.eq.s32.totalorder %s18, 0
    %s21 = sadd.s32 %s20, 1
    %s22 = scalar_select %p19, %s20, %s21
    %p25 = pneg %p19
    %p26 = scmp.eq.s32.totalorder %s10, 1
    %p27 = por %p25, %p26
    %p28 = scmp.ne.s32.totalorder %s20, %s23
    %p29 = scmp.eq.s32.totalorder %s10, 0
    %p30 = por %p28, %p29
    %p31 = scmp.ne.s32.totalorder %s20, %s23
    %p32 = scmp.eq.s32.totalorder %s15, 1
    %p33 = por %p31, %p32
    %p34 = scmp.ne.s32.totalorder %s23, %s24
    %p35 = scmp.eq.s32.totalorder %s15, 0
    %p36 = por %p34, %p35
    %p37 = scmp.ne.s32.totalorder %s23, %s24
    %p38 = scmp.eq.s32.totalorder %s16, 1
    %p39 = por %p37, %p38
    %p41 = scmp.ne.s32.totalorder %s24, %s40
    %p42 = scmp.eq.s32.totalorder %s16, 0
    %p43 = por %p41, %p42
    %s45 = sadd.s32 %s44, 1
    %p48 = scmp.eq.s32.totalorder %s10, 1
    %p49 = scmp.ne.s32.totalorder %s44, %s46
    %p50 = scmp.eq.s32.totalorder %s10, 0
    %p51 = por %p49, %p50
    %p52 = scmp.ne.s32.totalorder %s44, %s46
    %p53 = scmp.eq.s32.totalorder %s15, 1
    %p54 = por %p52, %p53
    %p55 = scmp.ne.s32.totalorder %s46, %s47
    %p56 = scmp.eq.s32.totalorder %s15, 0
    %p57 = por %p55, %p56
    %p58 = scmp.ne.s32.totalorder %s46, %s47
    %p59 = scmp.eq.s32.totalorder %s16, 1
    %p60 = por %p58, %p59
    %p62 = scmp.ne.s32.totalorder %s47, %s61
    %p63 = scmp.eq.s32.totalorder %s16, 0
    %p64 = por %p62, %p63
    %s65 = ssub.s32 %s10, %s17
    %p66 = scmp.eq.s32.totalorder %s65, 0
    %s68 = sadd.s32 %s67, 1
    %s69 = scalar_select %p66, %s67, %s68
    %p72 = pneg %p66
    %p73 = scmp.eq.s32.totalorder %s10, 1
    %p74 = por %p72, %p73
    %p75 = scmp.ne.s32.totalorder %s67, %s70
    %p76 = scmp.eq.s32.totalorder %s10, 0
    %p77 = por %p75, %p76
    %p78 = scmp.ne.s32.totalorder %s67, %s70
    %p79 = scmp.eq.s32.totalorder %s15, 1
    %p80 = por %p78, %p79
    %p81 = scmp.ne.s32.totalorder %s70, %s71
    %p82 = scmp.eq.s32.totalorder %s15, 0
    %p83 = por %p81, %p82
    %p84 = scmp.ne.s32.totalorder %s70, %s71
    %p85 = scmp.eq.s32.totalorder %s16, 1
    %p86 = por %p84, %p85
    %p88 = scmp.ne.s32.totalorder %s71, %s87
    %p89 = scmp.eq.s32.totalorder %s16, 0
    %p90 = por %p88, %p89
    %s91 = ssub.s32 %s10, %s17
    %p92 = scmp.eq.s32.totalorder %s91, 0
    %s94 = sadd.s32 %s93, 1
    %s95 = scalar_select %p92, %s93, %s94
    %p98 = pneg %p92
    %p99 = scmp.eq.s32.totalorder %s10, 1
    %p100 = por %p98, %p99
    %p101 = scmp.ne.s32.totalorder %s93, %s96
    %p102 = scmp.eq.s32.totalorder %s10, 0
    %p103 = por %p101, %p102
    %p104 = scmp.ne.s32.totalorder %s93, %s96
    %p105 = scmp.eq.s32.totalorder %s15, 1
    %p106 = por %p104, %p105
    %p107 = scmp.ne.s32.totalorder %s96, %s97
    %p108 = scmp.eq.s32.totalorder %s15, 0
    %p109 = por %p107, %p108
    %p110 = scmp.ne.s32.totalorder %s96, %s97
    %p111 = scmp.eq.s32.totalorder %s16, 1
    %p112 = por %p110, %p111
    %p114 = scmp.ne.s32.totalorder %s97, %s113
    %p115 = scmp.eq.s32.totalorder %s16, 0
    %p116 = por %p114, %p115
    %p117 = scmp.le.s32.totalorder 1, %s10
    %p118 = scmp.lt.s32.totalorder %s10, 3
    %p119 = pnand %p117, %p118
    %p120 = pneg %p119
    // Predicated region
    $region9: #{basic_block.3} parent=5 // pred_check
      _
    $region10: #{basic_block.3} parent=5 // pred_check_branch
      %122 = sbr.rel (%p119) target = $region12
    $region11: #{basic_block.3} parent=5 // pred_region
      %s123 = ssub.s32 %s10, 1
      // Predicated region
      $region13: #{basic_block.3} parent=11 // pred_check
        %p124 = pneg %p57
      $region14: #{basic_block.3} parent=11 // pred_check_branch
        %126 = sbr.rel (%p124) target = $region16
      $region15: #{basic_block.3} parent=11 // pred_region
        _
      $region16: #{basic_block.3} parent=11 // pred_fallthru
        _
    $region12: #{basic_block.3} parent=5 // pred_fallthru
      _
    %p127 = scmp.lt.s32.totalorder %s10, 2
    // Predicated region
    $region17: #{basic_block.3} parent=5 // pred_check
      %p128 = pneg %p127
    $region18: #{basic_block.3} parent=5 // pred_check_branch
      %130 = sbr.rel (%p128) target = $region20
    $region19: #{basic_block.3} parent=5 // pred_region
      // Predicated region
      $region21: #{basic_block.3} parent=19 // pred_check
        %p131 = pneg %p30
      $region22: #{basic_block.3} parent=19 // pred_check_branch
        %133 = sbr.rel (%p131) target = $region24
      $region23: #{basic_block.3} parent=19 // pred_region
        %p134 = scmp.lt.s32.totalorder %s10, 1
        %s135 = scalar_select %p134, %s10, 1
        %s136 = smul.addr %s135, 32
        %s137 = smul.addr %s136, 8
        %s138 = scalar_lea.vmem %s0, %s137
      $region24: #{basic_block.3} parent=19 // pred_fallthru
        _
    $region20: #{basic_block.3} parent=5 // pred_fallthru
      _
    %p139 = scmp.le.s32.totalorder 1, %s10
    %p140 = scmp.lt.s32.totalorder %s10, 3
    %p141 = pnand %p139, %p140
    %p142 = pneg %p141
    // Predicated region
    $region25: #{basic_block.3} parent=5 // pred_check
      _
    $region26: #{basic_block.3} parent=5 // pred_check_branch
      %144 = sbr.rel (%p141) target = $region28
    $region27: #{basic_block.3} parent=5 // pred_region
      %s145 = ssub.s32 %s10, 1
      %p146 = scmp.lt.s32.totalorder %s15, 1
      %s147 = scalar_select %p146, %s15, 1
      %s148 = smul.addr %s147, 32
      %s149 = smul.addr %s148, 8
      %s150 = scalar_lea.vmem %s0, %s149
      %p151 = pneg %p36
      %p152 = pneg %p33
      %p153 = pneg %p57
      %p154 = pneg %p54
      %p155 = pneg %p83
      %p156 = pneg %p80
      %p157 = scmp.lt.s32.totalorder %s15, 1
      %s158 = scalar_select %p157, %s15, 1
      %s159 = smul.addr %s158, 32
      %s160 = smul.addr %s159, 8
      %s161 = scalar_lea.vmem %s2, %s160
      %p162 = pneg %p109
      %p163 = pneg %p106
      %p164 = scmp.lt.s32.totalorder %s15, 1
      %s165 = scalar_select %p164, %s15, 1
      %s166 = smul.addr %s165, 2
      %s167 = scalar_lea.vmem %s3, %s166
      %p168 = scmp.lt.s32.totalorder %s15, 1
      %s169 = scalar_select %p168, %s15, 1
      %s170 = smul.addr %s169, 32
      %s171 = smul.addr %s170, 8
      %s172 = scalar_lea.vmem %s0, %s171
      %p173 = scmp.lt.s32.totalorder %s15, 1
      %s174 = scalar_select %p173, %s15, 1
      %s175 = smul.addr %s174, 32
      %s176 = smul.addr %s175, 8
      %s177 = scalar_lea.vmem %s2, %s176
      %p178 = scmp.lt.s32.totalorder %s15, 1
      %s179 = scalar_select %p178, %s15, 1
      %s180 = smul.addr %s179, 2
      %s181 = scalar_lea.vmem %s3, %s180
      %v182 = vld [vmem:[%s172] sm:$0xff]
      %v183 = vld [vmem:[%s172 + $0x8] sm:$0xff]
      %v184 = vld [vmem:[%s172 + $0x10] sm:$0xff]
      %v185 = vld [vmem:[%s172 + $0x18] sm:$0xff]
      %v186 = vld [vmem:[%s172 + $0x20] sm:$0xff]
      %v187 = vld [vmem:[%s172 + $0x28] sm:$0xff]
      %v188 = vld [vmem:[%s172 + $0x30] sm:$0xff]
      %v189 = vld [vmem:[%s172 + $0x38] sm:$0xff]
      %v190 = vld [vmem:[%s172 + $0x40] sm:$0xff]
      %v191 = vld [vmem:[%s172 + $0x48] sm:$0xff]
      %v192 = vld [vmem:[%s172 + $0x50] sm:$0xff]
      %v193 = vld [vmem:[%s172 + $0x58] sm:$0xff]
      %v194 = vld [vmem:[%s172 + $0x60] sm:$0xff]
      %v195 = vld [vmem:[%s172 + $0x68] sm:$0xff]
      %v196 = vld [vmem:[%s172 + $0x70] sm:$0xff]
      %v197 = vld [vmem:[%s172 + $0x78] sm:$0xff]
      %v198 = vld [vmem:[%s172 + $0x80] sm:$0xff]
      %v199 = vld [vmem:[%s172 + $0x88] sm:$0xff]
      %v200 = vld [vmem:[%s172 + $0x90] sm:$0xff]
      %v201 = vld [vmem:[%s172 + $0x98] sm:$0xff]
      %v202 = vld [vmem:[%s172 + $0xa0] sm:$0xff]
      %v203 = vld [vmem:[%s172 + $0xa8] sm:$0xff]
      %v204 = vld [vmem:[%s172 + $0xb0] sm:$0xff]
      %v205 = vld [vmem:[%s172 + $0xb8] sm:$0xff]
      %v206 = vld [vmem:[%s172 + $0xc0] sm:$0xff]
      %v207 = vld [vmem:[%s172 + $0xc8] sm:$0xff]
      %v208 = vld [vmem:[%s172 + $0xd0] sm:$0xff]
      %v209 = vld [vmem:[%s172 + $0xd8] sm:$0xff]
      %v210 = vld [vmem:[%s172 + $0xe0] sm:$0xff]
      %v211 = vld [vmem:[%s172 + $0xe8] sm:$0xff]
      %v212 = vld [vmem:[%s172 + $0xf0] sm:$0xff]
      %v213 = vld [vmem:[%s172 + $0xf8] sm:$0xff]
      %vm214 = vcmask 64512
      %215 = vst.msk [vmem:[#allocation2] sm:$0xff] %vm214, 0.0
      %216 = vst.msk [vmem:[#allocation2 + $0x8] sm:$0xff] %vm214, 0.0
      %vm217 = vcmask 58368
      %218 = vst.msk [vmem:[#allocation2 + $0x10] sm:$0x3] %vm217, 0.0
      %s219 = scalar_lea.vmem [#allocation2], 408
      %220 = vst.msk [vmem:[%s219] sm:$0xff] %vm214, 0.0
      %221 = vst.msk [vmem:[%s219 + $0x8] sm:$0xff] %vm214, 0.0
      %222 = vst.msk [vmem:[%s219 + $0x10] sm:$0x3] %vm217, 0.0
      %vm223 = vcmask 57344
      %224 = vst.msk [vmem:[#allocation2] sm:$0x1] %vm223, 0.0
      %225 = vst.msk [vmem:[#allocation2 + $0x18] sm:$0x1] %vm223, 0.0
      %226 = vst.msk [vmem:[#allocation2 + $0x30] sm:$0x1] %vm223, 0.0
      %227 = vst.msk [vmem:[#allocation2 + $0x48] sm:$0x1] %vm223, 0.0
      %228 = vst.msk [vmem:[#allocation2 + $0x60] sm:$0x1] %vm223, 0.0
      %229 = vst.msk [vmem:[#allocation2 + $0x78] sm:$0x1] %vm223, 0.0
      %230 = vst.msk [vmem:[#allocation2 + $0x90] sm:$0x1] %vm223, 0.0
      %231 = vst.msk [vmem:[#allocation2 + $0xa8] sm:$0x1] %vm223, 0.0
      %232 = vst.msk [vmem:[#allocation2 + $0xc0] sm:$0x1] %vm223, 0.0
      %233 = vst.msk [vmem:[#allocation2 + $0xd8] sm:$0x1] %vm223, 0.0
      %234 = vst.msk [vmem:[#allocation2 + $0xf0] sm:$0x1] %vm223, 0.0
      %235 = vst.msk [vmem:[#allocation2 + $0x108] sm:$0x1] %vm223, 0.0
      %236 = vst.msk [vmem:[#allocation2 + $0x120] sm:$0x1] %vm223, 0.0
      %237 = vst.msk [vmem:[#allocation2 + $0x138] sm:$0x1] %vm223, 0.0
      %238 = vst.msk [vmem:[#allocation2 + $0x150] sm:$0x1] %vm223, 0.0
      %239 = vst.msk [vmem:[#allocation2 + $0x168] sm:$0x1] %vm223, 0.0
      %240 = vst.msk [vmem:[#allocation2 + $0x180] sm:$0x1] %vm223, 0.0
      %241 = vst.msk [vmem:[#allocation2 + $0x198] sm:$0x1] %vm223, 0.0
      %242 = vst.msk [vmem:[#allocation2 + $0x11] sm:$0x1] %vm223, 0.0
      %243 = vst.msk [vmem:[#allocation2 + $0x29] sm:$0x1] %vm223, 0.0
      %244 = vst.msk [vmem:[#allocation2 + $0x41] sm:$0x1] %vm223, 0.0
      %245 = vst.msk [vmem:[#allocation2 + $0x59] sm:$0x1] %vm223, 0.0
      %246 = vst.msk [vmem:[#allocation2 + $0x71] sm:$0x1] %vm223, 0.0
      %247 = vst.msk [vmem:[#allocation2 + $0x89] sm:$0x1] %vm223, 0.0
      %248 = vst.msk [vmem:[#allocation2 + $0xa1] sm:$0x1] %vm223, 0.0
      %249 = vst.msk [vmem:[#allocation2 + $0xb9] sm:$0x1] %vm223, 0.0
      %250 = vst.msk [vmem:[#allocation2 + $0xd1] sm:$0x1] %vm223, 0.0
      %251 = vst.msk [vmem:[#allocation2 + $0xe9] sm:$0x1] %vm223, 0.0
      %252 = vst.msk [vmem:[#allocation2 + $0x101] sm:$0x1] %vm223, 0.0
      %253 = vst.msk [vmem:[#allocation2 + $0x119] sm:$0x1] %vm223, 0.0
      %254 = vst.msk [vmem:[#allocation2 + $0x131] sm:$0x1] %vm223, 0.0
      %255 = vst.msk [vmem:[#allocation2 + $0x149] sm:$0x1] %vm223, 0.0
      %256 = vst.msk [vmem:[#allocation2 + $0x161] sm:$0x1] %vm223, 0.0
      %257 = vst.msk [vmem:[#allocation2 + $0x179] sm:$0x1] %vm223, 0.0
      %258 = vst.msk [vmem:[#allocation2 + $0x191] sm:$0x1] %vm223, 0.0
      %259 = vst.msk [vmem:[#allocation2 + $0x1a9] sm:$0x1] %vm223, 0.0
      %s260 = scalar_lea.vmem [#allocation2], 24
      %261 = vst.msk [vmem:[%s260 + $0x1] sm:$0xff] %vm214, %v182
      %262 = vst.msk [vmem:[%s260 + $0x9] sm:$0xff] %vm214, %v183
      %263 = vst.msk [vmem:[%s260 + $0x19] sm:$0xff] %vm214, %v184
      %264 = vst.msk [vmem:[%s260 + $0x21] sm:$0xff] %vm214, %v185
      %265 = vst.msk [vmem:[%s260 + $0x31] sm:$0xff] %vm214, %v186
      %266 = vst.msk [vmem:[%s260 + $0x39] sm:$0xff] %vm214, %v187
      %267 = vst.msk [vmem:[%s260 + $0x49] sm:$0xff] %vm214, %v188
      %268 = vst.msk [vmem:[%s260 + $0x51] sm:$0xff] %vm214, %v189
      %269 = vst.msk [vmem:[%s260 + $0x61] sm:$0xff] %vm214, %v190
      %270 = vst.msk [vmem:[%s260 + $0x69] sm:$0xff] %vm214, %v191
      %271 = vst.msk [vmem:[%s260 + $0x79] sm:$0xff] %vm214, %v192
      %272 = vst.msk [vmem:[%s260 + $0x81] sm:$0xff] %vm214, %v193
      %273 = vst.msk [vmem:[%s260 + $0x91] sm:$0xff] %vm214, %v194
      %274 = vst.msk [vmem:[%s260 + $0x99] sm:$0xff] %vm214, %v195
      %275 = vst.msk [vmem:[%s260 + $0xa9] sm:$0xff] %vm214, %v196
      %276 = vst.msk [vmem:[%s260 + $0xb1] sm:$0xff] %vm214, %v197
      %277 = vst.msk [vmem:[%s260 + $0xc1] sm:$0xff] %vm214, %v198
      %278 = vst.msk [vmem:[%s260 + $0xc9] sm:$0xff] %vm214, %v199
      %279 = vst.msk [vmem:[%s260 + $0xd9] sm:$0xff] %vm214, %v200
      %280 = vst.msk [vmem:[%s260 + $0xe1] sm:$0xff] %vm214, %v201
      %281 = vst.msk [vmem:[%s260 + $0xf1] sm:$0xff] %vm214, %v202
      %282 = vst.msk [vmem:[%s260 + $0xf9] sm:$0xff] %vm214, %v203
      %283 = vst.msk [vmem:[%s260 + $0x109] sm:$0xff] %vm214, %v204
      %284 = vst.msk [vmem:[%s260 + $0x111] sm:$0xff] %vm214, %v205
      %285 = vst.msk [vmem:[%s260 + $0x121] sm:$0xff] %vm214, %v206
      %286 = vst.msk [vmem:[%s260 + $0x129] sm:$0xff] %vm214, %v207
      %287 = vst.msk [vmem:[%s260 + $0x139] sm:$0xff] %vm214, %v208
      %288 = vst.msk [vmem:[%s260 + $0x141] sm:$0xff] %vm214, %v209
      %289 = vst.msk [vmem:[%s260 + $0x151] sm:$0xff] %vm214, %v210
      %290 = vst.msk [vmem:[%s260 + $0x159] sm:$0xff] %vm214, %v211
      %291 = vst.msk [vmem:[%s260 + $0x169] sm:$0xff] %vm214, %v212
      %292 = vst.msk [vmem:[%s260 + $0x171] sm:$0xff] %vm214, %v213
      %v293 = vld [vmem:[#allocation2] sm:$0xff]
      %v294 = vld [vmem:[#allocation2 + $0x8] sm:$0xff]
      %v295 = vld [vmem:[#allocation2 + $0x10] sm:$0x3]
      %v296 = vld [vmem:[#allocation2 + $0x18] sm:$0xff]
      %v297 = vld [vmem:[#allocation2 + $0x20] sm:$0xff]
      %v298 = vld [vmem:[#allocation2 + $0x28] sm:$0x3]
      %v299 = vld [vmem:[#allocation2 + $0x30] sm:$0xff]
      %v300 = vld [vmem:[#allocation2 + $0x38] sm:$0xff]
      %v301 = vld [vmem:[#allocation2 + $0x40] sm:$0x3]
      %v302 = vld [vmem:[#allocation2 + $0x48] sm:$0xff]
      %v303 = vld [vmem:[#allocation2 + $0x50] sm:$0xff]
      %v304 = vld [vmem:[#allocation2 + $0x58] sm:$0x3]
      %v305 = vld [vmem:[#allocation2 + $0x60] sm:$0xff]
      %v306 = vld [vmem:[#allocation2 + $0x68] sm:$0xff]
      %v307 = vld [vmem:[#allocation2 + $0x70] sm:$0x3]
      %v308 = vld [vmem:[#allocation2 + $0x78] sm:$0xff]
      %v309 = vld [vmem:[#allocation2 + $0x80] sm:$0xff]
      %v310 = vld [vmem:[#allocation2 + $0x88] sm:$0x3]
      %v311 = vld [vmem:[#allocation2 + $0x90] sm:$0xff]
      %v312 = vld [vmem:[#allocation2 + $0x98] sm:$0xff]
      %v313 = vld [vmem:[#allocation2 + $0xa0] sm:$0x3]
      %v314 = vld [vmem:[#allocation2 + $0xa8] sm:$0xff]
      %v315 = vld [vmem:[#allocation2 + $0xb0] sm:$0xff]
      %v316 = vld [vmem:[#allocation2 + $0xb8] sm:$0x3]
      %v317 = vld [vmem:[#allocation2 + $0xc0] sm:$0xff]
      %v318 = vld [vmem:[#allocation2 + $0xc8] sm:$0xff]
      %v319 = vld [vmem:[#allocation2 + $0xd0] sm:$0x3]
      %v320 = vld [vmem:[#allocation2 + $0xd8] sm:$0xff]
      %v321 = vld [vmem:[#allocation2 + $0xe0] sm:$0xff]
      %v322 = vld [vmem:[#allocation2 + $0xe8] sm:$0x3]
      %v323 = vld [vmem:[#allocation2 + $0xf0] sm:$0xff]
      %v324 = vld [vmem:[#allocation2 + $0xf8] sm:$0xff]
      %v325 = vld [vmem:[#allocation2 + $0x100] sm:$0x3]
      %v326 = vld [vmem:[#allocation2 + $0x108] sm:$0xff]
      %v327 = vld [vmem:[#allocation2 + $0x110] sm:$0xff]
      %v328 = vld [vmem:[#allocation2 + $0x118] sm:$0x3]
      %v329 = vld [vmem:[#allocation2 + $0x120] sm:$0xff]
      %v330 = vld [vmem:[#allocation2 + $0x128] sm:$0xff]
      %v331 = vld [vmem:[#allocation2 + $0x130] sm:$0x3]
      %v332 = vld [vmem:[#allocation2 + $0x138] sm:$0xff]
      %v333 = vld [vmem:[#allocation2 + $0x140] sm:$0xff]
      %v334 = vld [vmem:[#allocation2 + $0x148] sm:$0x3]
      %v335 = vld [vmem:[#allocation2 + $0x150] sm:$0xff]
      %v336 = vld [vmem:[#allocation2 + $0x158] sm:$0xff]
      %v337 = vld [vmem:[#allocation2 + $0x160] sm:$0x3]
      %v338 = vld [vmem:[#allocation2 + $0x168] sm:$0xff]
      %v339 = vld [vmem:[#allocation2 + $0x170] sm:$0xff]
      %v340 = vld [vmem:[#allocation2 + $0x178] sm:$0x3]
      %v341 = vld [vmem:[#allocation2 + $0x180] sm:$0xff]
      %v342 = vld [vmem:[#allocation2 + $0x188] sm:$0xff]
      %v343 = vld [vmem:[#allocation2 + $0x190] sm:$0x3]
      %v344 = vld [vmem:[#allocation2 + $0x198] sm:$0xff]
      %v345 = vld [vmem:[#allocation2 + $0x1a0] sm:$0xff]
      %v346 = vld [vmem:[#allocation2 + $0x1a8] sm:$0x3]
      %347 = vst.msk [vmem:[#allocation3] sm:$0xff] %vm214, %v293
      %348 = vst.msk [vmem:[#allocation3 + $0x8] sm:$0xff] %vm214, %v294
      %349 = vst.msk [vmem:[#allocation3 + $0x10] sm:$0xff] %vm214, %v296
      %350 = vst.msk [vmem:[#allocation3 + $0x18] sm:$0xff] %vm214, %v297
      %351 = vst.msk [vmem:[#allocation3 + $0x20] sm:$0xff] %vm214, %v299
      %352 = vst.msk [vmem:[#allocation3 + $0x28] sm:$0xff] %vm214, %v300
      %353 = vst.msk [vmem:[#allocation3 + $0x30] sm:$0xff] %vm214, %v302
      %354 = vst.msk [vmem:[#allocation3 + $0x38] sm:$0xff] %vm214, %v303
      %355 = vst.msk [vmem:[#allocation3 + $0x40] sm:$0xff] %vm214, %v305
      %356 = vst.msk [vmem:[#allocation3 + $0x48] sm:$0xff] %vm214, %v306
      %357 = vst.msk [vmem:[#allocation3 + $0x50] sm:$0xff] %vm214, %v308
      %358 = vst.msk [vmem:[#allocation3 + $0x58] sm:$0xff] %vm214, %v309
      %359 = vst.msk [vmem:[#allocation3 + $0x60] sm:$0xff] %vm214, %v311
      %360 = vst.msk [vmem:[#allocation3 + $0x68] sm:$0xff] %vm214, %v312
      %361 = vst.msk [vmem:[#allocation3 + $0x70] sm:$0xff] %vm214, %v314
      %362 = vst.msk [vmem:[#allocation3 + $0x78] sm:$0xff] %vm214, %v315
      %363 = vst.msk [vmem:[#allocation3 + $0x80] sm:$0xff] %vm214, %v317
      %364 = vst.msk [vmem:[#allocation3 + $0x88] sm:$0xff] %vm214, %v318
      %365 = vst.msk [vmem:[#allocation3 + $0x90] sm:$0xff] %vm214, %v320
      %366 = vst.msk [vmem:[#allocation3 + $0x98] sm:$0xff] %vm214, %v321
      %367 = vst.msk [vmem:[#allocation3 + $0xa0] sm:$0xff] %vm214, %v323
      %368 = vst.msk [vmem:[#allocation3 + $0xa8] sm:$0xff] %vm214, %v324
      %369 = vst.msk [vmem:[#allocation3 + $0xb0] sm:$0xff] %vm214, %v326
      %370 = vst.msk [vmem:[#allocation3 + $0xb8] sm:$0xff] %vm214, %v327
      %371 = vst.msk [vmem:[#allocation3 + $0xc0] sm:$0xff] %vm214, %v329
      %372 = vst.msk [vmem:[#allocation3 + $0xc8] sm:$0xff] %vm214, %v330
      %373 = vst.msk [vmem:[#allocation3 + $0xd0] sm:$0xff] %vm214, %v332
      %374 = vst.msk [vmem:[#allocation3 + $0xd8] sm:$0xff] %vm214, %v333
      %375 = vst.msk [vmem:[#allocation3 + $0xe0] sm:$0xff] %vm214, %v335
      %376 = vst.msk [vmem:[#allocation3 + $0xe8] sm:$0xff] %vm214, %v336
      %377 = vst.msk [vmem:[#allocation3 + $0xf0] sm:$0xff] %vm214, %v338
      %378 = vst.msk [vmem:[#allocation3 + $0xf8] sm:$0xff] %vm214, %v339
      %vm427 = vcmask 1046528
      %v428 = vrot.slane %v293, 1
      %v429 = vrot.slane %v294, 1
      %v430 = vsel %vm427, %v428, %v429
      %v431 = vrot.slane %v295, 1
      %v432 = vsel %vm427, %v429, %v431
      %v433 = vrot.slane %v296, 1
      %v434 = vrot.slane %v297, 1
      %v435 = vsel %vm427, %v433, %v434
      %v436 = vrot.slane %v298, 1
      %v437 = vsel %vm427, %v434, %v436
      %v438 = vrot.slane %v299, 1
      %v439 = vrot.slane %v300, 1
      %v440 = vsel %vm427, %v438, %v439
      %v441 = vrot.slane %v301, 1
      %v442 = vsel %vm427, %v439, %v441
      %v443 = vrot.slane %v302, 1
      %v444 = vrot.slane %v303, 1
      %v445 = vsel %vm427, %v443, %v444
      %v446 = vrot.slane %v304, 1
      %v447 = vsel %vm427, %v444, %v446
      %v448 = vrot.slane %v305, 1
      %v449 = vrot.slane %v306, 1
      %v450 = vsel %vm427, %v448, %v449
      %v451 = vrot.slane %v307, 1
      %v452 = vsel %vm427, %v449, %v451
      %v453 = vrot.slane %v308, 1
      %v454 = vrot.slane %v309, 1
      %v455 = vsel %vm427, %v453, %v454
      %v456 = vrot.slane %v310, 1
      %v457 = vsel %vm427, %v454, %v456
      %v458 = vrot.slane %v311, 1
      %v459 = vrot.slane %v312, 1
      %v460 = vsel %vm427, %v458, %v459
      %v461 = vrot.slane %v313, 1
      %v462 = vsel %vm427, %v459, %v461
      %v463 = vrot.slane %v314, 1
      %v464 = vrot.slane %v315, 1
      %v465 = vsel %vm427, %v463, %v464
      %v466 = vrot.slane %v316, 1
      %v467 = vsel %vm427, %v464, %v466
      %v468 = vrot.slane %v317, 1
      %v469 = vrot.slane %v318, 1
      %v470 = vsel %vm427, %v468, %v469
      %v471 = vrot.slane %v319, 1
      %v472 = vsel %vm427, %v469, %v471
      %v473 = vrot.slane %v320, 1
      %v474 = vrot.slane %v321, 1
      %v475 = vsel %vm427, %v473, %v474
      %v476 = vrot.slane %v322, 1
      %v477 = vsel %vm427, %v474, %v476
      %v478 = vrot.slane %v323, 1
      %v479 = vrot.slane %v324, 1
      %v480 = vsel %vm427, %v478, %v479
      %v481 = vrot.slane %v325, 1
      %v482 = vsel %vm427, %v479, %v481
      %v483 = vrot.slane %v326, 1
      %v484 = vrot.slane %v327, 1
      %v485 = vsel %vm427, %v483, %v484
      %v486 = vrot.slane %v328, 1
      %v487 = vsel %vm427, %v484, %v486
      %v488 = vrot.slane %v329, 1
      %v489 = vrot.slane %v330, 1
      %v490 = vsel %vm427, %v488, %v489
      %v491 = vrot.slane %v331, 1
      %v492 = vsel %vm427, %v489, %v491
      %v493 = vrot.slane %v332, 1
      %v494 = vrot.slane %v333, 1
      %v495 = vsel %vm427, %v493, %v494
      %v496 = vrot.slane %v334, 1
      %v497 = vsel %vm427, %v494, %v496
      %v498 = vrot.slane %v335, 1
      %v499 = vrot.slane %v336, 1
      %v500 = vsel %vm427, %v498, %v499
      %v501 = vrot.slane %v337, 1
      %v502 = vsel %vm427, %v499, %v501
      %v503 = vrot.slane %v338, 1
      %v504 = vrot.slane %v339, 1
      %v505 = vsel %vm427, %v503, %v504
      %v506 = vrot.slane %v340, 1
      %v507 = vsel %vm427, %v504, %v506
      %508 = vrot.lane.b32.xlu0 %v430, 8
      %v509 = vpop.permute.xlu0 %508
      %510 = vrot.lane.b32.xlu0 %v432, 8
      %v511 = vpop.permute.xlu0 %510
      %512 = vrot.lane.b32.xlu0 %v435, 8
      %v513 = vpop.permute.xlu0 %512
      %514 = vrot.lane.b32.xlu0 %v437, 8
      %v515 = vpop.permute.xlu0 %514
      %516 = vrot.lane.b32.xlu0 %v440, 8
      %v517 = vpop.permute.xlu0 %516
      %518 = vrot.lane.b32.xlu0 %v442, 8
      %v519 = vpop.permute.xlu0 %518
      %520 = vrot.lane.b32.xlu0 %v445, 8
      %v521 = vpop.permute.xlu0 %520
      %522 = vrot.lane.b32.xlu0 %v447, 8
      %v523 = vpop.permute.xlu0 %522
      %524 = vrot.lane.b32.xlu0 %v450, 8
      %v525 = vpop.permute.xlu0 %524
      %526 = vrot.lane.b32.xlu0 %v452, 8
      %v527 = vpop.permute.xlu0 %526
      %528 = vrot.lane.b32.xlu0 %v455, 8
      %v529 = vpop.permute.xlu0 %528
      %530 = vrot.lane.b32.xlu0 %v457, 8
      %v531 = vpop.permute.xlu0 %530
      %532 = vrot.lane.b32.xlu0 %v460, 8
      %v533 = vpop.permute.xlu0 %532
      %534 = vrot.lane.b32.xlu0 %v462, 8
      %v535 = vpop.permute.xlu0 %534
      %536 = vrot.lane.b32.xlu0 %v465, 8
      %v537 = vpop.permute.xlu0 %536
      %538 = vrot.lane.b32.xlu0 %v467, 8
      %v539 = vpop.permute.xlu0 %538
      %540 = vrot.lane.b32.xlu0 %v470, 8
      %v541 = vpop.permute.xlu0 %540
      %542 = vrot.lane.b32.xlu0 %v472, 8
      %v543 = vpop.permute.xlu0 %542
      %544 = vrot.lane.b32.xlu0 %v475, 8
      %v545 = vpop.permute.xlu0 %544
      %546 = vrot.lane.b32.xlu0 %v477, 8
      %v547 = vpop.permute.xlu0 %546
      %548 = vrot.lane.b32.xlu0 %v480, 8
      %v549 = vpop.permute.xlu0 %548
      %550 = vrot.lane.b32.xlu0 %v482, 8
      %v551 = vpop.permute.xlu0 %550
      %552 = vrot.lane.b32.xlu0 %v485, 8
      %v553 = vpop.permute.xlu0 %552
      %554 = vrot.lane.b32.xlu0 %v487, 8
      %v555 = vpop.permute.xlu0 %554
      %556 = vrot.lane.b32.xlu0 %v490, 8
      %v557 = vpop.permute.xlu0 %556
      %558 = vrot.lane.b32.xlu0 %v492, 8
      %v559 = vpop.permute.xlu0 %558
      %560 = vrot.lane.b32.xlu0 %v495, 8
      %v561 = vpop.permute.xlu0 %560
      %562 = vrot.lane.b32.xlu0 %v497, 8
      %v563 = vpop.permute.xlu0 %562
      %564 = vrot.lane.b32.xlu0 %v500, 8
      %v565 = vpop.permute.xlu0 %564
      %566 = vrot.lane.b32.xlu0 %v502, 8
      %v567 = vpop.permute.xlu0 %566
      %568 = vrot.lane.b32.xlu0 %v505, 8
      %v569 = vpop.permute.xlu0 %568
      %570 = vrot.lane.b32.xlu0 %v507, 8
      %v571 = vpop.permute.xlu0 %570
      %vm604 = vcmask 130112
      %605 = vst.msk [vmem:[#allocation3] sm:$0xff] %vm604, %v509
      %606 = vst.msk [vmem:[#allocation3 + $0x8] sm:$0xff] %vm604, %v511
      %607 = vst.msk [vmem:[#allocation3 + $0x10] sm:$0xff] %vm604, %v513
      %608 = vst.msk [vmem:[#allocation3 + $0x18] sm:$0xff] %vm604, %v515
      %609 = vst.msk [vmem:[#allocation3 + $0x20] sm:$0xff] %vm604, %v517
      %610 = vst.msk [vmem:[#allocation3 + $0x28] sm:$0xff] %vm604, %v519
      %611 = vst.msk [vmem:[#allocation3 + $0x30] sm:$0xff] %vm604, %v521
      %612 = vst.msk [vmem:[#allocation3 + $0x38] sm:$0xff] %vm604, %v523
      %613 = vst.msk [vmem:[#allocation3 + $0x40] sm:$0xff] %vm604, %v525
      %614 = vst.msk [vmem:[#allocation3 + $0x48] sm:$0xff] %vm604, %v527
      %615 = vst.msk [vmem:[#allocation3 + $0x50] sm:$0xff] %vm604, %v529
      %616 = vst.msk [vmem:[#allocation3 + $0x58] sm:$0xff] %vm604, %v531
      %617 = vst.msk [vmem:[#allocation3 + $0x60] sm:$0xff] %vm604, %v533
      %618 = vst.msk [vmem:[#allocation3 + $0x68] sm:$0xff] %vm604, %v535
      %619 = vst.msk [vmem:[#allocation3 + $0x70] sm:$0xff] %vm604, %v537
      %620 = vst.msk [vmem:[#allocation3 + $0x78] sm:$0xff] %vm604, %v539
      %621 = vst.msk [vmem:[#allocation3 + $0x80] sm:$0xff] %vm604, %v541
      %622 = vst.msk [vmem:[#allocation3 + $0x88] sm:$0xff] %vm604, %v543
      %623 = vst.msk [vmem:[#allocation3 + $0x90] sm:$0xff] %vm604, %v545
      %624 = vst.msk [vmem:[#allocation3 + $0x98] sm:$0xff] %vm604, %v547
      %625 = vst.msk [vmem:[#allocation3 + $0xa0] sm:$0xff] %vm604, %v549
      %626 = vst.msk [vmem:[#allocation3 + $0xa8] sm:$0xff] %vm604, %v551
      %627 = vst.msk [vmem:[#allocation3 + $0xb0] sm:$0xff] %vm604, %v553
      %628 = vst.msk [vmem:[#allocation3 + $0xb8] sm:$0xff] %vm604, %v555
      %629 = vst.msk [vmem:[#allocation3 + $0xc0] sm:$0xff] %vm604, %v557
      %630 = vst.msk [vmem:[#allocation3 + $0xc8] sm:$0xff] %vm604, %v559
      %631 = vst.msk [vmem:[#allocation3 + $0xd0] sm:$0xff] %vm604, %v561
      %632 = vst.msk [vmem:[#allocation3 + $0xd8] sm:$0xff] %vm604, %v563
      %633 = vst.msk [vmem:[#allocation3 + $0xe0] sm:$0xff] %vm604, %v565
      %634 = vst.msk [vmem:[#allocation3 + $0xe8] sm:$0xff] %vm604, %v567
      %635 = vst.msk [vmem:[#allocation3 + $0xf0] sm:$0xff] %vm604, %v569
      %636 = vst.msk [vmem:[#allocation3 + $0xf8] sm:$0xff] %vm604, %v571
      %vm637 = vcmask 1045504
      %v638 = vrot.slane %v293, 2
      %v639 = vrot.slane %v294, 2
      %v640 = vsel %vm637, %v638, %v639
      %v641 = vrot.slane %v295, 2
      %v642 = vsel %vm637, %v639, %v641
      %v643 = vrot.slane %v296, 2
      %v644 = vrot.slane %v297, 2
      %v645 = vsel %vm637, %v643, %v644
      %v646 = vrot.slane %v298, 2
      %v647 = vsel %vm637, %v644, %v646
      %v648 = vrot.slane %v299, 2
      %v649 = vrot.slane %v300, 2
      %v650 = vsel %vm637, %v648, %v649
      %v651 = vrot.slane %v301, 2
      %v652 = vsel %vm637, %v649, %v651
      %v653 = vrot.slane %v302, 2
      %v654 = vrot.slane %v303, 2
      %v655 = vsel %vm637, %v653, %v654
      %v656 = vrot.slane %v304, 2
      %v657 = vsel %vm637, %v654, %v656
      %v658 = vrot.slane %v305, 2
      %v659 = vrot.slane %v306, 2
      %v660 = vsel %vm637, %v658, %v659
      %v661 = vrot.slane %v307, 2
      %v662 = vsel %vm637, %v659, %v661
      %v663 = vrot.slane %v308, 2
      %v664 = vrot.slane %v309, 2
      %v665 = vsel %vm637, %v663, %v664
      %v666 = vrot.slane %v310, 2
      %v667 = vsel %vm637, %v664, %v666
      %v668 = vrot.slane %v311, 2
      %v669 = vrot.slane %v312, 2
      %v670 = vsel %vm637, %v668, %v669
      %v671 = vrot.slane %v313, 2
      %v672 = vsel %vm637, %v669, %v671
      %v673 = vrot.slane %v314, 2
      %v674 = vrot.slane %v315, 2
      %v675 = vsel %vm637, %v673, %v674
      %v676 = vrot.slane %v316, 2
      %v677 = vsel %vm637, %v674, %v676
      %v678 = vrot.slane %v317, 2
      %v679 = vrot.slane %v318, 2
      %v680 = vsel %vm637, %v678, %v679
      %v681 = vrot.slane %v319, 2
      %v682 = vsel %vm637, %v679, %v681
      %v683 = vrot.slane %v320, 2
      %v684 = vrot.slane %v321, 2
      %v685 = vsel %vm637, %v683, %v684
      %v686 = vrot.slane %v322, 2
      %v687 = vsel %vm637, %v684, %v686
      %v688 = vrot.slane %v323, 2
      %v689 = vrot.slane %v324, 2
      %v690 = vsel %vm637, %v688, %v689
      %v691 = vrot.slane %v325, 2
      %v692 = vsel %vm637, %v689, %v691
      %v693 = vrot.slane %v326, 2
      %v694 = vrot.slane %v327, 2
      %v695 = vsel %vm637, %v693, %v694
      %v696 = vrot.slane %v328, 2
      %v697 = vsel %vm637, %v694, %v696
      %v698 = vrot.slane %v329, 2
      %v699 = vrot.slane %v330, 2
      %v700 = vsel %vm637, %v698, %v699
      %v701 = vrot.slane %v331, 2
      %v702 = vsel %vm637, %v699, %v701
      %v703 = vrot.slane %v332, 2
      %v704 = vrot.slane %v333, 2
      %v705 = vsel %vm637, %v703, %v704
      %v706 = vrot.slane %v334, 2
      %v707 = vsel %vm637, %v704, %v706
      %v708 = vrot.slane %v335, 2
      %v709 = vrot.slane %v336, 2
      %v710 = vsel %vm637, %v708, %v709
      %v711 = vrot.slane %v337, 2
      %v712 = vsel %vm637, %v709, %v711
      %v713 = vrot.slane %v338, 2
      %v714 = vrot.slane %v339, 2
      %v715 = vsel %vm637, %v713, %v714
      %v716 = vrot.slane %v340, 2
      %v717 = vsel %vm637, %v714, %v716
      %718 = vrot.lane.b32.xlu0 %v640, 16
      %v719 = vpop.permute.xlu0 %718
      %720 = vrot.lane.b32.xlu0 %v642, 16
      %v721 = vpop.permute.xlu0 %720
      %722 = vrot.lane.b32.xlu0 %v645, 16
      %v723 = vpop.permute.xlu0 %722
      %724 = vrot.lane.b32.xlu0 %v647, 16
      %v725 = vpop.permute.xlu0 %724
      %726 = vrot.lane.b32.xlu0 %v650, 16
      %v727 = vpop.permute.xlu0 %726
      %728 = vrot.lane.b32.xlu0 %v652, 16
      %v729 = vpop.permute.xlu0 %728
      %730 = vrot.lane.b32.xlu0 %v655, 16
      %v731 = vpop.permute.xlu0 %730
      %732 = vrot.lane.b32.xlu0 %v657, 16
      %v733 = vpop.permute.xlu0 %732
      %734 = vrot.lane.b32.xlu0 %v660, 16
      %v735 = vpop.permute.xlu0 %734
      %736 = vrot.lane.b32.xlu0 %v662, 16
      %v737 = vpop.permute.xlu0 %736
      %738 = vrot.lane.b32.xlu0 %v665, 16
      %v739 = vpop.permute.xlu0 %738
      %740 = vrot.lane.b32.xlu0 %v667, 16
      %v741 = vpop.permute.xlu0 %740
      %742 = vrot.lane.b32.xlu0 %v670, 16
      %v743 = vpop.permute.xlu0 %742
      %744 = vrot.lane.b32.xlu0 %v672, 16
      %v745 = vpop.permute.xlu0 %744
      %746 = vrot.lane.b32.xlu0 %v675, 16
      %v747 = vpop.permute.xlu0 %746
      %748 = vrot.lane.b32.xlu0 %v677, 16
      %v749 = vpop.permute.xlu0 %748
      %750 = vrot.lane.b32.xlu0 %v680, 16
      %v751 = vpop.permute.xlu0 %750
      %752 = vrot.lane.b32.xlu0 %v682, 16
      %v753 = vpop.permute.xlu0 %752
      %754 = vrot.lane.b32.xlu0 %v685, 16
      %v755 = vpop.permute.xlu0 %754
      %756 = vrot.lane.b32.xlu0 %v687, 16
      %v757 = vpop.permute.xlu0 %756
      %758 = vrot.lane.b32.xlu0 %v690, 16
      %v759 = vpop.permute.xlu0 %758
      %760 = vrot.lane.b32.xlu0 %v692, 16
      %v761 = vpop.permute.xlu0 %760
      %762 = vrot.lane.b32.xlu0 %v695, 16
      %v763 = vpop.permute.xlu0 %762
      %764 = vrot.lane.b32.xlu0 %v697, 16
      %v765 = vpop.permute.xlu0 %764
      %766 = vrot.lane.b32.xlu0 %v700, 16
      %v767 = vpop.permute.xlu0 %766
      %768 = vrot.lane.b32.xlu0 %v702, 16
      %v769 = vpop.permute.xlu0 %768
      %770 = vrot.lane.b32.xlu0 %v705, 16
      %v771 = vpop.permute.xlu0 %770
      %772 = vrot.lane.b32.xlu0 %v707, 16
      %v773 = vpop.permute.xlu0 %772
      %774 = vrot.lane.b32.xlu0 %v710, 16
      %v775 = vpop.permute.xlu0 %774
      %776 = vrot.lane.b32.xlu0 %v712, 16
      %v777 = vpop.permute.xlu0 %776
      %778 = vrot.lane.b32.xlu0 %v715, 16
      %v779 = vpop.permute.xlu0 %778
      %780 = vrot.lane.b32.xlu0 %v717, 16
      %v781 = vpop.permute.xlu0 %780
      %vm814 = vcmask 195712
      %815 = vst.msk [vmem:[#allocation3] sm:$0xff] %vm814, %v719
      %816 = vst.msk [vmem:[#allocation3 + $0x8] sm:$0xff] %vm814, %v721
      %817 = vst.msk [vmem:[#allocation3 + $0x10] sm:$0xff] %vm814, %v723
      %818 = vst.msk [vmem:[#allocation3 + $0x18] sm:$0xff] %vm814, %v725
      %819 = vst.msk [vmem:[#allocation3 + $0x20] sm:$0xff] %vm814, %v727
      %820 = vst.msk [vmem:[#allocation3 + $0x28] sm:$0xff] %vm814, %v729
      %821 = vst.msk [vmem:[#allocation3 + $0x30] sm:$0xff] %vm814, %v731
      %822 = vst.msk [vmem:[#allocation3 + $0x38] sm:$0xff] %vm814, %v733
      %823 = vst.msk [vmem:[#allocation3 + $0x40] sm:$0xff] %vm814, %v735
      %824 = vst.msk [vmem:[#allocation3 + $0x48] sm:$0xff] %vm814, %v737
      %825 = vst.msk [vmem:[#allocation3 + $0x50] sm:$0xff] %vm814, %v739
      %826 = vst.msk [vmem:[#allocation3 + $0x58] sm:$0xff] %vm814, %v741
      %827 = vst.msk [vmem:[#allocation3 + $0x60] sm:$0xff] %vm814, %v743
      %828 = vst.msk [vmem:[#allocation3 + $0x68] sm:$0xff] %vm814, %v745
      %829 = vst.msk [vmem:[#allocation3 + $0x70] sm:$0xff] %vm814, %v747
      %830 = vst.msk [vmem:[#allocation3 + $0x78] sm:$0xff] %vm814, %v749
      %831 = vst.msk [vmem:[#allocation3 + $0x80] sm:$0xff] %vm814, %v751
      %832 = vst.msk [vmem:[#allocation3 + $0x88] sm:$0xff] %vm814, %v753
      %833 = vst.msk [vmem:[#allocation3 + $0x90] sm:$0xff] %vm814, %v755
      %834 = vst.msk [vmem:[#allocation3 + $0x98] sm:$0xff] %vm814, %v757
      %835 = vst.msk [vmem:[#allocation3 + $0xa0] sm:$0xff] %vm814, %v759
      %836 = vst.msk [vmem:[#allocation3 + $0xa8] sm:$0xff] %vm814, %v761
      %837 = vst.msk [vmem:[#allocation3 + $0xb0] sm:$0xff] %vm814, %v763
      %838 = vst.msk [vmem:[#allocation3 + $0xb8] sm:$0xff] %vm814, %v765
      %839 = vst.msk [vmem:[#allocation3 + $0xc0] sm:$0xff] %vm814, %v767
      %840 = vst.msk [vmem:[#allocation3 + $0xc8] sm:$0xff] %vm814, %v769
      %841 = vst.msk [vmem:[#allocation3 + $0xd0] sm:$0xff] %vm814, %v771
      %842 = vst.msk [vmem:[#allocation3 + $0xd8] sm:$0xff] %vm814, %v773
      %843 = vst.msk [vmem:[#allocation3 + $0xe0] sm:$0xff] %vm814, %v775
      %844 = vst.msk [vmem:[#allocation3 + $0xe8] sm:$0xff] %vm814, %v777
      %845 = vst.msk [vmem:[#allocation3 + $0xf0] sm:$0xff] %vm814, %v779
      %846 = vst.msk [vmem:[#allocation3 + $0xf8] sm:$0xff] %vm814, %v781
      %849 = vrot.lane.b32.xlu0 %v296, 24
      %v850 = vpop.permute.xlu0 %849
      %851 = vrot.lane.b32.xlu0 %v297, 24
      %v852 = vpop.permute.xlu0 %851
      %853 = vrot.lane.b32.xlu0 %v299, 24
      %v854 = vpop.permute.xlu0 %853
      %855 = vrot.lane.b32.xlu0 %v300, 24
      %v856 = vpop.permute.xlu0 %855
      %857 = vrot.lane.b32.xlu0 %v302, 24
      %v858 = vpop.permute.xlu0 %857
      %859 = vrot.lane.b32.xlu0 %v303, 24
      %v860 = vpop.permute.xlu0 %859
      %861 = vrot.lane.b32.xlu0 %v305, 24
      %v862 = vpop.permute.xlu0 %861
      %863 = vrot.lane.b32.xlu0 %v306, 24
      %v864 = vpop.permute.xlu0 %863
      %865 = vrot.lane.b32.xlu0 %v308, 24
      %v866 = vpop.permute.xlu0 %865
      %867 = vrot.lane.b32.xlu0 %v309, 24
      %v868 = vpop.permute.xlu0 %867
      %869 = vrot.lane.b32.xlu0 %v311, 24
      %v870 = vpop.permute.xlu0 %869
      %871 = vrot.lane.b32.xlu0 %v312, 24
      %v872 = vpop.permute.xlu0 %871
      %873 = vrot.lane.b32.xlu0 %v314, 24
      %v874 = vpop.permute.xlu0 %873
      %875 = vrot.lane.b32.xlu0 %v315, 24
      %v876 = vpop.permute.xlu0 %875
      %877 = vrot.lane.b32.xlu0 %v317, 24
      %v878 = vpop.permute.xlu0 %877
      %879 = vrot.lane.b32.xlu0 %v318, 24
      %v880 = vpop.permute.xlu0 %879
      %881 = vrot.lane.b32.xlu0 %v320, 24
      %v882 = vpop.permute.xlu0 %881
      %883 = vrot.lane.b32.xlu0 %v321, 24
      %v884 = vpop.permute.xlu0 %883
      %885 = vrot.lane.b32.xlu0 %v323, 24
      %v886 = vpop.permute.xlu0 %885
      %887 = vrot.lane.b32.xlu0 %v324, 24
      %v888 = vpop.permute.xlu0 %887
      %889 = vrot.lane.b32.xlu0 %v326, 24
      %v890 = vpop.permute.xlu0 %889
      %891 = vrot.lane.b32.xlu0 %v327, 24
      %v892 = vpop.permute.xlu0 %891
      %893 = vrot.lane.b32.xlu0 %v329, 24
      %v894 = vpop.permute.xlu0 %893
      %895 = vrot.lane.b32.xlu0 %v330, 24
      %v896 = vpop.permute.xlu0 %895
      %897 = vrot.lane.b32.xlu0 %v332, 24
      %v898 = vpop.permute.xlu0 %897
      %899 = vrot.lane.b32.xlu0 %v333, 24
      %v900 = vpop.permute.xlu0 %899
      %901 = vrot.lane.b32.xlu0 %v335, 24
      %v902 = vpop.permute.xlu0 %901
      %903 = vrot.lane.b32.xlu0 %v336, 24
      %v904 = vpop.permute.xlu0 %903
      %905 = vrot.lane.b32.xlu0 %v338, 24
      %v906 = vpop.permute.xlu0 %905
      %907 = vrot.lane.b32.xlu0 %v339, 24
      %v908 = vpop.permute.xlu0 %907
      %909 = vrot.lane.b32.xlu0 %v341, 24
      %v910 = vpop.permute.xlu0 %909
      %911 = vrot.lane.b32.xlu0 %v342, 24
      %v912 = vpop.permute.xlu0 %911
      %vm945 = vcmask 261312
      %946 = vst.msk [vmem:[#allocation3] sm:$0xff] %vm945, %v850
      %947 = vst.msk [vmem:[#allocation3 + $0x8] sm:$0xff] %vm945, %v852
      %948 = vst.msk [vmem:[#allocation3 + $0x10] sm:$0xff] %vm945, %v854
      %949 = vst.msk [vmem:[#allocation3 + $0x18] sm:$0xff] %vm945, %v856
      %950 = vst.msk [vmem:[#allocation3 + $0x20] sm:$0xff] %vm945, %v858
      %951 = vst.msk [vmem:[#allocation3 + $0x28] sm:$0xff] %vm945, %v860
      %952 = vst.msk [vmem:[#allocation3 + $0x30] sm:$0xff] %vm945, %v862
      %953 = vst.msk [vmem:[#allocation3 + $0x38] sm:$0xff] %vm945, %v864
      %954 = vst.msk [vmem:[#allocation3 + $0x40] sm:$0xff] %vm945, %v866
      %955 = vst.msk [vmem:[#allocation3 + $0x48] sm:$0xff] %vm945, %v868
      %956 = vst.msk [vmem:[#allocation3 + $0x50] sm:$0xff] %vm945, %v870
      %957 = vst.msk [vmem:[#allocation3 + $0x58] sm:$0xff] %vm945, %v872
      %958 = vst.msk [vmem:[#allocation3 + $0x60] sm:$0xff] %vm945, %v874
      %959 = vst.msk [vmem:[#allocation3 + $0x68] sm:$0xff] %vm945, %v876
      %960 = vst.msk [vmem:[#allocation3 + $0x70] sm:$0xff] %vm945, %v878
      %961 = vst.msk [vmem:[#allocation3 + $0x78] sm:$0xff] %vm945, %v880
      %962 = vst.msk [vmem:[#allocation3 + $0x80] sm:$0xff] %vm945, %v882
      %963 = vst.msk [vmem:[#allocation3 + $0x88] sm:$0xff] %vm945, %v884
      %964 = vst.msk [vmem:[#allocation3 + $0x90] sm:$0xff] %vm945, %v886
      %965 = vst.msk [vmem:[#allocation3 + $0x98] sm:$0xff] %vm945, %v888
      %966 = vst.msk [vmem:[#allocation3 + $0xa0] sm:$0xff] %vm945, %v890
      %967 = vst.msk [vmem:[#allocation3 + $0xa8] sm:$0xff] %vm945, %v892
      %968 = vst.msk [vmem:[#allocation3 + $0xb0] sm:$0xff] %vm945, %v894
      %969 = vst.msk [vmem:[#allocation3 + $0xb8] sm:$0xff] %vm945, %v896
      %970 = vst.msk [vmem:[#allocation3 + $0xc0] sm:$0xff] %vm945, %v898
      %971 = vst.msk [vmem:[#allocation3 + $0xc8] sm:$0xff] %vm945, %v900
      %972 = vst.msk [vmem:[#allocation3 + $0xd0] sm:$0xff] %vm945, %v902
      %973 = vst.msk [vmem:[#allocation3 + $0xd8] sm:$0xff] %vm945, %v904
      %974 = vst.msk [vmem:[#allocation3 + $0xe0] sm:$0xff] %vm945, %v906
      %975 = vst.msk [vmem:[#allocation3 + $0xe8] sm:$0xff] %vm945, %v908
      %976 = vst.msk [vmem:[#allocation3 + $0xf0] sm:$0xff] %vm945, %v910
      %977 = vst.msk [vmem:[#allocation3 + $0xf8] sm:$0xff] %vm945, %v912
      %v979 = vrot.slane %v341, 1
      %v980 = vrot.slane %v342, 1
      %v981 = vsel %vm427, %v979, %v980
      %v982 = vrot.slane %v343, 1
      %v983 = vsel %vm427, %v980, %v982
      %984 = vrot.lane.b32.xlu0 %v435, 32
      %v985 = vpop.permute.xlu0 %984
      %986 = vrot.lane.b32.xlu0 %v437, 32
      %v987 = vpop.permute.xlu0 %986
      %988 = vrot.lane.b32.xlu0 %v440, 32
      %v989 = vpop.permute.xlu0 %988
      %990 = vrot.lane.b32.xlu0 %v442, 32
      %v991 = vpop.permute.xlu0 %990
      %992 = vrot.lane.b32.xlu0 %v445, 32
      %v993 = vpop.permute.xlu0 %992
      %994 = vrot.lane.b32.xlu0 %v447, 32
      %v995 = vpop.permute.xlu0 %994
      %996 = vrot.lane.b32.xlu0 %v450, 32
      %v997 = vpop.permute.xlu0 %996
      %998 = vrot.lane.b32.xlu0 %v452, 32
      %v999 = vpop.permute.xlu0 %998
      %1000 = vrot.lane.b32.xlu0 %v455, 32
      %v1001 = vpop.permute.xlu0 %1000
      %1002 = vrot.lane.b32.xlu0 %v457, 32
      %v1003 = vpop.permute.xlu0 %1002
      %1004 = vrot.lane.b32.xlu0 %v460, 32
      %v1005 = vpop.permute.xlu0 %1004
      %1006 = vrot.lane.b32.xlu0 %v462, 32
      %v1007 = vpop.permute.xlu0 %1006
      %1008 = vrot.lane.b32.xlu0 %v465, 32
      %v1009 = vpop.permute.xlu0 %1008
      %1010 = vrot.lane.b32.xlu0 %v467, 32
      %v1011 = vpop.permute.xlu0 %1010
      %1012 = vrot.lane.b32.xlu0 %v470, 32
      %v1013 = vpop.permute.xlu0 %1012
      %1014 = vrot.lane.b32.xlu0 %v472, 32
      %v1015 = vpop.permute.xlu0 %1014
      %1016 = vrot.lane.b32.xlu0 %v475, 32
      %v1017 = vpop.permute.xlu0 %1016
      %1018 = vrot.lane.b32.xlu0 %v477, 32
      %v1019 = vpop.permute.xlu0 %1018
      %1020 = vrot.lane.b32.xlu0 %v480, 32
      %v1021 = vpop.permute.xlu0 %1020
      %1022 = vrot.lane.b32.xlu0 %v482, 32
      %v1023 = vpop.permute.xlu0 %1022
      %1024 = vrot.lane.b32.xlu0 %v485, 32
      %v1025 = vpop.permute.xlu0 %1024
      %1026 = vrot.lane.b32.xlu0 %v487, 32
      %v1027 = vpop.permute.xlu0 %1026
      %1028 = vrot.lane.b32.xlu0 %v490, 32
      %v1029 = vpop.permute.xlu0 %1028
      %1030 = vrot.lane.b32.xlu0 %v492, 32
      %v1031 = vpop.permute.xlu0 %1030
      %1032 = vrot.lane.b32.xlu0 %v495, 32
      %v1033 = vpop.permute.xlu0 %1032
      %1034 = vrot.lane.b32.xlu0 %v497, 32
      %v1035 = vpop.permute.xlu0 %1034
      %1036 = vrot.lane.b32.xlu0 %v500, 32
      %v1037 = vpop.permute.xlu0 %1036
      %1038 = vrot.lane.b32.xlu0 %v502, 32
      %v1039 = vpop.permute.xlu0 %1038
      %1040 = vrot.lane.b32.xlu0 %v505, 32
      %v1041 = vpop.permute.xlu0 %1040
      %1042 = vrot.lane.b32.xlu0 %v507, 32
      %v1043 = vpop.permute.xlu0 %1042
      %1044 = vrot.lane.b32.xlu0 %v981, 32
      %v1045 = vpop.permute.xlu0 %1044
      %1046 = vrot.lane.b32.xlu0 %v983, 32
      %v1047 = vpop.permute.xlu0 %1046
      %vm1080 = vcmask 326912
      %1081 = vst.msk [vmem:[#allocation3] sm:$0xff] %vm1080, %v985
      %1082 = vst.msk [vmem:[#allocation3 + $0x8] sm:$0xff] %vm1080, %v987
      %1083 = vst.msk [vmem:[#allocation3 + $0x10] sm:$0xff] %vm1080, %v989
      %1084 = vst.msk [vmem:[#allocation3 + $0x18] sm:$0xff] %vm1080, %v991
      %1085 = vst.msk [vmem:[#allocation3 + $0x20] sm:$0xff] %vm1080, %v993
      %1086 = vst.msk [vmem:[#allocation3 + $0x28] sm:$0xff] %vm1080, %v995
      %1087 = vst.msk [vmem:[#allocation3 + $0x30] sm:$0xff] %vm1080, %v997
      %1088 = vst.msk [vmem:[#allocation3 + $0x38] sm:$0xff] %vm1080, %v999
      %1089 = vst.msk [vmem:[#allocation3 + $0x40] sm:$0xff] %vm1080, %v1001
      %1090 = vst.msk [vmem:[#allocation3 + $0x48] sm:$0xff] %vm1080, %v1003
      %1091 = vst.msk [vmem:[#allocation3 + $0x50] sm:$0xff] %vm1080, %v1005
      %1092 = vst.msk [vmem:[#allocation3 + $0x58] sm:$0xff] %vm1080, %v1007
      %1093 = vst.msk [vmem:[#allocation3 + $0x60] sm:$0xff] %vm1080, %v1009
      %1094 = vst.msk [vmem:[#allocation3 + $0x68] sm:$0xff] %vm1080, %v1011
      %1095 = vst.msk [vmem:[#allocation3 + $0x70] sm:$0xff] %vm1080, %v1013
      %1096 = vst.msk [vmem:[#allocation3 + $0x78] sm:$0xff] %vm1080, %v1015
      %1097 = vst.msk [vmem:[#allocation3 + $0x80] sm:$0xff] %vm1080, %v1017
      %1098 = vst.msk [vmem:[#allocation3 + $0x88] sm:$0xff] %vm1080, %v1019
      %1099 = vst.msk [vmem:[#allocation3 + $0x90] sm:$0xff] %vm1080, %v1021
      %1100 = vst.msk [vmem:[#allocation3 + $0x98] sm:$0xff] %vm1080, %v1023
      %1101 = vst.msk [vmem:[#allocation3 + $0xa0] sm:$0xff] %vm1080, %v1025
      %1102 = vst.msk [vmem:[#allocation3 + $0xa8] sm:$0xff] %vm1080, %v1027
      %1103 = vst.msk [vmem:[#allocation3 + $0xb0] sm:$0xff] %vm1080, %v1029
      %1104 = vst.msk [vmem:[#allocation3 + $0xb8] sm:$0xff] %vm1080, %v1031
      %1105 = vst.msk [vmem:[#allocation3 + $0xc0] sm:$0xff] %vm1080, %v1033
      %1106 = vst.msk [vmem:[#allocation3 + $0xc8] sm:$0xff] %vm1080, %v1035
      %1107 = vst.msk [vmem:[#allocation3 + $0xd0] sm:$0xff] %vm1080, %v1037
      %1108 = vst.msk [vmem:[#allocation3 + $0xd8] sm:$0xff] %vm1080, %v1039
      %1109 = vst.msk [vmem:[#allocation3 + $0xe0] sm:$0xff] %vm1080, %v1041
      %1110 = vst.msk [vmem:[#allocation3 + $0xe8] sm:$0xff] %vm1080, %v1043
      %1111 = vst.msk [vmem:[#allocation3 + $0xf0] sm:$0xff] %vm1080, %v1045
      %1112 = vst.msk [vmem:[#allocation3 + $0xf8] sm:$0xff] %vm1080, %v1047
      %v1113 = vrot.slane %v341, 2
      %v1114 = vrot.slane %v342, 2
      %v1115 = vsel %vm637, %v1113, %v1114
      %v1116 = vrot.slane %v343, 2
      %v1117 = vsel %vm637, %v1114, %v1116
      %1118 = vrot.lane.b32.xlu0 %v645, 40
      %v1119 = vpop.permute.xlu0 %1118
      %1120 = vrot.lane.b32.xlu0 %v647, 40
      %v1121 = vpop.permute.xlu0 %1120
      %1122 = vrot.lane.b32.xlu0 %v650, 40
      %v1123 = vpop.permute.xlu0 %1122
      %1124 = vrot.lane.b32.xlu0 %v652, 40
      %v1125 = vpop.permute.xlu0 %1124
      %1126 = vrot.lane.b32.xlu0 %v655, 40
      %v1127 = vpop.permute.xlu0 %1126
      %1128 = vrot.lane.b32.xlu0 %v657, 40
      %v1129 = vpop.permute.xlu0 %1128
      %1130 = vrot.lane.b32.xlu0 %v660, 40
      %v1131 = vpop.permute.xlu0 %1130
      %1132 = vrot.lane.b32.xlu0 %v662, 40
      %v1133 = vpop.permute.xlu0 %1132
      %1134 = vrot.lane.b32.xlu0 %v665, 40
      %v1135 = vpop.permute.xlu0 %1134
      %1136 = vrot.lane.b32.xlu0 %v667, 40
      %v1137 = vpop.permute.xlu0 %1136
      %1138 = vrot.lane.b32.xlu0 %v670, 40
      %v1139 = vpop.permute.xlu0 %1138
      %1140 = vrot.lane.b32.xlu0 %v672, 40
      %v1141 = vpop.permute.xlu0 %1140
      %1142 = vrot.lane.b32.xlu0 %v675, 40
      %v1143 = vpop.permute.xlu0 %1142
      %1144 = vrot.lane.b32.xlu0 %v677, 40
      %v1145 = vpop.permute.xlu0 %1144
      %1146 = vrot.lane.b32.xlu0 %v680, 40
      %v1147 = vpop.permute.xlu0 %1146
      %1148 = vrot.lane.b32.xlu0 %v682, 40
      %v1149 = vpop.permute.xlu0 %1148
      %1150 = vrot.lane.b32.xlu0 %v685, 40
      %v1151 = vpop.permute.xlu0 %1150
      %1152 = vrot.lane.b32.xlu0 %v687, 40
      %v1153 = vpop.permute.xlu0 %1152
      %1154 = vrot.lane.b32.xlu0 %v690, 40
      %v1155 = vpop.permute.xlu0 %1154
      %1156 = vrot.lane.b32.xlu0 %v692, 40
      %v1157 = vpop.permute.xlu0 %1156
      %1158 = vrot.lane.b32.xlu0 %v695, 40
      %v1159 = vpop.permute.xlu0 %1158
      %1160 = vrot.lane.b32.xlu0 %v697, 40
      %v1161 = vpop.permute.xlu0 %1160
      %1162 = vrot.lane.b32.xlu0 %v700, 40
      %v1163 = vpop.permute.xlu0 %1162
      %1164 = vrot.lane.b32.xlu0 %v702, 40
      %v1165 = vpop.permute.xlu0 %1164
      %1166 = vrot.lane.b32.xlu0 %v705, 40
      %v1167 = vpop.permute.xlu0 %1166
      %1168 = vrot.lane.b32.xlu0 %v707, 40
      %v1169 = vpop.permute.xlu0 %1168
      %1170 = vrot.lane.b32.xlu0 %v710, 40
      %v1171 = vpop.permute.xlu0 %1170
      %1172 = vrot.lane.b32.xlu0 %v712, 40
      %v1173 = vpop.permute.xlu0 %1172
      %1174 = vrot.lane.b32.xlu0 %v715, 40
      %v1175 = vpop.permute.xlu0 %1174
      %1176 = vrot.lane.b32.xlu0 %v717, 40
      %v1177 = vpop.permute.xlu0 %1176
      %1178 = vrot.lane.b32.xlu0 %v1115, 40
      %v1179 = vpop.permute.xlu0 %1178
      %1180 = vrot.lane.b32.xlu0 %v1117, 40
      %v1181 = vpop.permute.xlu0 %1180
      %vm1214 = vcmask 392512
      %1215 = vst.msk [vmem:[#allocation3] sm:$0xff] %vm1214, %v1119
      %1216 = vst.msk [vmem:[#allocation3 + $0x8] sm:$0xff] %vm1214, %v1121
      %1217 = vst.msk [vmem:[#allocation3 + $0x10] sm:$0xff] %vm1214, %v1123
      %1218 = vst.msk [vmem:[#allocation3 + $0x18] sm:$0xff] %vm1214, %v1125
      %1219 = vst.msk [vmem:[#allocation3 + $0x20] sm:$0xff] %vm1214, %v1127
      %1220 = vst.msk [vmem:[#allocation3 + $0x28] sm:$0xff] %vm1214, %v1129
      %1221 = vst.msk [vmem:[#allocation3 + $0x30] sm:$0xff] %vm1214, %v1131
      %1222 = vst.msk [vmem:[#allocation3 + $0x38] sm:$0xff] %vm1214, %v1133
      %1223 = vst.msk [vmem:[#allocation3 + $0x40] sm:$0xff] %vm1214, %v1135
      %1224 = vst.msk [vmem:[#allocation3 + $0x48] sm:$0xff] %vm1214, %v1137
      %1225 = vst.msk [vmem:[#allocation3 + $0x50] sm:$0xff] %vm1214, %v1139
      %1226 = vst.msk [vmem:[#allocation3 + $0x58] sm:$0xff] %vm1214, %v1141
      %1227 = vst.msk [vmem:[#allocation3 + $0x60] sm:$0xff] %vm1214, %v1143
      %1228 = vst.msk [vmem:[#allocation3 + $0x68] sm:$0xff] %vm1214, %v1145
      %1229 = vst.msk [vmem:[#allocation3 + $0x70] sm:$0xff] %vm1214, %v1147
      %1230 = vst.msk [vmem:[#allocation3 + $0x78] sm:$0xff] %vm1214, %v1149
      %1231 = vst.msk [vmem:[#allocation3 + $0x80] sm:$0xff] %vm1214, %v1151
      %1232 = vst.msk [vmem:[#allocation3 + $0x88] sm:$0xff] %vm1214, %v1153
      %1233 = vst.msk [vmem:[#allocation3 + $0x90] sm:$0xff] %vm1214, %v1155
      %1234 = vst.msk [vmem:[#allocation3 + $0x98] sm:$0xff] %vm1214, %v1157
      %1235 = vst.msk [vmem:[#allocation3 + $0xa0] sm:$0xff] %vm1214, %v1159
      %1236 = vst.msk [vmem:[#allocation3 + $0xa8] sm:$0xff] %vm1214, %v1161
      %1237 = vst.msk [vmem:[#allocation3 + $0xb0] sm:$0xff] %vm1214, %v1163
      %1238 = vst.msk [vmem:[#allocation3 + $0xb8] sm:$0xff] %vm1214, %v1165
      %1239 = vst.msk [vmem:[#allocation3 + $0xc0] sm:$0xff] %vm1214, %v1167
      %1240 = vst.msk [vmem:[#allocation3 + $0xc8] sm:$0xff] %vm1214, %v1169
      %1241 = vst.msk [vmem:[#allocation3 + $0xd0] sm:$0xff] %vm1214, %v1171
      %1242 = vst.msk [vmem:[#allocation3 + $0xd8] sm:$0xff] %vm1214, %v1173
      %1243 = vst.msk [vmem:[#allocation3 + $0xe0] sm:$0xff] %vm1214, %v1175
      %1244 = vst.msk [vmem:[#allocation3 + $0xe8] sm:$0xff] %vm1214, %v1177
      %1245 = vst.msk [vmem:[#allocation3 + $0xf0] sm:$0xff] %vm1214, %v1179
      %1246 = vst.msk [vmem:[#allocation3 + $0xf8] sm:$0xff] %vm1214, %v1181
      %1249 = vrot.lane.b32.xlu0 %v299, 48
      %v1250 = vpop.permute.xlu0 %1249
      %1251 = vrot.lane.b32.xlu0 %v300, 48
      %v1252 = vpop.permute.xlu0 %1251
      %1253 = vrot.lane.b32.xlu0 %v302, 48
      %v1254 = vpop.permute.xlu0 %1253
      %1255 = vrot.lane.b32.xlu0 %v303, 48
      %v1256 = vpop.permute.xlu0 %1255
      %1257 = vrot.lane.b32.xlu0 %v305, 48
      %v1258 = vpop.permute.xlu0 %1257
      %1259 = vrot.lane.b32.xlu0 %v306, 48
      %v1260 = vpop.permute.xlu0 %1259
      %1261 = vrot.lane.b32.xlu0 %v308, 48
      %v1262 = vpop.permute.xlu0 %1261
      %1263 = vrot.lane.b32.xlu0 %v309, 48
      %v1264 = vpop.permute.xlu0 %1263
      %1265 = vrot.lane.b32.xlu0 %v311, 48
      %v1266 = vpop.permute.xlu0 %1265
      %1267 = vrot.lane.b32.xlu0 %v312, 48
      %v1268 = vpop.permute.xlu0 %1267
      %1269 = vrot.lane.b32.xlu0 %v314, 48
      %v1270 = vpop.permute.xlu0 %1269
      %1271 = vrot.lane.b32.xlu0 %v315, 48
      %v1272 = vpop.permute.xlu0 %1271
      %1273 = vrot.lane.b32.xlu0 %v317, 48
      %v1274 = vpop.permute.xlu0 %1273
      %1275 = vrot.lane.b32.xlu0 %v318, 48
      %v1276 = vpop.permute.xlu0 %1275
      %1277 = vrot.lane.b32.xlu0 %v320, 48
      %v1278 = vpop.permute.xlu0 %1277
      %1279 = vrot.lane.b32.xlu0 %v321, 48
      %v1280 = vpop.permute.xlu0 %1279
      %1281 = vrot.lane.b32.xlu0 %v323, 48
      %v1282 = vpop.permute.xlu0 %1281
      %1283 = vrot.lane.b32.xlu0 %v324, 48
      %v1284 = vpop.permute.xlu0 %1283
      %1285 = vrot.lane.b32.xlu0 %v326, 48
      %v1286 = vpop.permute.xlu0 %1285
      %1287 = vrot.lane.b32.xlu0 %v327, 48
      %v1288 = vpop.permute.xlu0 %1287
      %1289 = vrot.lane.b32.xlu0 %v329, 48
      %v1290 = vpop.permute.xlu0 %1289
      %1291 = vrot.lane.b32.xlu0 %v330, 48
      %v1292 = vpop.permute.xlu0 %1291
      %1293 = vrot.lane.b32.xlu0 %v332, 48
      %v1294 = vpop.permute.xlu0 %1293
      %1295 = vrot.lane.b32.xlu0 %v333, 48
      %v1296 = vpop.permute.xlu0 %1295
      %1297 = vrot.lane.b32.xlu0 %v335, 48
      %v1298 = vpop.permute.xlu0 %1297
      %1299 = vrot.lane.b32.xlu0 %v336, 48
      %v1300 = vpop.permute.xlu0 %1299
      %1301 = vrot.lane.b32.xlu0 %v338, 48
      %v1302 = vpop.permute.xlu0 %1301
      %1303 = vrot.lane.b32.xlu0 %v339, 48
      %v1304 = vpop.permute.xlu0 %1303
      %1305 = vrot.lane.b32.xlu0 %v341, 48
      %v1306 = vpop.permute.xlu0 %1305
      %1307 = vrot.lane.b32.xlu0 %v342, 48
      %v1308 = vpop.permute.xlu0 %1307
      %1309 = vrot.lane.b32.xlu0 %v344, 48
      %v1310 = vpop.permute.xlu0 %1309
      %1311 = vrot.lane.b32.xlu0 %v345, 48
      %v1312 = vpop.permute.xlu0 %1311
      %vm1345 = vcmask 458112
      %1346 = vst.msk [vmem:[#allocation3] sm:$0xff] %vm1345, %v1250
      %1347 = vst.msk [vmem:[#allocation3 + $0x8] sm:$0xff] %vm1345, %v1252
      %1348 = vst.msk [vmem:[#allocation3 + $0x10] sm:$0xff] %vm1345, %v1254
      %1349 = vst.msk [vmem:[#allocation3 + $0x18] sm:$0xff] %vm1345, %v1256
      %1350 = vst.msk [vmem:[#allocation3 + $0x20] sm:$0xff] %vm1345, %v1258
      %1351 = vst.msk [vmem:[#allocation3 + $0x28] sm:$0xff] %vm1345, %v1260
      %1352 = vst.msk [vmem:[#allocation3 + $0x30] sm:$0xff] %vm1345, %v1262
      %1353 = vst.msk [vmem:[#allocation3 + $0x38] sm:$0xff] %vm1345, %v1264
      %1354 = vst.msk [vmem:[#allocation3 + $0x40] sm:$0xff] %vm1345, %v1266
      %1355 = vst.msk [vmem:[#allocation3 + $0x48] sm:$0xff] %vm1345, %v1268
      %1356 = vst.msk [vmem:[#allocation3 + $0x50] sm:$0xff] %vm1345, %v1270
      %1357 = vst.msk [vmem:[#allocation3 + $0x58] sm:$0xff] %vm1345, %v1272
      %1358 = vst.msk [vmem:[#allocation3 + $0x60] sm:$0xff] %vm1345, %v1274
      %1359 = vst.msk [vmem:[#allocation3 + $0x68] sm:$0xff] %vm1345, %v1276
      %1360 = vst.msk [vmem:[#allocation3 + $0x70] sm:$0xff] %vm1345, %v1278
      %1361 = vst.msk [vmem:[#allocation3 + $0x78] sm:$0xff] %vm1345, %v1280
      %1362 = vst.msk [vmem:[#allocation3 + $0x80] sm:$0xff] %vm1345, %v1282
      %1363 = vst.msk [vmem:[#allocation3 + $0x88] sm:$0xff] %vm1345, %v1284
      %1364 = vst.msk [vmem:[#allocation3 + $0x90] sm:$0xff] %vm1345, %v1286
      %1365 = vst.msk [vmem:[#allocation3 + $0x98] sm:$0xff] %vm1345, %v1288
      %1366 = vst.msk [vmem:[#allocation3 + $0xa0] sm:$0xff] %vm1345, %v1290
      %1367 = vst.msk [vmem:[#allocation3 + $0xa8] sm:$0xff] %vm1345, %v1292
      %1368 = vst.msk [vmem:[#allocation3 + $0xb0] sm:$0xff] %vm1345, %v1294
      %1369 = vst.msk [vmem:[#allocation3 + $0xb8] sm:$0xff] %vm1345, %v1296
      %1370 = vst.msk [vmem:[#allocation3 + $0xc0] sm:$0xff] %vm1345, %v1298
      %1371 = vst.msk [vmem:[#allocation3 + $0xc8] sm:$0xff] %vm1345, %v1300
      %1372 = vst.msk [vmem:[#allocation3 + $0xd0] sm:$0xff] %vm1345, %v1302
      %1373 = vst.msk [vmem:[#allocation3 + $0xd8] sm:$0xff] %vm1345, %v1304
      %1374 = vst.msk [vmem:[#allocation3 + $0xe0] sm:$0xff] %vm1345, %v1306
      %1375 = vst.msk [vmem:[#allocation3 + $0xe8] sm:$0xff] %vm1345, %v1308
      %1376 = vst.msk [vmem:[#allocation3 + $0xf0] sm:$0xff] %vm1345, %v1310
      %1377 = vst.msk [vmem:[#allocation3 + $0xf8] sm:$0xff] %vm1345, %v1312
      %v1379 = vrot.slane %v344, 1
      %v1380 = vrot.slane %v345, 1
      %v1381 = vsel %vm427, %v1379, %v1380
      %v1382 = vrot.slane %v346, 1
      %v1383 = vsel %vm427, %v1380, %v1382
      %1384 = vrot.lane.b32.xlu0 %v440, 56
      %v1385 = vpop.permute.xlu0 %1384
      %1386 = vrot.lane.b32.xlu0 %v442, 56
      %v1387 = vpop.permute.xlu0 %1386
      %1388 = vrot.lane.b32.xlu0 %v445, 56
      %v1389 = vpop.permute.xlu0 %1388
      %1390 = vrot.lane.b32.xlu0 %v447, 56
      %v1391 = vpop.permute.xlu0 %1390
      %1392 = vrot.lane.b32.xlu0 %v450, 56
      %v1393 = vpop.permute.xlu0 %1392
      %1394 = vrot.lane.b32.xlu0 %v452, 56
      %v1395 = vpop.permute.xlu0 %1394
      %1396 = vrot.lane.b32.xlu0 %v455, 56
      %v1397 = vpop.permute.xlu0 %1396
      %1398 = vrot.lane.b32.xlu0 %v457, 56
      %v1399 = vpop.permute.xlu0 %1398
      %1400 = vrot.lane.b32.xlu0 %v460, 56
      %v1401 = vpop.permute.xlu0 %1400
      %1402 = vrot.lane.b32.xlu0 %v462, 56
      %v1403 = vpop.permute.xlu0 %1402
      %1404 = vrot.lane.b32.xlu0 %v465, 56
      %v1405 = vpop.permute.xlu0 %1404
      %1406 = vrot.lane.b32.xlu0 %v467, 56
      %v1407 = vpop.permute.xlu0 %1406
      %1408 = vrot.lane.b32.xlu0 %v470, 56
      %v1409 = vpop.permute.xlu0 %1408
      %1410 = vrot.lane.b32.xlu0 %v472, 56
      %v1411 = vpop.permute.xlu0 %1410
      %1412 = vrot.lane.b32.xlu0 %v475, 56
      %v1413 = vpop.permute.xlu0 %1412
      %1414 = vrot.lane.b32.xlu0 %v477, 56
      %v1415 = vpop.permute.xlu0 %1414
      %1416 = vrot.lane.b32.xlu0 %v480, 56
      %v1417 = vpop.permute.xlu0 %1416
      %1418 = vrot.lane.b32.xlu0 %v482, 56
      %v1419 = vpop.permute.xlu0 %1418
      %1420 = vrot.lane.b32.xlu0 %v485, 56
      %v1421 = vpop.permute.xlu0 %1420
      %1422 = vrot.lane.b32.xlu0 %v487, 56
      %v1423 = vpop.permute.xlu0 %1422
      %1424 = vrot.lane.b32.xlu0 %v490, 56
      %v1425 = vpop.permute.xlu0 %1424
      %1426 = vrot.lane.b32.xlu0 %v492, 56
      %v1427 = vpop.permute.xlu0 %1426
      %1428 = vrot.lane.b32.xlu0 %v495, 56
      %v1429 = vpop.permute.xlu0 %1428
      %1430 = vrot.lane.b32.xlu0 %v497, 56
      %v1431 = vpop.permute.xlu0 %1430
      %1432 = vrot.lane.b32.xlu0 %v500, 56
      %v1433 = vpop.permute.xlu0 %1432
      %1434 = vrot.lane.b32.xlu0 %v502, 56
      %v1435 = vpop.permute.xlu0 %1434
      %1436 = vrot.lane.b32.xlu0 %v505, 56
      %v1437 = vpop.permute.xlu0 %1436
      %1438 = vrot.lane.b32.xlu0 %v507, 56
      %v1439 = vpop.permute.xlu0 %1438
      %1440 = vrot.lane.b32.xlu0 %v981, 56
      %v1441 = vpop.permute.xlu0 %1440
      %1442 = vrot.lane.b32.xlu0 %v983, 56
      %v1443 = vpop.permute.xlu0 %1442
      %1444 = vrot.lane.b32.xlu0 %v1381, 56
      %v1445 = vpop.permute.xlu0 %1444
      %1446 = vrot.lane.b32.xlu0 %v1383, 56
      %v1447 = vpop.permute.xlu0 %1446
      %vm1480 = vcmask 523712
      %1481 = vst.msk [vmem:[#allocation3] sm:$0xff] %vm1480, %v1385
      %1482 = vst.msk [vmem:[#allocation3 + $0x8] sm:$0xff] %vm1480, %v1387
      %1483 = vst.msk [vmem:[#allocation3 + $0x10] sm:$0xff] %vm1480, %v1389
      %1484 = vst.msk [vmem:[#allocation3 + $0x18] sm:$0xff] %vm1480, %v1391
      %1485 = vst.msk [vmem:[#allocation3 + $0x20] sm:$0xff] %vm1480, %v1393
      %1486 = vst.msk [vmem:[#allocation3 + $0x28] sm:$0xff] %vm1480, %v1395
      %1487 = vst.msk [vmem:[#allocation3 + $0x30] sm:$0xff] %vm1480, %v1397
      %1488 = vst.msk [vmem:[#allocation3 + $0x38] sm:$0xff] %vm1480, %v1399
      %1489 = vst.msk [vmem:[#allocation3 + $0x40] sm:$0xff] %vm1480, %v1401
      %1490 = vst.msk [vmem:[#allocation3 + $0x48] sm:$0xff] %vm1480, %v1403
      %1491 = vst.msk [vmem:[#allocation3 + $0x50] sm:$0xff] %vm1480, %v1405
      %1492 = vst.msk [vmem:[#allocation3 + $0x58] sm:$0xff] %vm1480, %v1407
      %1493 = vst.msk [vmem:[#allocation3 + $0x60] sm:$0xff] %vm1480, %v1409
      %1494 = vst.msk [vmem:[#allocation3 + $0x68] sm:$0xff] %vm1480, %v1411
      %1495 = vst.msk [vmem:[#allocation3 + $0x70] sm:$0xff] %vm1480, %v1413
      %1496 = vst.msk [vmem:[#allocation3 + $0x78] sm:$0xff] %vm1480, %v1415
      %1497 = vst.msk [vmem:[#allocation3 + $0x80] sm:$0xff] %vm1480, %v1417
      %1498 = vst.msk [vmem:[#allocation3 + $0x88] sm:$0xff] %vm1480, %v1419
      %1499 = vst.msk [vmem:[#allocation3 + $0x90] sm:$0xff] %vm1480, %v1421
      %1500 = vst.msk [vmem:[#allocation3 + $0x98] sm:$0xff] %vm1480, %v1423
      %1501 = vst.msk [vmem:[#allocation3 + $0xa0] sm:$0xff] %vm1480, %v1425
      %1502 = vst.msk [vmem:[#allocation3 + $0xa8] sm:$0xff] %vm1480, %v1427
      %1503 = vst.msk [vmem:[#allocation3 + $0xb0] sm:$0xff] %vm1480, %v1429
      %1504 = vst.msk [vmem:[#allocation3 + $0xb8] sm:$0xff] %vm1480, %v1431
      %1505 = vst.msk [vmem:[#allocation3 + $0xc0] sm:$0xff] %vm1480, %v1433
      %1506 = vst.msk [vmem:[#allocation3 + $0xc8] sm:$0xff] %vm1480, %v1435
      %1507 = vst.msk [vmem:[#allocation3 + $0xd0] sm:$0xff] %vm1480, %v1437
      %1508 = vst.msk [vmem:[#allocation3 + $0xd8] sm:$0xff] %vm1480, %v1439
      %1509 = vst.msk [vmem:[#allocation3 + $0xe0] sm:$0xff] %vm1480, %v1441
      %1510 = vst.msk [vmem:[#allocation3 + $0xe8] sm:$0xff] %vm1480, %v1443
      %1511 = vst.msk [vmem:[#allocation3 + $0xf0] sm:$0xff] %vm1480, %v1445
      %1512 = vst.msk [vmem:[#allocation3 + $0xf8] sm:$0xff] %vm1480, %v1447
      %v1513 = vrot.slane %v344, 2
      %v1514 = vrot.slane %v345, 2
      %v1515 = vsel %vm637, %v1513, %v1514
      %v1516 = vrot.slane %v346, 2
      %v1517 = vsel %vm637, %v1514, %v1516
      %1518 = vrot.lane.b32.xlu0 %v650, 64
      %v1519 = vpop.permute.xlu0 %1518
      %1520 = vrot.lane.b32.xlu0 %v652, 64
      %v1521 = vpop.permute.xlu0 %1520
      %1522 = vrot.lane.b32.xlu0 %v655, 64
      %v1523 = vpop.permute.xlu0 %1522
      %1524 = vrot.lane.b32.xlu0 %v657, 64
      %v1525 = vpop.permute.xlu0 %1524
      %1526 = vrot.lane.b32.xlu0 %v660, 64
      %v1527 = vpop.permute.xlu0 %1526
      %1528 = vrot.lane.b32.xlu0 %v662, 64
      %v1529 = vpop.permute.xlu0 %1528
      %1530 = vrot.lane.b32.xlu0 %v665, 64
      %v1531 = vpop.permute.xlu0 %1530
      %1532 = vrot.lane.b32.xlu0 %v667, 64
      %v1533 = vpop.permute.xlu0 %1532
      %1534 = vrot.lane.b32.xlu0 %v670, 64
      %v1535 = vpop.permute.xlu0 %1534
      %1536 = vrot.lane.b32.xlu0 %v672, 64
      %v1537 = vpop.permute.xlu0 %1536
      %1538 = vrot.lane.b32.xlu0 %v675, 64
      %v1539 = vpop.permute.xlu0 %1538
      %1540 = vrot.lane.b32.xlu0 %v677, 64
      %v1541 = vpop.permute.xlu0 %1540
      %1542 = vrot.lane.b32.xlu0 %v680, 64
      %v1543 = vpop.permute.xlu0 %1542
      %1544 = vrot.lane.b32.xlu0 %v682, 64
      %v1545 = vpop.permute.xlu0 %1544
      %1546 = vrot.lane.b32.xlu0 %v685, 64
      %v1547 = vpop.permute.xlu0 %1546
      %1548 = vrot.lane.b32.xlu0 %v687, 64
      %v1549 = vpop.permute.xlu0 %1548
      %1550 = vrot.lane.b32.xlu0 %v690, 64
      %v1551 = vpop.permute.xlu0 %1550
      %1552 = vrot.lane.b32.xlu0 %v692, 64
      %v1553 = vpop.permute.xlu0 %1552
      %1554 = vrot.lane.b32.xlu0 %v695, 64
      %v1555 = vpop.permute.xlu0 %1554
      %1556 = vrot.lane.b32.xlu0 %v697, 64
      %v1557 = vpop.permute.xlu0 %1556
      %1558 = vrot.lane.b32.xlu0 %v700, 64
      %v1559 = vpop.permute.xlu0 %1558
      %1560 = vrot.lane.b32.xlu0 %v702, 64
      %v1561 = vpop.permute.xlu0 %1560
      %1562 = vrot.lane.b32.xlu0 %v705, 64
      %v1563 = vpop.permute.xlu0 %1562
      %1564 = vrot.lane.b32.xlu0 %v707, 64
      %v1565 = vpop.permute.xlu0 %1564
      %1566 = vrot.lane.b32.xlu0 %v710, 64
      %v1567 = vpop.permute.xlu0 %1566
      %1568 = vrot.lane.b32.xlu0 %v712, 64
      %v1569 = vpop.permute.xlu0 %1568
      %1570 = vrot.lane.b32.xlu0 %v715, 64
      %v1571 = vpop.permute.xlu0 %1570
      %1572 = vrot.lane.b32.xlu0 %v717, 64
      %v1573 = vpop.permute.xlu0 %1572
      %1574 = vrot.lane.b32.xlu0 %v1115, 64
      %v1575 = vpop.permute.xlu0 %1574
      %1576 = vrot.lane.b32.xlu0 %v1117, 64
      %v1577 = vpop.permute.xlu0 %1576
      %1578 = vrot.lane.b32.xlu0 %v1515, 64
      %v1579 = vpop.permute.xlu0 %1578
      %1580 = vrot.lane.b32.xlu0 %v1517, 64
      %v1581 = vpop.permute.xlu0 %1580
      %vm1614 = vcmask 589312
      %1615 = vst.msk [vmem:[#allocation3] sm:$0xff] %vm1614, %v1519
      %1616 = vst.msk [vmem:[#allocation3 + $0x8] sm:$0xff] %vm1614, %v1521
      %1617 = vst.msk [vmem:[#allocation3 + $0x10] sm:$0xff] %vm1614, %v1523
      %1618 = vst.msk [vmem:[#allocation3 + $0x18] sm:$0xff] %vm1614, %v1525
      %1619 = vst.msk [vmem:[#allocation3 + $0x20] sm:$0xff] %vm1614, %v1527
      %1620 = vst.msk [vmem:[#allocation3 + $0x28] sm:$0xff] %vm1614, %v1529
      %1621 = vst.msk [vmem:[#allocation3 + $0x30] sm:$0xff] %vm1614, %v1531
      %1622 = vst.msk [vmem:[#allocation3 + $0x38] sm:$0xff] %vm1614, %v1533
      %1623 = vst.msk [vmem:[#allocation3 + $0x40] sm:$0xff] %vm1614, %v1535
      %1624 = vst.msk [vmem:[#allocation3 + $0x48] sm:$0xff] %vm1614, %v1537
      %1625 = vst.msk [vmem:[#allocation3 + $0x50] sm:$0xff] %vm1614, %v1539
      %1626 = vst.msk [vmem:[#allocation3 + $0x58] sm:$0xff] %vm1614, %v1541
      %1627 = vst.msk [vmem:[#allocation3 + $0x60] sm:$0xff] %vm1614, %v1543
      %1628 = vst.msk [vmem:[#allocation3 + $0x68] sm:$0xff] %vm1614, %v1545
      %1629 = vst.msk [vmem:[#allocation3 + $0x70] sm:$0xff] %vm1614, %v1547
      %1630 = vst.msk [vmem:[#allocation3 + $0x78] sm:$0xff] %vm1614, %v1549
      %1631 = vst.msk [vmem:[#allocation3 + $0x80] sm:$0xff] %vm1614, %v1551
      %1632 = vst.msk [vmem:[#allocation3 + $0x88] sm:$0xff] %vm1614, %v1553
      %1633 = vst.msk [vmem:[#allocation3 + $0x90] sm:$0xff] %vm1614, %v1555
      %1634 = vst.msk [vmem:[#allocation3 + $0x98] sm:$0xff] %vm1614, %v1557
      %1635 = vst.msk [vmem:[#allocation3 + $0xa0] sm:$0xff] %vm1614, %v1559
      %1636 = vst.msk [vmem:[#allocation3 + $0xa8] sm:$0xff] %vm1614, %v1561
      %1637 = vst.msk [vmem:[#allocation3 + $0xb0] sm:$0xff] %vm1614, %v1563
      %1638 = vst.msk [vmem:[#allocation3 + $0xb8] sm:$0xff] %vm1614, %v1565
      %1639 = vst.msk [vmem:[#allocation3 + $0xc0] sm:$0xff] %vm1614, %v1567
      %1640 = vst.msk [vmem:[#allocation3 + $0xc8] sm:$0xff] %vm1614, %v1569
      %1641 = vst.msk [vmem:[#allocation3 + $0xd0] sm:$0xff] %vm1614, %v1571
      %1642 = vst.msk [vmem:[#allocation3 + $0xd8] sm:$0xff] %vm1614, %v1573
      %1643 = vst.msk [vmem:[#allocation3 + $0xe0] sm:$0xff] %vm1614, %v1575
      %1644 = vst.msk [vmem:[#allocation3 + $0xe8] sm:$0xff] %vm1614, %v1577
      %1645 = vst.msk [vmem:[#allocation3 + $0xf0] sm:$0xff] %vm1614, %v1579
      %1646 = vst.msk [vmem:[#allocation3 + $0xf8] sm:$0xff] %vm1614, %v1581
      %v1647 = vld [vmem:[#allocation3] sm:$0xff]
      %v1648 = vld [vmem:[#allocation3 + $0x8] sm:$0xff]
      %v1649 = vld [vmem:[#allocation3 + $0x10] sm:$0xff]
      %v1650 = vld [vmem:[#allocation3 + $0x18] sm:$0xff]
      %v1651 = vld [vmem:[#allocation3 + $0x20] sm:$0xff]
      %v1652 = vld [vmem:[#allocation3 + $0x28] sm:$0xff]
      %v1653 = vld [vmem:[#allocation3 + $0x30] sm:$0xff]
      %v1654 = vld [vmem:[#allocation3 + $0x38] sm:$0xff]
      %v1655 = vld [vmem:[#allocation3 + $0x40] sm:$0xff]
      %v1656 = vld [vmem:[#allocation3 + $0x48] sm:$0xff]
      %v1657 = vld [vmem:[#allocation3 + $0x50] sm:$0xff]
      %v1658 = vld [vmem:[#allocation3 + $0x58] sm:$0xff]
      %v1659 = vld [vmem:[#allocation3 + $0x60] sm:$0xff]
      %v1660 = vld [vmem:[#allocation3 + $0x68] sm:$0xff]
      %v1661 = vld [vmem:[#allocation3 + $0x70] sm:$0xff]
      %v1662 = vld [vmem:[#allocation3 + $0x78] sm:$0xff]
      %v1663 = vld [vmem:[#allocation3 + $0x80] sm:$0xff]
      %v1664 = vld [vmem:[#allocation3 + $0x88] sm:$0xff]
      %v1665 = vld [vmem:[#allocation3 + $0x90] sm:$0xff]
      %v1666 = vld [vmem:[#allocation3 + $0x98] sm:$0xff]
      %v1667 = vld [vmem:[#allocation3 + $0xa0] sm:$0xff]
      %v1668 = vld [vmem:[#allocation3 + $0xa8] sm:$0xff]
      %v1669 = vld [vmem:[#allocation3 + $0xb0] sm:$0xff]
      %v1670 = vld [vmem:[#allocation3 + $0xb8] sm:$0xff]
      %v1671 = vld [vmem:[#allocation3 + $0xc0] sm:$0xff]
      %v1672 = vld [vmem:[#allocation3 + $0xc8] sm:$0xff]
      %v1673 = vld [vmem:[#allocation3 + $0xd0] sm:$0xff]
      %v1674 = vld [vmem:[#allocation3 + $0xd8] sm:$0xff]
      %v1675 = vld [vmem:[#allocation3 + $0xe0] sm:$0xff]
      %v1676 = vld [vmem:[#allocation3 + $0xe8] sm:$0xff]
      %v1677 = vld [vmem:[#allocation3 + $0xf0] sm:$0xff]
      %v1678 = vld [vmem:[#allocation3 + $0xf8] sm:$0xff]
      %v1679 = vld [vmem:[%s1] sm:$0xff]
      %v1680 = vld [vmem:[%s1 + $0x8] sm:$0xff]
      %v1681 = vld [vmem:[%s1 + $0x10] sm:$0xff]
      %v1682 = vld [vmem:[%s1 + $0x18] sm:$0xff]
      %v1683 = vld [vmem:[%s1 + $0x20] sm:$0xff]
      %v1684 = vld [vmem:[%s1 + $0x28] sm:$0xff]
      %v1685 = vld [vmem:[%s1 + $0x30] sm:$0xff]
      %v1686 = vld [vmem:[%s1 + $0x38] sm:$0xff]
      %v1687 = vld [vmem:[%s1 + $0x40] sm:$0xff]
      %vm1688 = vcmask 588800
      %v1690 = vsel %vm1688, %v1647, 0
      %v1693 = vsel %vm1688, %v1648, 0
      %v1696 = vsel %vm1688, %v1649, 0
      %v1699 = vsel %vm1688, %v1650, 0
      %v1702 = vsel %vm1688, %v1651, 0
      %v1705 = vsel %vm1688, %v1652, 0
      %v1708 = vsel %vm1688, %v1653, 0
      %v1711 = vsel %vm1688, %v1654, 0
      %v1714 = vsel %vm1688, %v1655, 0
      %v1717 = vsel %vm1688, %v1656, 0
      %v1720 = vsel %vm1688, %v1657, 0
      %v1723 = vsel %vm1688, %v1658, 0
      %v1726 = vsel %vm1688, %v1659, 0
      %v1729 = vsel %vm1688, %v1660, 0
      %v1732 = vsel %vm1688, %v1661, 0
      %v1735 = vsel %vm1688, %v1662, 0
      %v1738 = vsel %vm1688, %v1663, 0
      %v1741 = vsel %vm1688, %v1664, 0
      %v1744 = vsel %vm1688, %v1665, 0
      %v1747 = vsel %vm1688, %v1666, 0
      %v1750 = vsel %vm1688, %v1667, 0
      %v1753 = vsel %vm1688, %v1668, 0
      %v1756 = vsel %vm1688, %v1669, 0
      %v1759 = vsel %vm1688, %v1670, 0
      %v1762 = vsel %vm1688, %v1671, 0
      %v1765 = vsel %vm1688, %v1672, 0
      %v1768 = vsel %vm1688, %v1673, 0
      %v1771 = vsel %vm1688, %v1674, 0
      %v1774 = vsel %vm1688, %v1675, 0
      %v1777 = vsel %vm1688, %v1676, 0
      %v1780 = vsel %vm1688, %v1677, 0
      %v1783 = vsel %vm1688, %v1678, 0
      %1785 = vmatpush.msra.mxu0 0.0
      %1786 = vmatpush.msra.mxu0 0.0
      %1787 = vmatpush.msra.mxu0 0.0
      %1788 = vmatpush.msra.mxu0 0.0
      %1789 = vmatpush.msra.mxu0 0.0
      %1790 = vmatpush.msra.mxu0 0.0
      %1791 = vmatpush.msra.mxu0 0.0
      %1792 = vmatpush.msra.mxu0 %v1687
      %1793 = vmatpush.msra.mxu0 %v1686
      %1794 = vmatpush.msra.mxu0 %v1685
      %1795 = vmatpush.msra.mxu0 %v1684
      %1796 = vmatpush.msra.mxu0 %v1683
      %1797 = vmatpush.msra.mxu0 %v1682
      %1798 = vmatpush.msra.mxu0 %v1681
      %1799 = vmatpush.msra.mxu0 %v1680
      %1800 = vmatpush.msra.mxu0 %v1679
      %1801 = vmatmul.f32.gmra.mxu0 %v1690
      %v1802 = vpop.f32.mrf.mxu0
      %v1803 = vadd.f32 0.0, %v1802
      %1804 = vmatmul.f32.gmra.mxu0 %v1693
      %v1805 = vpop.f32.mrf.mxu0
      %v1806 = vadd.f32 0.0, %v1805
      %1807 = vmatmul.f32.gmra.mxu0 %v1696
      %v1808 = vpop.f32.mrf.mxu0
      %v1809 = vadd.f32 0.0, %v1808
      %1810 = vmatmul.f32.gmra.mxu0 %v1699
      %v1811 = vpop.f32.mrf.mxu0
      %v1812 = vadd.f32 0.0, %v1811
      %1813 = vmatmul.f32.gmra.mxu0 %v1702
      %v1814 = vpop.f32.mrf.mxu0
      %v1815 = vadd.f32 0.0, %v1814
      %1816 = vmatmul.f32.gmra.mxu0 %v1705
      %v1817 = vpop.f32.mrf.mxu0
      %v1818 = vadd.f32 0.0, %v1817
      %1819 = vmatmul.f32.gmra.mxu0 %v1708
      %v1820 = vpop.f32.mrf.mxu0
      %v1821 = vadd.f32 0.0, %v1820
      %1822 = vmatmul.f32.gmra.mxu0 %v1711
      %v1823 = vpop.f32.mrf.mxu0
      %v1824 = vadd.f32 0.0, %v1823
      %1825 = vmatmul.f32.gmra.mxu0 %v1714
      %v1826 = vpop.f32.mrf.mxu0
      %v1827 = vadd.f32 0.0, %v1826
      %1828 = vmatmul.f32.gmra.mxu0 %v1717
      %v1829 = vpop.f32.mrf.mxu0
      %v1830 = vadd.f32 0.0, %v1829
      %1831 = vmatmul.f32.gmra.mxu0 %v1720
      %v1832 = vpop.f32.mrf.mxu0
      %v1833 = vadd.f32 0.0, %v1832
      %1834 = vmatmul.f32.gmra.mxu0 %v1723
      %v1835 = vpop.f32.mrf.mxu0
      %v1836 = vadd.f32 0.0, %v1835
      %1837 = vmatmul.f32.gmra.mxu0 %v1726
      %v1838 = vpop.f32.mrf.mxu0
      %v1839 = vadd.f32 0.0, %v1838
      %1840 = vmatmul.f32.gmra.mxu0 %v1729
      %v1841 = vpop.f32.mrf.mxu0
      %v1842 = vadd.f32 0.0, %v1841
      %1843 = vmatmul.f32.gmra.mxu0 %v1732
      %v1844 = vpop.f32.mrf.mxu0
      %v1845 = vadd.f32 0.0, %v1844
      %1846 = vmatmul.f32.gmra.mxu0 %v1735
      %v1847 = vpop.f32.mrf.mxu0
      %v1848 = vadd.f32 0.0, %v1847
      %1849 = vmatmul.f32.gmra.mxu0 %v1738
      %v1850 = vpop.f32.mrf.mxu0
      %v1851 = vadd.f32 0.0, %v1850
      %1852 = vmatmul.f32.gmra.mxu0 %v1741
      %v1853 = vpop.f32.mrf.mxu0
      %v1854 = vadd.f32 0.0, %v1853
      %1855 = vmatmul.f32.gmra.mxu0 %v1744
      %v1856 = vpop.f32.mrf.mxu0
      %v1857 = vadd.f32 0.0, %v1856
      %1858 = vmatmul.f32.gmra.mxu0 %v1747
      %v1859 = vpop.f32.mrf.mxu0
      %v1860 = vadd.f32 0.0, %v1859
      %1861 = vmatmul.f32.gmra.mxu0 %v1750
      %v1862 = vpop.f32.mrf.mxu0
      %v1863 = vadd.f32 0.0, %v1862
      %1864 = vmatmul.f32.gmra.mxu0 %v1753
      %v1865 = vpop.f32.mrf.mxu0
      %v1866 = vadd.f32 0.0, %v1865
      %1867 = vmatmul.f32.gmra.mxu0 %v1756
      %v1868 = vpop.f32.mrf.mxu0
      %v1869 = vadd.f32 0.0, %v1868
      %1870 = vmatmul.f32.gmra.mxu0 %v1759
      %v1871 = vpop.f32.mrf.mxu0
      %v1872 = vadd.f32 0.0, %v1871
      %1873 = vmatmul.f32.gmra.mxu0 %v1762
      %v1874 = vpop.f32.mrf.mxu0
      %v1875 = vadd.f32 0.0, %v1874
      %1876 = vmatmul.f32.gmra.mxu0 %v1765
      %v1877 = vpop.f32.mrf.mxu0
      %v1878 = vadd.f32 0.0, %v1877
      %1879 = vmatmul.f32.gmra.mxu0 %v1768
      %v1880 = vpop.f32.mrf.mxu0
      %v1881 = vadd.f32 0.0, %v1880
      %1882 = vmatmul.f32.gmra.mxu0 %v1771
      %v1883 = vpop.f32.mrf.mxu0
      %v1884 = vadd.f32 0.0, %v1883
      %1885 = vmatmul.f32.gmra.mxu0 %v1774
      %v1886 = vpop.f32.mrf.mxu0
      %v1887 = vadd.f32 0.0, %v1886
      %1888 = vmatmul.f32.gmra.mxu0 %v1777
      %v1889 = vpop.f32.mrf.mxu0
      %v1890 = vadd.f32 0.0, %v1889
      %1891 = vmatmul.f32.gmra.mxu0 %v1780
      %v1892 = vpop.f32.mrf.mxu0
      %v1893 = vadd.f32 0.0, %v1892
      %1894 = vmatmul.f32.gmra.mxu0 %v1783
      %v1895 = vpop.f32.mrf.mxu0
      %v1896 = vadd.f32 0.0, %v1895
      %1897 = vdwg.mxu0
      %v1898 = vsel %vm214, %v1803, 0.0
      %v1899 = vsel %vm214, %v1806, 0.0
      %v1900 = vadd.f32 %v1898, %v1899
      %v1901 = vsel %vm214, %v1809, 0.0
      %v1902 = vadd.f32 %v1900, %v1901
      %v1903 = vsel %vm214, %v1812, 0.0
      %v1904 = vadd.f32 %v1902, %v1903
      %v1905 = vsel %vm214, %v1815, 0.0
      %v1906 = vadd.f32 %v1904, %v1905
      %v1907 = vsel %vm214, %v1818, 0.0
      %v1908 = vadd.f32 %v1906, %v1907
      %v1909 = vsel %vm214, %v1821, 0.0
      %v1910 = vadd.f32 %v1908, %v1909
      %v1911 = vsel %vm214, %v1824, 0.0
      %v1912 = vadd.f32 %v1910, %v1911
      %v1913 = vsel %vm214, %v1827, 0.0
      %v1914 = vadd.f32 %v1912, %v1913
      %v1915 = vsel %vm214, %v1830, 0.0
      %v1916 = vadd.f32 %v1914, %v1915
      %v1917 = vsel %vm214, %v1833, 0.0
      %v1918 = vadd.f32 %v1916, %v1917
      %v1919 = vsel %vm214, %v1836, 0.0
      %v1920 = vadd.f32 %v1918, %v1919
      %v1921 = vsel %vm214, %v1839, 0.0
      %v1922 = vadd.f32 %v1920, %v1921
      %v1923 = vsel %vm214, %v1842, 0.0
      %v1924 = vadd.f32 %v1922, %v1923
      %v1925 = vsel %vm214, %v1845, 0.0
      %v1926 = vadd.f32 %v1924, %v1925
      %v1927 = vsel %vm214, %v1848, 0.0
      %v1928 = vadd.f32 %v1926, %v1927
      %v1929 = vsel %vm214, %v1851, 0.0
      %v1930 = vadd.f32 %v1928, %v1929
      %v1931 = vsel %vm214, %v1854, 0.0
      %v1932 = vadd.f32 %v1930, %v1931
      %v1933 = vsel %vm214, %v1857, 0.0
      %v1934 = vadd.f32 %v1932, %v1933
      %v1935 = vsel %vm214, %v1860, 0.0
      %v1936 = vadd.f32 %v1934, %v1935
      %v1937 = vsel %vm214, %v1863, 0.0
      %v1938 = vadd.f32 %v1936, %v1937
      %v1939 = vsel %vm214, %v1866, 0.0
      %v1940 = vadd.f32 %v1938, %v1939
      %v1941 = vsel %vm214, %v1869, 0.0
      %v1942 = vadd.f32 %v1940, %v1941
      %v1943 = vsel %vm214, %v1872, 0.0
      %v1944 = vadd.f32 %v1942, %v1943
      %v1945 = vsel %vm214, %v1875, 0.0
      %v1946 = vadd.f32 %v1944, %v1945
      %v1947 = vsel %vm214, %v1878, 0.0
      %v1948 = vadd.f32 %v1946, %v1947
      %v1949 = vsel %vm214, %v1881, 0.0
      %v1950 = vadd.f32 %v1948, %v1949
      %v1951 = vsel %vm214, %v1884, 0.0
      %v1952 = vadd.f32 %v1950, %v1951
      %v1953 = vsel %vm214, %v1887, 0.0
      %v1954 = vadd.f32 %v1952, %v1953
      %v1955 = vsel %vm214, %v1890, 0.0
      %v1956 = vadd.f32 %v1954, %v1955
      %v1957 = vsel %vm214, %v1893, 0.0
      %v1958 = vadd.f32 %v1956, %v1957
      %v1959 = vsel %vm214, %v1896, 0.0
      %v1960 = vadd.f32 %v1958, %v1959
      %v1961 = vrot.slane %v1960, 4
      %v1962 = vadd.f32 %v1960, %v1961
      %v1963 = vrot.slane %v1962, 2
      %v1964 = vadd.f32 %v1962, %v1963
      %v1965 = vrot.slane %v1964, 1
      %v1966 = vadd.f32 %v1964, %v1965
      %1967 = vst.msk [vmem:[%s181] sm:$0x1] %vm223, %v1966
      %v1968 = vmul.f32 %v1803, %v1803
      %v1969 = vmul.f32 %v1806, %v1806
      %v1970 = vmul.f32 %v1809, %v1809
      %v1971 = vmul.f32 %v1812, %v1812
      %v1972 = vmul.f32 %v1815, %v1815
      %v1973 = vmul.f32 %v1818, %v1818
      %v1974 = vmul.f32 %v1821, %v1821
      %v1975 = vmul.f32 %v1824, %v1824
      %v1976 = vmul.f32 %v1827, %v1827
      %v1977 = vmul.f32 %v1830, %v1830
      %v1978 = vmul.f32 %v1833, %v1833
      %v1979 = vmul.f32 %v1836, %v1836
      %v1980 = vmul.f32 %v1839, %v1839
      %v1981 = vmul.f32 %v1842, %v1842
      %v1982 = vmul.f32 %v1845, %v1845
      %v1983 = vmul.f32 %v1848, %v1848
      %v1984 = vmul.f32 %v1851, %v1851
      %v1985 = vmul.f32 %v1854, %v1854
      %v1986 = vmul.f32 %v1857, %v1857
      %v1987 = vmul.f32 %v1860, %v1860
      %v1988 = vmul.f32 %v1863, %v1863
      %v1989 = vmul.f32 %v1866, %v1866
      %v1990 = vmul.f32 %v1869, %v1869
      %v1991 = vmul.f32 %v1872, %v1872
      %v1992 = vmul.f32 %v1875, %v1875
      %v1993 = vmul.f32 %v1878, %v1878
      %v1994 = vmul.f32 %v1881, %v1881
      %v1995 = vmul.f32 %v1884, %v1884
      %v1996 = vmul.f32 %v1887, %v1887
      %v1997 = vmul.f32 %v1890, %v1890
      %v1998 = vmul.f32 %v1893, %v1893
      %v1999 = vmul.f32 %v1896, %v1896
      %v2000 = vsel %vm214, %v1968, 0.0
      %v2001 = vsel %vm214, %v1969, 0.0
      %v2002 = vadd.f32 %v2000, %v2001
      %v2003 = vsel %vm214, %v1970, 0.0
      %v2004 = vadd.f32 %v2002, %v2003
      %v2005 = vsel %vm214, %v1971, 0.0
      %v2006 = vadd.f32 %v2004, %v2005
      %v2007 = vsel %vm214, %v1972, 0.0
      %v2008 = vadd.f32 %v2006, %v2007
      %v2009 = vsel %vm214, %v1973, 0.0
      %v2010 = vadd.f32 %v2008, %v2009
      %v2011 = vsel %vm214, %v1974, 0.0
      %v2012 = vadd.f32 %v2010, %v2011
      %v2013 = vsel %vm214, %v1975, 0.0
      %v2014 = vadd.f32 %v2012, %v2013
      %v2015 = vsel %vm214, %v1976, 0.0
      %v2016 = vadd.f32 %v2014, %v2015
      %v2017 = vsel %vm214, %v1977, 0.0
      %v2018 = vadd.f32 %v2016, %v2017
      %v2019 = vsel %vm214, %v1978, 0.0
      %v2020 = vadd.f32 %v2018, %v2019
      %v2021 = vsel %vm214, %v1979, 0.0
      %v2022 = vadd.f32 %v2020, %v2021
      %v2023 = vsel %vm214, %v1980, 0.0
      %v2024 = vadd.f32 %v2022, %v2023
      %v2025 = vsel %vm214, %v1981, 0.0
      %v2026 = vadd.f32 %v2024, %v2025
      %v2027 = vsel %vm214, %v1982, 0.0
      %v2028 = vadd.f32 %v2026, %v2027
      %v2029 = vsel %vm214, %v1983, 0.0
      %v2030 = vadd.f32 %v2028, %v2029
      %v2031 = vsel %vm214, %v1984, 0.0
      %v2032 = vadd.f32 %v2030, %v2031
      %v2033 = vsel %vm214, %v1985, 0.0
      %v2034 = vadd.f32 %v2032, %v2033
      %v2035 = vsel %vm214, %v1986, 0.0
      %v2036 = vadd.f32 %v2034, %v2035
      %v2037 = vsel %vm214, %v1987, 0.0
      %v2038 = vadd.f32 %v2036, %v2037
      %v2039 = vsel %vm214, %v1988, 0.0
      %v2040 = vadd.f32 %v2038, %v2039
      %v2041 = vsel %vm214, %v1989, 0.0
      %v2042 = vadd.f32 %v2040, %v2041
      %v2043 = vsel %vm214, %v1990, 0.0
      %v2044 = vadd.f32 %v2042, %v2043
      %v2045 = vsel %vm214, %v1991, 0.0
      %v2046 = vadd.f32 %v2044, %v2045
      %v2047 = vsel %vm214, %v1992, 0.0
      %v2048 = vadd.f32 %v2046, %v2047
      %v2049 = vsel %vm214, %v1993, 0.0
      %v2050 = vadd.f32 %v2048, %v2049
      %v2051 = vsel %vm214, %v1994, 0.0
      %v2052 = vadd.f32 %v2050, %v2051
      %v2053 = vsel %vm214, %v1995, 0.0
      %v2054 = vadd.f32 %v2052, %v2053
      %v2055 = vsel %vm214, %v1996, 0.0
      %v2056 = vadd.f32 %v2054, %v2055
      %v2057 = vsel %vm214, %v1997, 0.0
      %v2058 = vadd.f32 %v2056, %v2057
      %v2059 = vsel %vm214, %v1998, 0.0
      %v2060 = vadd.f32 %v2058, %v2059
      %v2061 = vsel %vm214, %v1999, 0.0
      %v2062 = vadd.f32 %v2060, %v2061
      %v2063 = vrot.slane %v2062, 4
      %v2064 = vadd.f32 %v2062, %v2063
      %v2065 = vrot.slane %v2064, 2
      %v2066 = vadd.f32 %v2064, %v2065
      %v2067 = vrot.slane %v2066, 1
      %v2068 = vadd.f32 %v2066, %v2067
      %2069 = vst.msk [vmem:[%s181 + $0x1] sm:$0x1] %vm223, %v2068
      %2070 = vst.msk [vmem:[%s177] sm:$0xff] %vm214, %v1803
      %2071 = vst.msk [vmem:[%s177 + $0x8] sm:$0xff] %vm214, %v1806
      %2072 = vst.msk [vmem:[%s177 + $0x10] sm:$0xff] %vm214, %v1809
      %2073 = vst.msk [vmem:[%s177 + $0x18] sm:$0xff] %vm214, %v1812
      %2074 = vst.msk [vmem:[%s177 + $0x20] sm:$0xff] %vm214, %v1815
      %2075 = vst.msk [vmem:[%s177 + $0x28] sm:$0xff] %vm214, %v1818
      %2076 = vst.msk [vmem:[%s177 + $0x30] sm:$0xff] %vm214, %v1821
      %2077 = vst.msk [vmem:[%s177 + $0x38] sm:$0xff] %vm214, %v1824
      %2078 = vst.msk [vmem:[%s177 + $0x40] sm:$0xff] %vm214, %v1827
      %2079 = vst.msk [vmem:[%s177 + $0x48] sm:$0xff] %vm214, %v1830
      %2080 = vst.msk [vmem:[%s177 + $0x50] sm:$0xff] %vm214, %v1833
      %2081 = vst.msk [vmem:[%s177 + $0x58] sm:$0xff] %vm214, %v1836
      %2082 = vst.msk [vmem:[%s177 + $0x60] sm:$0xff] %vm214, %v1839
      %2083 = vst.msk [vmem:[%s177 + $0x68] sm:$0xff] %vm214, %v1842
      %2084 = vst.msk [vmem:[%s177 + $0x70] sm:$0xff] %vm214, %v1845
      %2085 = vst.msk [vmem:[%s177 + $0x78] sm:$0xff] %vm214, %v1848
      %2086 = vst.msk [vmem:[%s177 + $0x80] sm:$0xff] %vm214, %v1851
      %2087 = vst.msk [vmem:[%s177 + $0x88] sm:$0xff] %vm214, %v1854
      %2088 = vst.msk [vmem:[%s177 + $0x90] sm:$0xff] %vm214, %v1857
      %2089 = vst.msk [vmem:[%s177 + $0x98] sm:$0xff] %vm214, %v1860
      %2090 = vst.msk [vmem:[%s177 + $0xa0] sm:$0xff] %vm214, %v1863
      %2091 = vst.msk [vmem:[%s177 + $0xa8] sm:$0xff] %vm214, %v1866
      %2092 = vst.msk [vmem:[%s177 + $0xb0] sm:$0xff] %vm214, %v1869
      %2093 = vst.msk [vmem:[%s177 + $0xb8] sm:$0xff] %vm214, %v1872
      %2094 = vst.msk [vmem:[%s177 + $0xc0] sm:$0xff] %vm214, %v1875
      %2095 = vst.msk [vmem:[%s177 + $0xc8] sm:$0xff] %vm214, %v1878
      %2096 = vst.msk [vmem:[%s177 + $0xd0] sm:$0xff] %vm214, %v1881
      %2097 = vst.msk [vmem:[%s177 + $0xd8] sm:$0xff] %vm214, %v1884
      %2098 = vst.msk [vmem:[%s177 + $0xe0] sm:$0xff] %vm214, %v1887
      %2099 = vst.msk [vmem:[%s177 + $0xe8] sm:$0xff] %vm214, %v1890
      %2100 = vst.msk [vmem:[%s177 + $0xf0] sm:$0xff] %vm214, %v1893
      %2101 = vst.msk [vmem:[%s177 + $0xf8] sm:$0xff] %vm214, %v1896
      %p2102 = scmp.lt.s32.totalorder %s15, 1
      %s2103 = scalar_select %p2102, %s15, 1
      %s2104 = smul.addr %s2103, 32
      %s2105 = smul.addr %s2104, 8
      %s2106 = scalar_lea.vmem %s2, %s2105
      %p2107 = scmp.lt.s32.totalorder %s15, 1
      %s2108 = scalar_select %p2107, %s15, 1
      %s2109 = smul.addr %s2108, 2
      %s2110 = scalar_lea.vmem %s3, %s2109
      // Predicated region
      $region29: #{basic_block.3} parent=27 // pred_check
        %p2111 = pneg %p80
      $region30: #{basic_block.3} parent=27 // pred_check_branch
        %2113 = sbr.rel (%p2111) target = $region32
      $region31: #{basic_block.3} parent=27 // pred_region
        _
      $region32: #{basic_block.3} parent=27 // pred_fallthru
        _
      // Predicated region
      $region33: #{basic_block.3} parent=27 // pred_check
        %p2114 = pneg %p106
      $region34: #{basic_block.3} parent=27 // pred_check_branch
        %2116 = sbr.rel (%p2114) target = $region36
      $region35: #{basic_block.3} parent=27 // pred_region
        _
      $region36: #{basic_block.3} parent=27 // pred_fallthru
        _
    $region28: #{basic_block.3} parent=5 // pred_fallthru
      _
    %p2117 = scmp.le.s32.totalorder 2, %s10
    // Predicated region
    $region37: #{basic_block.3} parent=5 // pred_check
      %p2118 = pneg %p2117
    $region38: #{basic_block.3} parent=5 // pred_check_branch
      %2120 = sbr.rel (%p2118) target = $region40
    $region39: #{basic_block.3} parent=5 // pred_region
      %s2121 = ssub.s32 %s10, 2
      // Predicated region
      $region41: #{basic_block.3} parent=39 // pred_check
        %p2122 = pneg %p86
      $region42: #{basic_block.3} parent=39 // pred_check_branch
        %2124 = sbr.rel (%p2122) target = $region44
      $region43: #{basic_block.3} parent=39 // pred_region
        %p2125 = scmp.lt.s32.totalorder %s16, 1
        %s2126 = scalar_select %p2125, %s16, 1
        %s2127 = smul.addr %s2126, 32
        %s2128 = smul.addr %s2127, 8
        %s2129 = scalar_lea.vmem %s2, %s2128
      $region44: #{basic_block.3} parent=39 // pred_fallthru
        _
      // Predicated region
      $region45: #{basic_block.3} parent=39 // pred_check
        %p2130 = pneg %p112
      $region46: #{basic_block.3} parent=39 // pred_check_branch
        %2132 = sbr.rel (%p2130) target = $region48
      $region47: #{basic_block.3} parent=39 // pred_region
        %p2133 = scmp.lt.s32.totalorder %s16, 1
        %s2134 = scalar_select %p2133, %s16, 1
        %s2135 = smul.addr %s2134, 2
        %s2136 = scalar_lea.vmem %s3, %s2135
      $region48: #{basic_block.3} parent=39 // pred_fallthru
        _
    $region40: #{basic_block.3} parent=5 // pred_fallthru
      _
  $region6: #{basic_block.3} parent=0 // loop_footer
    %s14 = sadd.s32 1, %s10
  $region7: #{basic_block.3} parent=0 // loop_footer_branch
    %9 = sbr.rel target = $region3
  $region8: #{basic_block.3} parent=0 // loop_exit
    _

// kernel: basic_block.4
$region0: #{basic_block.4}
  #allocation0 [shape = 'u32[]', space=smem, size = 0x4, offset = 0x4, fixed_abs, tag = 'smem constant byte address 0x4 - core index']
  #allocation1 [shape = 'u32[72,128]{1,0:T(1,128)}', space=vmem, size = 0x9000, scoped, tag = 'internal scratch']
  #allocation2 [shape = 'f32[18,18,8]{2,1,0:T(8,128)}', space=vmem, size = 0x36000, scoped, tag = 'scratch operand']
  #allocation3 [shape = 'f32[256,72]{1,0:T(8,128)}', space=vmem, size = 0x20000, scoped, tag = 'scratch operand']
  %s0 = inlined_call_operand.vmem [shape: f32[2,16,16,8], index: 0, kind: input, shape index: {}]
  %s1 = inlined_call_operand.vmem [shape: f32[1,8], index: 1, kind: input, shape index: {}]
  %s2 = inlined_call_operand.vmem [shape: f32[1,8], index: 2, kind: input, shape index: {}]
  %s3 = inlined_call_operand.vmem [shape: f32[72,8], index: 3, kind: input, shape index: {}]
  %s4 = inlined_call_operand.vmem [shape: f32[2,16,16,8], index: 4, kind: output, shape index: {0}]
  %s5 = inlined_call_operand.vmem [shape: f32[2,2,8], index: 5, kind: output, shape index: {1}]
  %6 = xla_tuple %s4, %s5
  %s7 = sld [smem:[#allocation0]]
  $region57: #{basic_block.4} parent=0
    _
  %s9 = ssub.s32 1, %s7
  %s10 = scalar_select 0, %s9, %s7
  loop: start=0, step=1, limit=4
  $region2: #{basic_block.4} parent=0 // loop_pre_header
    _
  $region3: #{basic_block.4} parent=0 // loop_header
    %s12 = sphi 0, %s16
    %p13 = scmp.ge.s32.totalorder %s12, 4
    %s22 = sphi 0, %s24
    %s25 = sphi 0, %s22
    %s26 = sphi 0, %s25
    %s42 = sphi 0, %s26
    %s46 = sphi 0, %s46
    %s48 = sphi 0, %s46
    %s49 = sphi 0, %s48
    %s63 = sphi 0, %s49
    %s67 = sphi 0, %s67
    %s69 = sphi 0, %s67
    %s70 = sphi 0, %s69
    %s84 = sphi 0, %s70
    %s88 = sphi 0, %s88
    %s90 = sphi 0, %s88
    %s91 = sphi 0, %s90
    %s105 = sphi 0, %s91
    %s111 = sphi 0, %s113
    %s114 = sphi 0, %s111
    %s115 = sphi 0, %s114
    %s131 = sphi 0, %s115
    %s137 = sphi 0, %s139
    %s140 = sphi 0, %s137
    %s141 = sphi 0, %s140
    %s157 = sphi 0, %s141
  $region4: #{basic_block.4} parent=0 // loop_header_branch
    %15 = sbr.rel (%p13) target = $region8
  $region5: #{basic_block.4} parent=0 // loop_body
    %s17 = ssub.s32 %s12, 1
    %s18 = ssub.s32 %s12, 2
    %s19 = sadd.s32 %s12, 1
    %s20 = ssub.s32 %s12, %s19
    %p21 = scmp.eq.s32.totalorder %s20, 0
    %s23 = sadd.s32 %s22, 1
    %s24 = scalar_select %p21, %s22, %s23
    %p27 = pneg %p21
    %p28 = scmp.eq.s32.totalorder %s12, 1
    %p29 = por %p27, %p28
    %p30 = scmp.ne.s32.totalorder %s22, %s25
    %p31 = scmp.eq.s32.totalorder %s12, 0
    %p32 = por %p30, %p31
    %p33 = scmp.ne.s32.totalorder %s22, %s25
    %p34 = scmp.eq.s32.totalorder %s17, 1
    %p35 = por %p33, %p34
    %p36 = scmp.ne.s32.totalorder %s25, %s26
    %p37 = scmp.eq.s32.totalorder %s17, 0
    %p38 = por %p36, %p37
    %p39 = scmp.ne.s32.totalorder %s25, %s26
    %p40 = scmp.eq.s32.totalorder %s18, 1
    %p41 = por %p39, %p40
    %p43 = scmp.ne.s32.totalorder %s26, %s42
    %p44 = scmp.eq.s32.totalorder %s18, 0
    %p45 = por %p43, %p44
    %s47 = sadd.s32 %s46, 1
    %p50 = scmp.eq.s32.totalorder %s12, 1
    %p51 = scmp.ne.s32.totalorder %s46, %s48
    %p52 = scmp.eq.s32.totalorder %s12, 0
    %p53 = por %p51, %p52
    %p54 = scmp.ne.s32.totalorder %s46, %s48
    %p55 = scmp.eq.s32.totalorder %s17, 1
    %p56 = por %p54, %p55
    %p57 = scmp.ne.s32.totalorder %s48, %s49
    %p58 = scmp.eq.s32.totalorder %s17, 0
    %p59 = por %p57, %p58
    %p60 = scmp.ne.s32.totalorder %s48, %s49
    %p61 = scmp.eq.s32.totalorder %s18, 1
    %p62 = por %p60, %p61
    %p64 = scmp.ne.s32.totalorder %s49, %s63
    %p65 = scmp.eq.s32.totalorder %s18, 0
    %p66 = por %p64, %p65
    %s68 = sadd.s32 %s67, 1
    %p71 = scmp.eq.s32.totalorder %s12, 1
    %p72 = scmp.ne.s32.totalorder %s67, %s69
    %p73 = scmp.eq.s32.totalorder %s12, 0
    %p74 = por %p72, %p73
    %p75 = scmp.ne.s32.totalorder %s67, %s69
    %p76 = scmp.eq.s32.totalorder %s17, 1
    %p77 = por %p75, %p76
    %p78 = scmp.ne.s32.totalorder %s69, %s70
    %p79 = scmp.eq.s32.totalorder %s17, 0
    %p80 = por %p78, %p79
    %p81 = scmp.ne.s32.totalorder %s69, %s70
    %p82 = scmp.eq.s32.totalorder %s18, 1
    %p83 = por %p81, %p82
    %p85 = scmp.ne.s32.totalorder %s70, %s84
    %p86 = scmp.eq.s32.totalorder %s18, 0
    %p87 = por %p85, %p86
    %s89 = sadd.s32 %s88, 1
    %p92 = scmp.eq.s32.totalorder %s12, 1
    %p93 = scmp.ne.s32.totalorder %s88, %s90
    %p94 = scmp.eq.s32.totalorder %s12, 0
    %p95 = por %p93, %p94
    %p96 = scmp.ne.s32.totalorder %s88, %s90
    %p97 = scmp.eq.s32.totalorder %s17, 1
    %p98 = por %p96, %p97
    %p99 = scmp.ne.s32.totalorder %s90, %s91
    %p100 = scmp.eq.s32.totalorder %s17, 0
    %p101 = por %p99, %p100
    %p102 = scmp.ne.s32.totalorder %s90, %s91
    %p103 = scmp.eq.s32.totalorder %s18, 1
    %p104 = por %p102, %p103
    %p106 = scmp.ne.s32.totalorder %s91, %s105
    %p107 = scmp.eq.s32.totalorder %s18, 0
    %p108 = por %p106, %p107
    %s109 = ssub.s32 %s12, %s19
    %p110 = scmp.eq.s32.totalorder %s109, 0
    %s112 = sadd.s32 %s111, 1
    %s113 = scalar_select %p110, %s111, %s112
    %p116 = pneg %p110
    %p117 = scmp.eq.s32.totalorder %s12, 1
    %p118 = por %p116, %p117
    %p119 = scmp.ne.s32.totalorder %s111, %s114
    %p120 = scmp.eq.s32.totalorder %s12, 0
    %p121 = por %p119, %p120
    %p122 = scmp.ne.s32.totalorder %s111, %s114
    %p123 = scmp.eq.s32.totalorder %s17, 1
    %p124 = por %p122, %p123
    %p125 = scmp.ne.s32.totalorder %s114, %s115
    %p126 = scmp.eq.s32.totalorder %s17, 0
    %p127 = por %p125, %p126
    %p128 = scmp.ne.s32.totalorder %s114, %s115
    %p129 = scmp.eq.s32.totalorder %s18, 1
    %p130 = por %p128, %p129
    %p132 = scmp.ne.s32.totalorder %s115, %s131
    %p133 = scmp.eq.s32.totalorder %s18, 0
    %p134 = por %p132, %p133
    %s135 = ssub.s32 %s12, %s19
    %p136 = scmp.eq.s32.totalorder %s135, 0
    %s138 = sadd.s32 %s137, 1
    %s139 = scalar_select %p136, %s137, %s138
    %p142 = pneg %p136
    %p143 = scmp.eq.s32.totalorder %s12, 1
    %p144 = por %p142, %p143
    %p145 = scmp.ne.s32.totalorder %s137, %s140
    %p146 = scmp.eq.s32.totalorder %s12, 0
    %p147 = por %p145, %p146
    %p148 = scmp.ne.s32.totalorder %s137, %s140
    %p149 = scmp.eq.s32.totalorder %s17, 1
    %p150 = por %p148, %p149
    %p151 = scmp.ne.s32.totalorder %s140, %s141
    %p152 = scmp.eq.s32.totalorder %s17, 0
    %p153 = por %p151, %p152
    %p154 = scmp.ne.s32.totalorder %s140, %s141
    %p155 = scmp.eq.s32.totalorder %s18, 1
    %p156 = por %p154, %p155
    %p158 = scmp.ne.s32.totalorder %s141, %s157
    %p159 = scmp.eq.s32.totalorder %s18, 0
    %p160 = por %p158, %p159
    %p161 = scmp.le.s32.totalorder 1, %s12
    %p162 = scmp.lt.s32.totalorder %s12, 3
    %p163 = pnand %p161, %p162
    %p164 = pneg %p163
    // Predicated region
    $region9: #{basic_block.4} parent=5 // pred_check
      _
    $region10: #{basic_block.4} parent=5 // pred_check_branch
      %166 = sbr.rel (%p163) target = $region12
    $region11: #{basic_block.4} parent=5 // pred_region
      %s167 = ssub.s32 %s12, 1
      // Predicated region
      $region13: #{basic_block.4} parent=11 // pred_check
        %p168 = pneg %p59
      $region14: #{basic_block.4} parent=11 // pred_check_branch
        %170 = sbr.rel (%p168) target = $region16
      $region15: #{basic_block.4} parent=11 // pred_region
        _
      $region16: #{basic_block.4} parent=11 // pred_fallthru
        _
      // Predicated region
      $region17: #{basic_block.4} parent=11 // pred_check
        %p171 = pneg %p80
      $region18: #{basic_block.4} parent=11 // pred_check_branch
        %173 = sbr.rel (%p171) target = $region20
      $region19: #{basic_block.4} parent=11 // pred_region
        _
      $region20: #{basic_block.4} parent=11 // pred_fallthru
        _
      // Predicated region
      $region21: #{basic_block.4} parent=11 // pred_check
        %p174 = pneg %p101
      $region22: #{basic_block.4} parent=11 // pred_check_branch
        %176 = sbr.rel (%p174) target = $region24
      $region23: #{basic_block.4} parent=11 // pred_region
        _
      $region24: #{basic_block.4} parent=11 // pred_fallthru
        _
    $region12: #{basic_block.4} parent=5 // pred_fallthru
      _
    %p177 = scmp.lt.s32.totalorder %s12, 2
    // Predicated region
    $region25: #{basic_block.4} parent=5 // pred_check
      %p178 = pneg %p177
    $region26: #{basic_block.4} parent=5 // pred_check_branch
      %180 = sbr.rel (%p178) target = $region28
    $region27: #{basic_block.4} parent=5 // pred_region
      // Predicated region
      $region29: #{basic_block.4} parent=27 // pred_check
        %p181 = pneg %p32
      $region30: #{basic_block.4} parent=27 // pred_check_branch
        %183 = sbr.rel (%p181) target = $region32
      $region31: #{basic_block.4} parent=27 // pred_region
        %p184 = scmp.lt.s32.totalorder %s12, 1
        %s185 = scalar_select %p184, %s12, 1
        %s186 = smul.addr %s185, 32
        %s187 = smul.addr %s186, 8
        %s188 = scalar_lea.vmem %s0, %s187
      $region32: #{basic_block.4} parent=27 // pred_fallthru
        _
    $region28: #{basic_block.4} parent=5 // pred_fallthru
      _
    %p189 = scmp.le.s32.totalorder 1, %s12
    %p190 = scmp.lt.s32.totalorder %s12, 3
    %p191 = pnand %p189, %p190
    %p192 = pneg %p191
    // Predicated region
    $region33: #{basic_block.4} parent=5 // pred_check
      _
    $region34: #{basic_block.4} parent=5 // pred_check_branch
      %194 = sbr.rel (%p191) target = $region36
    $region35: #{basic_block.4} parent=5 // pred_region
      %s195 = ssub.s32 %s12, 1
      %p196 = scmp.lt.s32.totalorder %s17, 1
      %s197 = scalar_select %p196, %s17, 1
      %s198 = smul.addr %s197, 32
      %s199 = smul.addr %s198, 8
      %s200 = scalar_lea.vmem %s0, %s199
      %p201 = pneg %p38
      %p202 = pneg %p35
      %p203 = pneg %p59
      %p204 = pneg %p56
      %p205 = pneg %p80
      %p206 = pneg %p77
      %p207 = pneg %p101
      %p208 = pneg %p98
      %p209 = pneg %p127
      %p210 = pneg %p124
      %p211 = scmp.lt.s32.totalorder %s17, 1
      %s212 = scalar_select %p211, %s17, 1
      %s213 = smul.addr %s212, 32
      %s214 = smul.addr %s213, 8
      %s215 = scalar_lea.vmem %s4, %s214
      %p216 = pneg %p153
      %p217 = pneg %p150
      %p218 = scmp.lt.s32.totalorder %s17, 1
      %s219 = scalar_select %p218, %s17, 1
      %s220 = smul.addr %s219, 2
      %s221 = scalar_lea.vmem %s5, %s220
      %p222 = scmp.lt.s32.totalorder %s17, 1
      %s223 = scalar_select %p222, %s17, 1
      %s224 = smul.addr %s223, 32
      %s225 = smul.addr %s224, 8
      %s226 = scalar_lea.vmem %s0, %s225
      %p227 = scmp.lt.s32.totalorder %s17, 1
      %s228 = scalar_select %p227, %s17, 1
      %s229 = smul.addr %s228, 32
      %s230 = smul.addr %s229, 8
      %s231 = scalar_lea.vmem %s4, %s230
      %p232 = scmp.lt.s32.totalorder %s17, 1
      %s233 = scalar_select %p232, %s17, 1
      %s234 = smul.addr %s233, 2
      %s235 = scalar_lea.vmem %s5, %s234
      %v236 = vld [vmem:[%s226] sm:$0xff]
      %v237 = vld [vmem:[%s226 + $0x8] sm:$0xff]
      %v238 = vld [vmem:[%s226 + $0x10] sm:$0xff]
      %v239 = vld [vmem:[%s226 + $0x18] sm:$0xff]
      %v240 = vld [vmem:[%s226 + $0x20] sm:$0xff]
      %v241 = vld [vmem:[%s226 + $0x28] sm:$0xff]
      %v242 = vld [vmem:[%s226 + $0x30] sm:$0xff]
      %v243 = vld [vmem:[%s226 + $0x38] sm:$0xff]
      %v244 = vld [vmem:[%s226 + $0x40] sm:$0xff]
      %v245 = vld [vmem:[%s226 + $0x48] sm:$0xff]
      %v246 = vld [vmem:[%s226 + $0x50] sm:$0xff]
      %v247 = vld [vmem:[%s226 + $0x58] sm:$0xff]
      %v248 = vld [vmem:[%s226 + $0x60] sm:$0xff]
      %v249 = vld [vmem:[%s226 + $0x68] sm:$0xff]
      %v250 = vld [vmem:[%s226 + $0x70] sm:$0xff]
      %v251 = vld [vmem:[%s226 + $0x78] sm:$0xff]
      %v252 = vld [vmem:[%s226 + $0x80] sm:$0xff]
      %v253 = vld [vmem:[%s226 + $0x88] sm:$0xff]
      %v254 = vld [vmem:[%s226 + $0x90] sm:$0xff]
      %v255 = vld [vmem:[%s226 + $0x98] sm:$0xff]
      %v256 = vld [vmem:[%s226 + $0xa0] sm:$0xff]
      %v257 = vld [vmem:[%s226 + $0xa8] sm:$0xff]
      %v258 = vld [vmem:[%s226 + $0xb0] sm:$0xff]
      %v259 = vld [vmem:[%s226 + $0xb8] sm:$0xff]
      %v260 = vld [vmem:[%s226 + $0xc0] sm:$0xff]
      %v261 = vld [vmem:[%s226 + $0xc8] sm:$0xff]
      %v262 = vld [vmem:[%s226 + $0xd0] sm:$0xff]
      %v263 = vld [vmem:[%s226 + $0xd8] sm:$0xff]
      %v264 = vld [vmem:[%s226 + $0xe0] sm:$0xff]
      %v265 = vld [vmem:[%s226 + $0xe8] sm:$0xff]
      %v266 = vld [vmem:[%s226 + $0xf0] sm:$0xff]
      %v267 = vld [vmem:[%s226 + $0xf8] sm:$0xff]
      %v268 = vld [vmem:[%s1] sm:$0x1]
      %v270 = vperm.slane %v268, 0
      %v272 = vmul.f32 %v236, %v270
      %v273 = vmul.f32 %v237, %v270
      %v274 = vmul.f32 %v238, %v270
      %v275 = vmul.f32 %v239, %v270
      %v276 = vmul.f32 %v240, %v270
      %v277 = vmul.f32 %v241, %v270
      %v278 = vmul.f32 %v242, %v270
      %v279 = vmul.f32 %v243, %v270
      %v280 = vmul.f32 %v244, %v270
      %v281 = vmul.f32 %v245, %v270
      %v282 = vmul.f32 %v246, %v270
      %v283 = vmul.f32 %v247, %v270
      %v284 = vmul.f32 %v248, %v270
      %v285 = vmul.f32 %v249, %v270
      %v286 = vmul.f32 %v250, %v270
      %v287 = vmul.f32 %v251, %v270
      %v288 = vmul.f32 %v252, %v270
      %v289 = vmul.f32 %v253, %v270
      %v290 = vmul.f32 %v254, %v270
      %v291 = vmul.f32 %v255, %v270
      %v292 = vmul.f32 %v256, %v270
      %v293 = vmul.f32 %v257, %v270
      %v294 = vmul.f32 %v258, %v270
      %v295 = vmul.f32 %v259, %v270
      %v296 = vmul.f32 %v260, %v270
      %v297 = vmul.f32 %v261, %v270
      %v298 = vmul.f32 %v262, %v270
      %v299 = vmul.f32 %v263, %v270
      %v300 = vmul.f32 %v264, %v270
      %v301 = vmul.f32 %v265, %v270
      %v302 = vmul.f32 %v266, %v270
      %v303 = vmul.f32 %v267, %v270
      %v304 = vld [vmem:[%s2] sm:$0x1]
      %v306 = vperm.slane %v304, 0
      %v308 = vadd.f32 %v272, %v306
      %v309 = vadd.f32 %v273, %v306
      %v310 = vadd.f32 %v274, %v306
      %v311 = vadd.f32 %v275, %v306
      %v312 = vadd.f32 %v276, %v306
      %v313 = vadd.f32 %v277, %v306
      %v314 = vadd.f32 %v278, %v306
      %v315 = vadd.f32 %v279, %v306
      %v316 = vadd.f32 %v280, %v306
      %v317 = vadd.f32 %v281, %v306
      %v318 = vadd.f32 %v282, %v306
      %v319 = vadd.f32 %v283, %v306
      %v320 = vadd.f32 %v284, %v306
      %v321 = vadd.f32 %v285, %v306
      %v322 = vadd.f32 %v286, %v306
      %v323 = vadd.f32 %v287, %v306
      %v324 = vadd.f32 %v288, %v306
      %v325 = vadd.f32 %v289, %v306
      %v326 = vadd.f32 %v290, %v306
      %v327 = vadd.f32 %v291, %v306
      %v328 = vadd.f32 %v292, %v306
      %v329 = vadd.f32 %v293, %v306
      %v330 = vadd.f32 %v294, %v306
      %v331 = vadd.f32 %v295, %v306
      %v332 = vadd.f32 %v296, %v306
      %v333 = vadd.f32 %v297, %v306
      %v334 = vadd.f32 %v298, %v306
      %v335 = vadd.f32 %v299, %v306
      %v336 = vadd.f32 %v300, %v306
      %v337 = vadd.f32 %v301, %v306
      %v338 = vadd.f32 %v302, %v306
      %v339 = vadd.f32 %v303, %v306
      %v340 = vmax.f32 %v308, 0.0
      %v341 = vmax.f32 %v309, 0.0
      %v342 = vmax.f32 %v310, 0.0
      %v343 = vmax.f32 %v311, 0.0
      %v344 = vmax.f32 %v312, 0.0
      %v345 = vmax.f32 %v313, 0.0
      %v346 = vmax.f32 %v314, 0.0
      %v347 = vmax.f32 %v315, 0.0
      %v348 = vmax.f32 %v316, 0.0
      %v349 = vmax.f32 %v317, 0.0
      %v350 = vmax.f32 %v318, 0.0
      %v351 = vmax.f32 %v319, 0.0
      %v352 = vmax.f32 %v320, 0.0
      %v353 = vmax.f32 %v321, 0.0
      %v354 = vmax.f32 %v322, 0.0
      %v355 = vmax.f32 %v323, 0.0
      %v356 = vmax.f32 %v324, 0.0
      %v357 = vmax.f32 %v325, 0.0
      %v358 = vmax.f32 %v326, 0.0
      %v359 = vmax.f32 %v327, 0.0
      %v360 = vmax.f32 %v328, 0.0
      %v361 = vmax.f32 %v329, 0.0
      %v362 = vmax.f32 %v330, 0.0
      %v363 = vmax.f32 %v331, 0.0
      %v364 = vmax.f32 %v332, 0.0
      %v365 = vmax.f32 %v333, 0.0
      %v366 = vmax.f32 %v334, 0.0
      %v367 = vmax.f32 %v335, 0.0
      %v368 = vmax.f32 %v336, 0.0
      %v369 = vmax.f32 %v337, 0.0
      %v370 = vmax.f32 %v338, 0.0
      %v371 = vmax.f32 %v339, 0.0
      %vm372 = vcmask 64512
      %373 = vst.msk [vmem:[#allocation2] sm:$0xff] %vm372, 0.0
      %374 = vst.msk [vmem:[#allocation2 + $0x8] sm:$0xff] %vm372, 0.0
      %vm375 = vcmask 58368
      %376 = vst.msk [vmem:[#allocation2 + $0x10] sm:$0x3] %vm375, 0.0
      %s377 = scalar_lea.vmem [#allocation2], 408
      %378 = vst.msk [vmem:[%s377] sm:$0xff] %vm372, 0.0
      %379 = vst.msk [vmem:[%s377 + $0x8] sm:$0xff] %vm372, 0.0
      %380 = vst.msk [vmem:[%s377 + $0x10] sm:$0x3] %vm375, 0.0
      %vm381 = vcmask 57344
      %382 = vst.msk [vmem:[#allocation2] sm:$0x1] %vm381, 0.0
      %383 = vst.msk [vmem:[#allocation2 + $0x18] sm:$0x1] %vm381, 0.0
      %384 = vst.msk [vmem:[#allocation2 + $0x30] sm:$0x1] %vm381, 0.0
      %385 = vst.msk [vmem:[#allocation2 + $0x48] sm:$0x1] %vm381, 0.0
      %386 = vst.msk [vmem:[#allocation2 + $0x60] sm:$0x1] %vm381, 0.0
      %387 = vst.msk [vmem:[#allocation2 + $0x78] sm:$0x1] %vm381, 0.0
      %388 = vst.msk [vmem:[#allocation2 + $0x90] sm:$0x1] %vm381, 0.0
      %389 = vst.msk [vmem:[#allocation2 + $0xa8] sm:$0x1] %vm381, 0.0
      %390 = vst.msk [vmem:[#allocation2 + $0xc0] sm:$0x1] %vm381, 0.0
      %391 = vst.msk [vmem:[#allocation2 + $0xd8] sm:$0x1] %vm381, 0.0
      %392 = vst.msk [vmem:[#allocation2 + $0xf0] sm:$0x1] %vm381, 0.0
      %393 = vst.msk [vmem:[#allocation2 + $0x108] sm:$0x1] %vm381, 0.0
      %394 = vst.msk [vmem:[#allocation2 + $0x120] sm:$0x1] %vm381, 0.0
      %395 = vst.msk [vmem:[#allocation2 + $0x138] sm:$0x1] %vm381, 0.0
      %396 = vst.msk [vmem:[#allocation2 + $0x150] sm:$0x1] %vm381, 0.0
      %397 = vst.msk [vmem:[#allocation2 + $0x168] sm:$0x1] %vm381, 0.0
      %398 = vst.msk [vmem:[#allocation2 + $0x180] sm:$0x1] %vm381, 0.0
      %399 = vst.msk [vmem:[#allocation2 + $0x198] sm:$0x1] %vm381, 0.0
      %400 = vst.msk [vmem:[#allocation2 + $0x11] sm:$0x1] %vm381, 0.0
      %401 = vst.msk [vmem:[#allocation2 + $0x29] sm:$0x1] %vm381, 0.0
      %402 = vst.msk [vmem:[#allocation2 + $0x41] sm:$0x1] %vm381, 0.0
      %403 = vst.msk [vmem:[#allocation2 + $0x59] sm:$0x1] %vm381, 0.0
      %404 = vst.msk [vmem:[#allocation2 + $0x71] sm:$0x1] %vm381, 0.0
      %405 = vst.msk [vmem:[#allocation2 + $0x89] sm:$0x1] %vm381, 0.0
      %406 = vst.msk [vmem:[#allocation2 + $0xa1] sm:$0x1] %vm381, 0.0
      %407 = vst.msk [vmem:[#allocation2 + $0xb9] sm:$0x1] %vm381, 0.0
      %408 = vst.msk [vmem:[#allocation2 + $0xd1] sm:$0x1] %vm381, 0.0
      %409 = vst.msk [vmem:[#allocation2 + $0xe9] sm:$0x1] %vm381, 0.0
      %410 = vst.msk [vmem:[#allocation2 + $0x101] sm:$0x1] %vm381, 0.0
      %411 = vst.msk [vmem:[#allocation2 + $0x119] sm:$0x1] %vm381, 0.0
      %412 = vst.msk [vmem:[#allocation2 + $0x131] sm:$0x1] %vm381, 0.0
      %413 = vst.msk [vmem:[#allocation2 + $0x149] sm:$0x1] %vm381, 0.0
      %414 = vst.msk [vmem:[#allocation2 + $0x161] sm:$0x1] %vm381, 0.0
      %415 = vst.msk [vmem:[#allocation2 + $0x179] sm:$0x1] %vm381, 0.0
      %416 = vst.msk [vmem:[#allocation2 + $0x191] sm:$0x1] %vm381, 0.0
      %417 = vst.msk [vmem:[#allocation2 + $0x1a9] sm:$0x1] %vm381, 0.0
      %s418 = scalar_lea.vmem [#allocation2], 24
      %419 = vst.msk [vmem:[%s418 + $0x1] sm:$0xff] %vm372, %v340
      %420 = vst.msk [vmem:[%s418 + $0x9] sm:$0xff] %vm372, %v341
      %421 = vst.msk [vmem:[%s418 + $0x19] sm:$0xff] %vm372, %v342
      %422 = vst.msk [vmem:[%s418 + $0x21] sm:$0xff] %vm372, %v343
      %423 = vst.msk [vmem:[%s418 + $0x31] sm:$0xff] %vm372, %v344
      %424 = vst.msk [vmem:[%s418 + $0x39] sm:$0xff] %vm372, %v345
      %425 = vst.msk [vmem:[%s418 + $0x49] sm:$0xff] %vm372, %v346
      %426 = vst.msk [vmem:[%s418 + $0x51] sm:$0xff] %vm372, %v347
      %427 = vst.msk [vmem:[%s418 + $0x61] sm:$0xff] %vm372, %v348
      %428 = vst.msk [vmem:[%s418 + $0x69] sm:$0xff] %vm372, %v349
      %429 = vst.msk [vmem:[%s418 + $0x79] sm:$0xff] %vm372, %v350
      %430 = vst.msk [vmem:[%s418 + $0x81] sm:$0xff] %vm372, %v351
      %431 = vst.msk [vmem:[%s418 + $0x91] sm:$0xff] %vm372, %v352
      %432 = vst.msk [vmem:[%s418 + $0x99] sm:$0xff] %vm372, %v353
      %433 = vst.msk [vmem:[%s418 + $0xa9] sm:$0xff] %vm372, %v354
      %434 = vst.msk [vmem:[%s418 + $0xb1] sm:$0xff] %vm372, %v355
      %435 = vst.msk [vmem:[%s418 + $0xc1] sm:$0xff] %vm372, %v356
      %436 = vst.msk [vmem:[%s418 + $0xc9] sm:$0xff] %vm372, %v357
      %437 = vst.msk [vmem:[%s418 + $0xd9] sm:$0xff] %vm372, %v358
      %438 = vst.msk [vmem:[%s418 + $0xe1] sm:$0xff] %vm372, %v359
      %439 = vst.msk [vmem:[%s418 + $0xf1] sm:$0xff] %vm372, %v360
      %440 = vst.msk [vmem:[%s418 + $0xf9] sm:$0xff] %vm372, %v361
      %441 = vst.msk [vmem:[%s418 + $0x109] sm:$0xff] %vm372, %v362
      %442 = vst.msk [vmem:[%s418 + $0x111] sm:$0xff] %vm372, %v363
      %443 = vst.msk [vmem:[%s418 + $0x121] sm:$0xff] %vm372, %v364
      %444 = vst.msk [vmem:[%s418 + $0x129] sm:$0xff] %vm372, %v365
      %445 = vst.msk [vmem:[%s418 + $0x139] sm:$0xff] %vm372, %v366
      %446 = vst.msk [vmem:[%s418 + $0x141] sm:$0xff] %vm372, %v367
      %447 = vst.msk [vmem:[%s418 + $0x151] sm:$0xff] %vm372, %v368
      %448 = vst.msk [vmem:[%s418 + $0x159] sm:$0xff] %vm372, %v369
      %449 = vst.msk [vmem:[%s418 + $0x169] sm:$0xff] %vm372, %v370
      %450 = vst.msk [vmem:[%s418 + $0x171] sm:$0xff] %vm372, %v371
      %v451 = vld [vmem:[#allocation2] sm:$0xff]
      %v452 = vld [vmem:[#allocation2 + $0x8] sm:$0xff]
      %v453 = vld [vmem:[#allocation2 + $0x10] sm:$0x3]
      %v454 = vld [vmem:[#allocation2 + $0x18] sm:$0xff]
      %v455 = vld [vmem:[#allocation2 + $0x20] sm:$0xff]
      %v456 = vld [vmem:[#allocation2 + $0x28] sm:$0x3]
      %v457 = vld [vmem:[#allocation2 + $0x30] sm:$0xff]
      %v458 = vld [vmem:[#allocation2 + $0x38] sm:$0xff]
      %v459 = vld [vmem:[#allocation2 + $0x40] sm:$0x3]
      %v460 = vld [vmem:[#allocation2 + $0x48] sm:$0xff]
      %v461 = vld [vmem:[#allocation2 + $0x50] sm:$0xff]
      %v462 = vld [vmem:[#allocation2 + $0x58] sm:$0x3]
      %v463 = vld [vmem:[#allocation2 + $0x60] sm:$0xff]
      %v464 = vld [vmem:[#allocation2 + $0x68] sm:$0xff]
      %v465 = vld [vmem:[#allocation2 + $0x70] sm:$0x3]
      %v466 = vld [vmem:[#allocation2 + $0x78] sm:$0xff]
      %v467 = vld [vmem:[#allocation2 + $0x80] sm:$0xff]
      %v468 = vld [vmem:[#allocation2 + $0x88] sm:$0x3]
      %v469 = vld [vmem:[#allocation2 + $0x90] sm:$0xff]
      %v470 = vld [vmem:[#allocation2 + $0x98] sm:$0xff]
      %v471 = vld [vmem:[#allocation2 + $0xa0] sm:$0x3]
      %v472 = vld [vmem:[#allocation2 + $0xa8] sm:$0xff]
      %v473 = vld [vmem:[#allocation2 + $0xb0] sm:$0xff]
      %v474 = vld [vmem:[#allocation2 + $0xb8] sm:$0x3]
      %v475 = vld [vmem:[#allocation2 + $0xc0] sm:$0xff]
      %v476 = vld [vmem:[#allocation2 + $0xc8] sm:$0xff]
      %v477 = vld [vmem:[#allocation2 + $0xd0] sm:$0x3]
      %v478 = vld [vmem:[#allocation2 + $0xd8] sm:$0xff]
      %v479 = vld [vmem:[#allocation2 + $0xe0] sm:$0xff]
      %v480 = vld [vmem:[#allocation2 + $0xe8] sm:$0x3]
      %v481 = vld [vmem:[#allocation2 + $0xf0] sm:$0xff]
      %v482 = vld [vmem:[#allocation2 + $0xf8] sm:$0xff]
      %v483 = vld [vmem:[#allocation2 + $0x100] sm:$0x3]
      %v484 = vld [vmem:[#allocation2 + $0x108] sm:$0xff]
      %v485 = vld [vmem:[#allocation2 + $0x110] sm:$0xff]
      %v486 = vld [vmem:[#allocation2 + $0x118] sm:$0x3]
      %v487 = vld [vmem:[#allocation2 + $0x120] sm:$0xff]
      %v488 = vld [vmem:[#allocation2 + $0x128] sm:$0xff]
      %v489 = vld [vmem:[#allocation2 + $0x130] sm:$0x3]
      %v490 = vld [vmem:[#allocation2 + $0x138] sm:$0xff]
      %v491 = vld [vmem:[#allocation2 + $0x140] sm:$0xff]
      %v492 = vld [vmem:[#allocation2 + $0x148] sm:$0x3]
      %v493 = vld [vmem:[#allocation2 + $0x150] sm:$0xff]
      %v494 = vld [vmem:[#allocation2 + $0x158] sm:$0xff]
      %v495 = vld [vmem:[#allocation2 + $0x160] sm:$0x3]
      %v496 = vld [vmem:[#allocation2 + $0x168] sm:$0xff]
      %v497 = vld [vmem:[#allocation2 + $0x170] sm:$0xff]
      %v498 = vld [vmem:[#allocation2 + $0x178] sm:$0x3]
      %v499 = vld [vmem:[#allocation2 + $0x180] sm:$0xff]
      %v500 = vld [vmem:[#allocation2 + $0x188] sm:$0xff]
      %v501 = vld [vmem:[#allocation2 + $0x190] sm:$0x3]
      %v502 = vld [vmem:[#allocation2 + $0x198] sm:$0xff]
      %v503 = vld [vmem:[#allocation2 + $0x1a0] sm:$0xff]
      %v504 = vld [vmem:[#allocation2 + $0x1a8] sm:$0x3]
      %505 = vst.msk [vmem:[#allocation3] sm:$0xff] %vm372, %v451
      %506 = vst.msk [vmem:[#allocation3 + $0x8] sm:$0xff] %vm372, %v452
      %507 = vst.msk [vmem:[#allocation3 + $0x10] sm:$0xff] %vm372, %v454
      %508 = vst.msk [vmem:[#allocation3 + $0x18] sm:$0xff] %vm372, %v455
      %509 = vst.msk [vmem:[#allocation3 + $0x20] sm:$0xff] %vm372, %v457
      %510 = vst.msk [vmem:[#allocation3 + $0x28] sm:$0xff] %vm372, %v458
      %511 = vst.msk [vmem:[#allocation3 + $0x30] sm:$0xff] %vm372, %v460
      %512 = vst.msk [vmem:[#allocation3 + $0x38] sm:$0xff] %vm372, %v461
      %513 = vst.msk [vmem:[#allocation3 + $0x40] sm:$0xff] %vm372, %v463
      %514 = vst.msk [vmem:[#allocation3 + $0x48] sm:$0xff] %vm372, %v464
      %515 = vst.msk [vmem:[#allocation3 + $0x50] sm:$0xff] %vm372, %v466
      %516 = vst.msk [vmem:[#allocation3 + $0x58] sm:$0xff] %vm372, %v467
      %517 = vst.msk [vmem:[#allocation3 + $0x60] sm:$0xff] %vm372, %v469
      %518 = vst.msk [vmem:[#allocation3 + $0x68] sm:$0xff] %vm372, %v470
      %519 = vst.msk [vmem:[#allocation3 + $0x70] sm:$0xff] %vm372, %v472
      %520 = vst.msk [vmem:[#allocation3 + $0x78] sm:$0xff] %vm372, %v473
      %521 = vst.msk [vmem:[#allocation3 + $0x80] sm:$0xff] %vm372, %v475
      %522 = vst.msk [vmem:[#allocation3 + $0x88] sm:$0xff] %vm372, %v476
      %523 = vst.msk [vmem:[#allocation3 + $0x90] sm:$0xff] %vm372, %v478
      %524 = vst.msk [vmem:[#allocation3 + $0x98] sm:$0xff] %vm372, %v479
      %525 = vst.msk [vmem:[#allocation3 + $0xa0] sm:$0xff] %vm372, %v481
      %526 = vst.msk [vmem:[#allocation3 + $0xa8] sm:$0xff] %vm372, %v482
      %527 = vst.msk [vmem:[#allocation3 + $0xb0] sm:$0xff] %vm372, %v484
      %528 = vst.msk [vmem:[#allocation3 + $0xb8] sm:$0xff] %vm372, %v485
      %529 = vst.msk [vmem:[#allocation3 + $0xc0] sm:$0xff] %vm372, %v487
      %530 = vst.msk [vmem:[#allocation3 + $0xc8] sm:$0xff] %vm372, %v488
      %531 = vst.msk [vmem:[#allocation3 + $0xd0] sm:$0xff] %vm372, %v490
      %532 = vst.msk [vmem:[#allocation3 + $0xd8] sm:$0xff] %vm372, %v491
      %533 = vst.msk [vmem:[#allocation3 + $0xe0] sm:$0xff] %vm372, %v493
      %534 = vst.msk [vmem:[#allocation3 + $0xe8] sm:$0xff] %vm372, %v494
      %535 = vst.msk [vmem:[#allocation3 + $0xf0] sm:$0xff] %vm372, %v496
      %536 = vst.msk [vmem:[#allocation3 + $0xf8] sm:$0xff] %vm372, %v497
      %vm585 = vcmask 1046528
      %v586 = vrot.slane %v451, 1
      %v587 = vrot.slane %v452, 1
      %v588 = vsel %vm585, %v586, %v587
      %v589 = vrot.slane %v453, 1
      %v590 = vsel %vm585, %v587, %v589
      %v591 = vrot.slane %v454, 1
      %v592 = vrot.slane %v455, 1
      %v593 = vsel %vm585, %v591, %v592
      %v594 = vrot.slane %v456, 1
      %v595 = vsel %vm585, %v592, %v594
      %v596 = vrot.slane %v457, 1
      %v597 = vrot.slane %v458, 1
      %v598 = vsel %vm585, %v596, %v597
      %v599 = vrot.slane %v459, 1
      %v600 = vsel %vm585, %v597, %v599
      %v601 = vrot.slane %v460, 1
      %v602 = vrot.slane %v461, 1
      %v603 = vsel %vm585, %v601, %v602
      %v604 = vrot.slane %v462, 1
      %v605 = vsel %vm585, %v602, %v604
      %v606 = vrot.slane %v463, 1
      %v607 = vrot.slane %v464, 1
      %v608 = vsel %vm585, %v606, %v607
      %v609 = vrot.slane %v465, 1
      %v610 = vsel %vm585, %v607, %v609
      %v611 = vrot.slane %v466, 1
      %v612 = vrot.slane %v467, 1
      %v613 = vsel %vm585, %v611, %v612
      %v614 = vrot.slane %v468, 1
      %v615 = vsel %vm585, %v612, %v614
      %v616 = vrot.slane %v469, 1
      %v617 = vrot.slane %v470, 1
      %v618 = vsel %vm585, %v616, %v617
      %v619 = vrot.slane %v471, 1
      %v620 = vsel %vm585, %v617, %v619
      %v621 = vrot.slane %v472, 1
      %v622 = vrot.slane %v473, 1
      %v623 = vsel %vm585, %v621, %v622
      %v624 = vrot.slane %v474, 1
      %v625 = vsel %vm585, %v622, %v624
      %v626 = vrot.slane %v475, 1
      %v627 = vrot.slane %v476, 1
      %v628 = vsel %vm585, %v626, %v627
      %v629 = vrot.slane %v477, 1
      %v630 = vsel %vm585, %v627, %v629
      %v631 = vrot.slane %v478, 1
      %v632 = vrot.slane %v479, 1
      %v633 = vsel %vm585, %v631, %v632
      %v634 = vrot.slane %v480, 1
      %v635 = vsel %vm585, %v632, %v634
      %v636 = vrot.slane %v481, 1
      %v637 = vrot.slane %v482, 1
      %v638 = vsel %vm585, %v636, %v637
      %v639 = vrot.slane %v483, 1
      %v640 = vsel %vm585, %v637, %v639
      %v641 = vrot.slane %v484, 1
      %v642 = vrot.slane %v485, 1
      %v643 = vsel %vm585, %v641, %v642
      %v644 = vrot.slane %v486, 1
      %v645 = vsel %vm585, %v642, %v644
      %v646 = vrot.slane %v487, 1
      %v647 = vrot.slane %v488, 1
      %v648 = vsel %vm585, %v646, %v647
      %v649 = vrot.slane %v489, 1
      %v650 = vsel %vm585, %v647, %v649
      %v651 = vrot.slane %v490, 1
      %v652 = vrot.slane %v491, 1
      %v653 = vsel %vm585, %v651, %v652
      %v654 = vrot.slane %v492, 1
      %v655 = vsel %vm585, %v652, %v654
      %v656 = vrot.slane %v493, 1
      %v657 = vrot.slane %v494, 1
      %v658 = vsel %vm585, %v656, %v657
      %v659 = vrot.slane %v495, 1
      %v660 = vsel %vm585, %v657, %v659
      %v661 = vrot.slane %v496, 1
      %v662 = vrot.slane %v497, 1
      %v663 = vsel %vm585, %v661, %v662
      %v664 = vrot.slane %v498, 1
      %v665 = vsel %vm585, %v662, %v664
      %666 = vrot.lane.b32.xlu0 %v588, 8
      %v667 = vpop.permute.xlu0 %666
      %668 = vrot.lane.b32.xlu0 %v590, 8
      %v669 = vpop.permute.xlu0 %668
      %670 = vrot.lane.b32.xlu0 %v593, 8
      %v671 = vpop.permute.xlu0 %670
      %672 = vrot.lane.b32.xlu0 %v595, 8
      %v673 = vpop.permute.xlu0 %672
      %674 = vrot.lane.b32.xlu0 %v598, 8
      %v675 = vpop.permute.xlu0 %674
      %676 = vrot.lane.b32.xlu0 %v600, 8
      %v677 = vpop.permute.xlu0 %676
      %678 = vrot.lane.b32.xlu0 %v603, 8
      %v679 = vpop.permute.xlu0 %678
      %680 = vrot.lane.b32.xlu0 %v605, 8
      %v681 = vpop.permute.xlu0 %680
      %682 = vrot.lane.b32.xlu0 %v608, 8
      %v683 = vpop.permute.xlu0 %682
      %684 = vrot.lane.b32.xlu0 %v610, 8
      %v685 = vpop.permute.xlu0 %684
      %686 = vrot.lane.b32.xlu0 %v613, 8
      %v687 = vpop.permute.xlu0 %686
      %688 = vrot.lane.b32.xlu0 %v615, 8
      %v689 = vpop.permute.xlu0 %688
      %690 = vrot.lane.b32.xlu0 %v618, 8
      %v691 = vpop.permute.xlu0 %690
      %692 = vrot.lane.b32.xlu0 %v620, 8
      %v693 = vpop.permute.xlu0 %692
      %694 = vrot.lane.b32.xlu0 %v623, 8
      %v695 = vpop.permute.xlu0 %694
      %696 = vrot.lane.b32.xlu0 %v625, 8
      %v697 = vpop.permute.xlu0 %696
      %698 = vrot.lane.b32.xlu0 %v628, 8
      %v699 = vpop.permute.xlu0 %698
      %700 = vrot.lane.b32.xlu0 %v630, 8
      %v701 = vpop.permute.xlu0 %700
      %702 = vrot.lane.b32.xlu0 %v633, 8
      %v703 = vpop.permute.xlu0 %702
      %704 = vrot.lane.b32.xlu0 %v635, 8
      %v705 = vpop.permute.xlu0 %704
      %706 = vrot.lane.b32.xlu0 %v638, 8
      %v707 = vpop.permute.xlu0 %706
      %708 = vrot.lane.b32.xlu0 %v640, 8
      %v709 = vpop.permute.xlu0 %708
      %710 = vrot.lane.b32.xlu0 %v643, 8
      %v711 = vpop.permute.xlu0 %710
      %712 = vrot.lane.b32.xlu0 %v645, 8
      %v713 = vpop.permute.xlu0 %712
      %714 = vrot.lane.b32.xlu0 %v648, 8
      %v715 = vpop.permute.xlu0 %714
      %716 = vrot.lane.b32.xlu0 %v650, 8
      %v717 = vpop.permute.xlu0 %716
      %718 = vrot.lane.b32.xlu0 %v653, 8
      %v719 = vpop.permute.xlu0 %718
      %720 = vrot.lane.b32.xlu0 %v655, 8
      %v721 = vpop.permute.xlu0 %720
      %722 = vrot.lane.b32.xlu0 %v658, 8
      %v723 = vpop.permute.xlu0 %722
      %724 = vrot.lane.b32.xlu0 %v660, 8
      %v725 = vpop.permute.xlu0 %724
      %726 = vrot.lane.b32.xlu0 %v663, 8
      %v727 = vpop.permute.xlu0 %726
      %728 = vrot.lane.b32.xlu0 %v665, 8
      %v729 = vpop.permute.xlu0 %728
      %vm762 = vcmask 130112
      %763 = vst.msk [vmem:[#allocation3] sm:$0xff] %vm762, %v667
      %764 = vst.msk [vmem:[#allocation3 + $0x8] sm:$0xff] %vm762, %v669
      %765 = vst.msk [vmem:[#allocation3 + $0x10] sm:$0xff] %vm762, %v671
      %766 = vst.msk [vmem:[#allocation3 + $0x18] sm:$0xff] %vm762, %v673
      %767 = vst.msk [vmem:[#allocation3 + $0x20] sm:$0xff] %vm762, %v675
      %768 = vst.msk [vmem:[#allocation3 + $0x28] sm:$0xff] %vm762, %v677
      %769 = vst.msk [vmem:[#allocation3 + $0x30] sm:$0xff] %vm762, %v679
      %770 = vst.msk [vmem:[#allocation3 + $0x38] sm:$0xff] %vm762, %v681
      %771 = vst.msk [vmem:[#allocation3 + $0x40] sm:$0xff] %vm762, %v683
      %772 = vst.msk [vmem:[#allocation3 + $0x48] sm:$0xff] %vm762, %v685
      %773 = vst.msk [vmem:[#allocation3 + $0x50] sm:$0xff] %vm762, %v687
      %774 = vst.msk [vmem:[#allocation3 + $0x58] sm:$0xff] %vm762, %v689
      %775 = vst.msk [vmem:[#allocation3 + $0x60] sm:$0xff] %vm762, %v691
      %776 = vst.msk [vmem:[#allocation3 + $0x68] sm:$0xff] %vm762, %v693
      %777 = vst.msk [vmem:[#allocation3 + $0x70] sm:$0xff] %vm762, %v695
      %778 = vst.msk [vmem:[#allocation3 + $0x78] sm:$0xff] %vm762, %v697
      %779 = vst.msk [vmem:[#allocation3 + $0x80] sm:$0xff] %vm762, %v699
      %780 = vst.msk [vmem:[#allocation3 + $0x88] sm:$0xff] %vm762, %v701
      %781 = vst.msk [vmem:[#allocation3 + $0x90] sm:$0xff] %vm762, %v703
      %782 = vst.msk [vmem:[#allocation3 + $0x98] sm:$0xff] %vm762, %v705
      %783 = vst.msk [vmem:[#allocation3 + $0xa0] sm:$0xff] %vm762, %v707
      %784 = vst.msk [vmem:[#allocation3 + $0xa8] sm:$0xff] %vm762, %v709
      %785 = vst.msk [vmem:[#allocation3 + $0xb0] sm:$0xff] %vm762, %v711
      %786 = vst.msk [vmem:[#allocation3 + $0xb8] sm:$0xff] %vm762, %v713
      %787 = vst.msk [vmem:[#allocation3 + $0xc0] sm:$0xff] %vm762, %v715
      %788 = vst.msk [vmem:[#allocation3 + $0xc8] sm:$0xff] %vm762, %v717
      %789 = vst.msk [vmem:[#allocation3 + $0xd0] sm:$0xff] %vm762, %v719
      %790 = vst.msk [vmem:[#allocation3 + $0xd8] sm:$0xff] %vm762, %v721
      %791 = vst.msk [vmem:[#allocation3 + $0xe0] sm:$0xff] %vm762, %v723
      %792 = vst.msk [vmem:[#allocation3 + $0xe8] sm:$0xff] %vm762, %v725
      %793 = vst.msk [vmem:[#allocation3 + $0xf0] sm:$0xff] %vm762, %v727
      %794 = vst.msk [vmem:[#allocation3 + $0xf8] sm:$0xff] %vm762, %v729
      %vm795 = vcmask 1045504
      %v796 = vrot.slane %v451, 2
      %v797 = vrot.slane %v452, 2
      %v798 = vsel %vm795, %v796, %v797
      %v799 = vrot.slane %v453, 2
      %v800 = vsel %vm795, %v797, %v799
      %v801 = vrot.slane %v454, 2
      %v802 = vrot.slane %v455, 2
      %v803 = vsel %vm795, %v801, %v802
      %v804 = vrot.slane %v456, 2
      %v805 = vsel %vm795, %v802, %v804
      %v806 = vrot.slane %v457, 2
      %v807 = vrot.slane %v458, 2
      %v808 = vsel %vm795, %v806, %v807
      %v809 = vrot.slane %v459, 2
      %v810 = vsel %vm795, %v807, %v809
      %v811 = vrot.slane %v460, 2
      %v812 = vrot.slane %v461, 2
      %v813 = vsel %vm795, %v811, %v812
      %v814 = vrot.slane %v462, 2
      %v815 = vsel %vm795, %v812, %v814
      %v816 = vrot.slane %v463, 2
      %v817 = vrot.slane %v464, 2
      %v818 = vsel %vm795, %v816, %v817
      %v819 = vrot.slane %v465, 2
      %v820 = vsel %vm795, %v817, %v819
      %v821 = vrot.slane %v466, 2
      %v822 = vrot.slane %v467, 2
      %v823 = vsel %vm795, %v821, %v822
      %v824 = vrot.slane %v468, 2
      %v825 = vsel %vm795, %v822, %v824
      %v826 = vrot.slane %v469, 2
      %v827 = vrot.slane %v470, 2
      %v828 = vsel %vm795, %v826, %v827
      %v829 = vrot.slane %v471, 2
      %v830 = vsel %vm795, %v827, %v829
      %v831 = vrot.slane %v472, 2
      %v832 = vrot.slane %v473, 2
      %v833 = vsel %vm795, %v831, %v832
      %v834 = vrot.slane %v474, 2
      %v835 = vsel %vm795, %v832, %v834
      %v836 = vrot.slane %v475, 2
      %v837 = vrot.slane %v476, 2
      %v838 = vsel %vm795, %v836, %v837
      %v839 = vrot.slane %v477, 2
      %v840 = vsel %vm795, %v837, %v839
      %v841 = vrot.slane %v478, 2
      %v842 = vrot.slane %v479, 2
      %v843 = vsel %vm795, %v841, %v842
      %v844 = vrot.slane %v480, 2
      %v845 = vsel %vm795, %v842, %v844
      %v846 = vrot.slane %v481, 2
      %v847 = vrot.slane %v482, 2
      %v848 = vsel %vm795, %v846, %v847
      %v849 = vrot.slane %v483, 2
      %v850 = vsel %vm795, %v847, %v849
      %v851 = vrot.slane %v484, 2
      %v852 = vrot.slane %v485, 2
      %v853 = vsel %vm795, %v851, %v852
      %v854 = vrot.slane %v486, 2
      %v855 = vsel %vm795, %v852, %v854
      %v856 = vrot.slane %v487, 2
      %v857 = vrot.slane %v488, 2
      %v858 = vsel %vm795, %v856, %v857
      %v859 = vrot.slane %v489, 2
      %v860 = vsel %vm795, %v857, %v859
      %v861 = vrot.slane %v490, 2
      %v862 = vrot.slane %v491, 2
      %v863 = vsel %vm795, %v861, %v862
      %v864 = vrot.slane %v492, 2
      %v865 = vsel %vm795, %v862, %v864
      %v866 = vrot.slane %v493, 2
      %v867 = vrot.slane %v494, 2
      %v868 = vsel %vm795, %v866, %v867
      %v869 = vrot.slane %v495, 2
      %v870 = vsel %vm795, %v867, %v869
      %v871 = vrot.slane %v496, 2
      %v872 = vrot.slane %v497, 2
      %v873 = vsel %vm795, %v871, %v872
      %v874 = vrot.slane %v498, 2
      %v875 = vsel %vm795, %v872, %v874
      %876 = vrot.lane.b32.xlu0 %v798, 16
      %v877 = vpop.permute.xlu0 %876
      %878 = vrot.lane.b32.xlu0 %v800, 16
      %v879 = vpop.permute.xlu0 %878
      %880 = vrot.lane.b32.xlu0 %v803, 16
      %v881 = vpop.permute.xlu0 %880
      %882 = vrot.lane.b32.xlu0 %v805, 16
      %v883 = vpop.permute.xlu0 %882
      %884 = vrot.lane.b32.xlu0 %v808, 16
      %v885 = vpop.permute.xlu0 %884
      %886 = vrot.lane.b32.xlu0 %v810, 16
      %v887 = vpop.permute.xlu0 %886
      %888 = vrot.lane.b32.xlu0 %v813, 16
      %v889 = vpop.permute.xlu0 %888
      %890 = vrot.lane.b32.xlu0 %v815, 16
      %v891 = vpop.permute.xlu0 %890
      %892 = vrot.lane.b32.xlu0 %v818, 16
      %v893 = vpop.permute.xlu0 %892
      %894 = vrot.lane.b32.xlu0 %v820, 16
      %v895 = vpop.permute.xlu0 %894
      %896 = vrot.lane.b32.xlu0 %v823, 16
      %v897 = vpop.permute.xlu0 %896
      %898 = vrot.lane.b32.xlu0 %v825, 16
      %v899 = vpop.permute.xlu0 %898
      %900 = vrot.lane.b32.xlu0 %v828, 16
      %v901 = vpop.permute.xlu0 %900
      %902 = vrot.lane.b32.xlu0 %v830, 16
      %v903 = vpop.permute.xlu0 %902
      %904 = vrot.lane.b32.xlu0 %v833, 16
      %v905 = vpop.permute.xlu0 %904
      %906 = vrot.lane.b32.xlu0 %v835, 16
      %v907 = vpop.permute.xlu0 %906
      %908 = vrot.lane.b32.xlu0 %v838, 16
      %v909 = vpop.permute.xlu0 %908
      %910 = vrot.lane.b32.xlu0 %v840, 16
      %v911 = vpop.permute.xlu0 %910
      %912 = vrot.lane.b32.xlu0 %v843, 16
      %v913 = vpop.permute.xlu0 %912
      %914 = vrot.lane.b32.xlu0 %v845, 16
      %v915 = vpop.permute.xlu0 %914
      %916 = vrot.lane.b32.xlu0 %v848, 16
      %v917 = vpop.permute.xlu0 %916
      %918 = vrot.lane.b32.xlu0 %v850, 16
      %v919 = vpop.permute.xlu0 %918
      %920 = vrot.lane.b32.xlu0 %v853, 16
      %v921 = vpop.permute.xlu0 %920
      %922 = vrot.lane.b32.xlu0 %v855, 16
      %v923 = vpop.permute.xlu0 %922
      %924 = vrot.lane.b32.xlu0 %v858, 16
      %v925 = vpop.permute.xlu0 %924
      %926 = vrot.lane.b32.xlu0 %v860, 16
      %v927 = vpop.permute.xlu0 %926
      %928 = vrot.lane.b32.xlu0 %v863, 16
      %v929 = vpop.permute.xlu0 %928
      %930 = vrot.lane.b32.xlu0 %v865, 16
      %v931 = vpop.permute.xlu0 %930
      %932 = vrot.lane.b32.xlu0 %v868, 16
      %v933 = vpop.permute.xlu0 %932
      %934 = vrot.lane.b32.xlu0 %v870, 16
      %v935 = vpop.permute.xlu0 %934
      %936 = vrot.lane.b32.xlu0 %v873, 16
      %v937 = vpop.permute.xlu0 %936
      %938 = vrot.lane.b32.xlu0 %v875, 16
      %v939 = vpop.permute.xlu0 %938
      %vm972 = vcmask 195712
      %973 = vst.msk [vmem:[#allocation3] sm:$0xff] %vm972, %v877
      %974 = vst.msk [vmem:[#allocation3 + $0x8] sm:$0xff] %vm972, %v879
      %975 = vst.msk [vmem:[#allocation3 + $0x10] sm:$0xff] %vm972, %v881
      %976 = vst.msk [vmem:[#allocation3 + $0x18] sm:$0xff] %vm972, %v883
      %977 = vst.msk [vmem:[#allocation3 + $0x20] sm:$0xff] %vm972, %v885
      %978 = vst.msk [vmem:[#allocation3 + $0x28] sm:$0xff] %vm972, %v887
      %979 = vst.msk [vmem:[#allocation3 + $0x30] sm:$0xff] %vm972, %v889
      %980 = vst.msk [vmem:[#allocation3 + $0x38] sm:$0xff] %vm972, %v891
      %981 = vst.msk [vmem:[#allocation3 + $0x40] sm:$0xff] %vm972, %v893
      %982 = vst.msk [vmem:[#allocation3 + $0x48] sm:$0xff] %vm972, %v895
      %983 = vst.msk [vmem:[#allocation3 + $0x50] sm:$0xff] %vm972, %v897
      %984 = vst.msk [vmem:[#allocation3 + $0x58] sm:$0xff] %vm972, %v899
      %985 = vst.msk [vmem:[#allocation3 + $0x60] sm:$0xff] %vm972, %v901
      %986 = vst.msk [vmem:[#allocation3 + $0x68] sm:$0xff] %vm972, %v903
      %987 = vst.msk [vmem:[#allocation3 + $0x70] sm:$0xff] %vm972, %v905
      %988 = vst.msk [vmem:[#allocation3 + $0x78] sm:$0xff] %vm972, %v907
      %989 = vst.msk [vmem:[#allocation3 + $0x80] sm:$0xff] %vm972, %v909
      %990 = vst.msk [vmem:[#allocation3 + $0x88] sm:$0xff] %vm972, %v911
      %991 = vst.msk [vmem:[#allocation3 + $0x90] sm:$0xff] %vm972, %v913
      %992 = vst.msk [vmem:[#allocation3 + $0x98] sm:$0xff] %vm972, %v915
      %993 = vst.msk [vmem:[#allocation3 + $0xa0] sm:$0xff] %vm972, %v917
      %994 = vst.msk [vmem:[#allocation3 + $0xa8] sm:$0xff] %vm972, %v919
      %995 = vst.msk [vmem:[#allocation3 + $0xb0] sm:$0xff] %vm972, %v921
      %996 = vst.msk [vmem:[#allocation3 + $0xb8] sm:$0xff] %vm972, %v923
      %997 = vst.msk [vmem:[#allocation3 + $0xc0] sm:$0xff] %vm972, %v925
      %998 = vst.msk [vmem:[#allocation3 + $0xc8] sm:$0xff] %vm972, %v927
      %999 = vst.msk [vmem:[#allocation3 + $0xd0] sm:$0xff] %vm972, %v929
      %1000 = vst.msk [vmem:[#allocation3 + $0xd8] sm:$0xff] %vm972, %v931
      %1001 = vst.msk [vmem:[#allocation3 + $0xe0] sm:$0xff] %vm972, %v933
      %1002 = vst.msk [vmem:[#allocation3 + $0xe8] sm:$0xff] %vm972, %v935
      %1003 = vst.msk [vmem:[#allocation3 + $0xf0] sm:$0xff] %vm972, %v937
      %1004 = vst.msk [vmem:[#allocation3 + $0xf8] sm:$0xff] %vm972, %v939
      %1007 = vrot.lane.b32.xlu0 %v454, 24
      %v1008 = vpop.permute.xlu0 %1007
      %1009 = vrot.lane.b32.xlu0 %v455, 24
      %v1010 = vpop.permute.xlu0 %1009
      %1011 = vrot.lane.b32.xlu0 %v457, 24
      %v1012 = vpop.permute.xlu0 %1011
      %1013 = vrot.lane.b32.xlu0 %v458, 24
      %v1014 = vpop.permute.xlu0 %1013
      %1015 = vrot.lane.b32.xlu0 %v460, 24
      %v1016 = vpop.permute.xlu0 %1015
      %1017 = vrot.lane.b32.xlu0 %v461, 24
      %v1018 = vpop.permute.xlu0 %1017
      %1019 = vrot.lane.b32.xlu0 %v463, 24
      %v1020 = vpop.permute.xlu0 %1019
      %1021 = vrot.lane.b32.xlu0 %v464, 24
      %v1022 = vpop.permute.xlu0 %1021
      %1023 = vrot.lane.b32.xlu0 %v466, 24
      %v1024 = vpop.permute.xlu0 %1023
      %1025 = vrot.lane.b32.xlu0 %v467, 24
      %v1026 = vpop.permute.xlu0 %1025
      %1027 = vrot.lane.b32.xlu0 %v469, 24
      %v1028 = vpop.permute.xlu0 %1027
      %1029 = vrot.lane.b32.xlu0 %v470, 24
      %v1030 = vpop.permute.xlu0 %1029
      %1031 = vrot.lane.b32.xlu0 %v472, 24
      %v1032 = vpop.permute.xlu0 %1031
      %1033 = vrot.lane.b32.xlu0 %v473, 24
      %v1034 = vpop.permute.xlu0 %1033
      %1035 = vrot.lane.b32.xlu0 %v475, 24
      %v1036 = vpop.permute.xlu0 %1035
      %1037 = vrot.lane.b32.xlu0 %v476, 24
      %v1038 = vpop.permute.xlu0 %1037
      %1039 = vrot.lane.b32.xlu0 %v478, 24
      %v1040 = vpop.permute.xlu0 %1039
      %1041 = vrot.lane.b32.xlu0 %v479, 24
      %v1042 = vpop.permute.xlu0 %1041
      %1043 = vrot.lane.b32.xlu0 %v481, 24
      %v1044 = vpop.permute.xlu0 %1043
      %1045 = vrot.lane.b32.xlu0 %v482, 24
      %v1046 = vpop.permute.xlu0 %1045
      %1047 = vrot.lane.b32.xlu0 %v484, 24
      %v1048 = vpop.permute.xlu0 %1047
      %1049 = vrot.lane.b32.xlu0 %v485, 24
      %v1050 = vpop.permute.xlu0 %1049
      %1051 = vrot.lane.b32.xlu0 %v487, 24
      %v1052 = vpop.permute.xlu0 %1051
      %1053 = vrot.lane.b32.xlu0 %v488, 24
      %v1054 = vpop.permute.xlu0 %1053
      %1055 = vrot.lane.b32.xlu0 %v490, 24
      %v1056 = vpop.permute.xlu0 %1055
      %1057 = vrot.lane.b32.xlu0 %v491, 24
      %v1058 = vpop.permute.xlu0 %1057
      %1059 = vrot.lane.b32.xlu0 %v493, 24
      %v1060 = vpop.permute.xlu0 %1059
      %1061 = vrot.lane.b32.xlu0 %v494, 24
      %v1062 = vpop.permute.xlu0 %1061
      %1063 = vrot.lane.b32.xlu0 %v496, 24
      %v1064 = vpop.permute.xlu0 %1063
      %1065 = vrot.lane.b32.xlu0 %v497, 24
      %v1066 = vpop.permute.xlu0 %1065
      %1067 = vrot.lane.b32.xlu0 %v499, 24
      %v1068 = vpop.permute.xlu0 %1067
      %1069 = vrot.lane.b32.xlu0 %v500, 24
      %v1070 = vpop.permute.xlu0 %1069
      %vm1103 = vcmask 261312
      %1104 = vst.msk [vmem:[#allocation3] sm:$0xff] %vm1103, %v1008
      %1105 = vst.msk [vmem:[#allocation3 + $0x8] sm:$0xff] %vm1103, %v1010
      %1106 = vst.msk [vmem:[#allocation3 + $0x10] sm:$0xff] %vm1103, %v1012
      %1107 = vst.msk [vmem:[#allocation3 + $0x18] sm:$0xff] %vm1103, %v1014
      %1108 = vst.msk [vmem:[#allocation3 + $0x20] sm:$0xff] %vm1103, %v1016
      %1109 = vst.msk [vmem:[#allocation3 + $0x28] sm:$0xff] %vm1103, %v1018
      %1110 = vst.msk [vmem:[#allocation3 + $0x30] sm:$0xff] %vm1103, %v1020
      %1111 = vst.msk [vmem:[#allocation3 + $0x38] sm:$0xff] %vm1103, %v1022
      %1112 = vst.msk [vmem:[#allocation3 + $0x40] sm:$0xff] %vm1103, %v1024
      %1113 = vst.msk [vmem:[#allocation3 + $0x48] sm:$0xff] %vm1103, %v1026
      %1114 = vst.msk [vmem:[#allocation3 + $0x50] sm:$0xff] %vm1103, %v1028
      %1115 = vst.msk [vmem:[#allocation3 + $0x58] sm:$0xff] %vm1103, %v1030
      %1116 = vst.msk [vmem:[#allocation3 + $0x60] sm:$0xff] %vm1103, %v1032
      %1117 = vst.msk [vmem:[#allocation3 + $0x68] sm:$0xff] %vm1103, %v1034
      %1118 = vst.msk [vmem:[#allocation3 + $0x70] sm:$0xff] %vm1103, %v1036
      %1119 = vst.msk [vmem:[#allocation3 + $0x78] sm:$0xff] %vm1103, %v1038
      %1120 = vst.msk [vmem:[#allocation3 + $0x80] sm:$0xff] %vm1103, %v1040
      %1121 = vst.msk [vmem:[#allocation3 + $0x88] sm:$0xff] %vm1103, %v1042
      %1122 = vst.msk [vmem:[#allocation3 + $0x90] sm:$0xff] %vm1103, %v1044
      %1123 = vst.msk [vmem:[#allocation3 + $0x98] sm:$0xff] %vm1103, %v1046
      %1124 = vst.msk [vmem:[#allocation3 + $0xa0] sm:$0xff] %vm1103, %v1048
      %1125 = vst.msk [vmem:[#allocation3 + $0xa8] sm:$0xff] %vm1103, %v1050
      %1126 = vst.msk [vmem:[#allocation3 + $0xb0] sm:$0xff] %vm1103, %v1052
      %1127 = vst.msk [vmem:[#allocation3 + $0xb8] sm:$0xff] %vm1103, %v1054
      %1128 = vst.msk [vmem:[#allocation3 + $0xc0] sm:$0xff] %vm1103, %v1056
      %1129 = vst.msk [vmem:[#allocation3 + $0xc8] sm:$0xff] %vm1103, %v1058
      %1130 = vst.msk [vmem:[#allocation3 + $0xd0] sm:$0xff] %vm1103, %v1060
      %1131 = vst.msk [vmem:[#allocation3 + $0xd8] sm:$0xff] %vm1103, %v1062
      %1132 = vst.msk [vmem:[#allocation3 + $0xe0] sm:$0xff] %vm1103, %v1064
      %1133 = vst.msk [vmem:[#allocation3 + $0xe8] sm:$0xff] %vm1103, %v1066
      %1134 = vst.msk [vmem:[#allocation3 + $0xf0] sm:$0xff] %vm1103, %v1068
      %1135 = vst.msk [vmem:[#allocation3 + $0xf8] sm:$0xff] %vm1103, %v1070
      %v1137 = vrot.slane %v499, 1
      %v1138 = vrot.slane %v500, 1
      %v1139 = vsel %vm585, %v1137, %v1138
      %v1140 = vrot.slane %v501, 1
      %v1141 = vsel %vm585, %v1138, %v1140
      %1142 = vrot.lane.b32.xlu0 %v593, 32
      %v1143 = vpop.permute.xlu0 %1142
      %1144 = vrot.lane.b32.xlu0 %v595, 32
      %v1145 = vpop.permute.xlu0 %1144
      %1146 = vrot.lane.b32.xlu0 %v598, 32
      %v1147 = vpop.permute.xlu0 %1146
      %1148 = vrot.lane.b32.xlu0 %v600, 32
      %v1149 = vpop.permute.xlu0 %1148
      %1150 = vrot.lane.b32.xlu0 %v603, 32
      %v1151 = vpop.permute.xlu0 %1150
      %1152 = vrot.lane.b32.xlu0 %v605, 32
      %v1153 = vpop.permute.xlu0 %1152
      %1154 = vrot.lane.b32.xlu0 %v608, 32
      %v1155 = vpop.permute.xlu0 %1154
      %1156 = vrot.lane.b32.xlu0 %v610, 32
      %v1157 = vpop.permute.xlu0 %1156
      %1158 = vrot.lane.b32.xlu0 %v613, 32
      %v1159 = vpop.permute.xlu0 %1158
      %1160 = vrot.lane.b32.xlu0 %v615, 32
      %v1161 = vpop.permute.xlu0 %1160
      %1162 = vrot.lane.b32.xlu0 %v618, 32
      %v1163 = vpop.permute.xlu0 %1162
      %1164 = vrot.lane.b32.xlu0 %v620, 32
      %v1165 = vpop.permute.xlu0 %1164
      %1166 = vrot.lane.b32.xlu0 %v623, 32
      %v1167 = vpop.permute.xlu0 %1166
      %1168 = vrot.lane.b32.xlu0 %v625, 32
      %v1169 = vpop.permute.xlu0 %1168
      %1170 = vrot.lane.b32.xlu0 %v628, 32
      %v1171 = vpop.permute.xlu0 %1170
      %1172 = vrot.lane.b32.xlu0 %v630, 32
      %v1173 = vpop.permute.xlu0 %1172
      %1174 = vrot.lane.b32.xlu0 %v633, 32
      %v1175 = vpop.permute.xlu0 %1174
      %1176 = vrot.lane.b32.xlu0 %v635, 32
      %v1177 = vpop.permute.xlu0 %1176
      %1178 = vrot.lane.b32.xlu0 %v638, 32
      %v1179 = vpop.permute.xlu0 %1178
      %1180 = vrot.lane.b32.xlu0 %v640, 32
      %v1181 = vpop.permute.xlu0 %1180
      %1182 = vrot.lane.b32.xlu0 %v643, 32
      %v1183 = vpop.permute.xlu0 %1182
      %1184 = vrot.lane.b32.xlu0 %v645, 32
      %v1185 = vpop.permute.xlu0 %1184
      %1186 = vrot.lane.b32.xlu0 %v648, 32
      %v1187 = vpop.permute.xlu0 %1186
      %1188 = vrot.lane.b32.xlu0 %v650, 32
      %v1189 = vpop.permute.xlu0 %1188
      %1190 = vrot.lane.b32.xlu0 %v653, 32
      %v1191 = vpop.permute.xlu0 %1190
      %1192 = vrot.lane.b32.xlu0 %v655, 32
      %v1193 = vpop.permute.xlu0 %1192
      %1194 = vrot.lane.b32.xlu0 %v658, 32
      %v1195 = vpop.permute.xlu0 %1194
      %1196 = vrot.lane.b32.xlu0 %v660, 32
      %v1197 = vpop.permute.xlu0 %1196
      %1198 = vrot.lane.b32.xlu0 %v663, 32
      %v1199 = vpop.permute.xlu0 %1198
      %1200 = vrot.lane.b32.xlu0 %v665, 32
      %v1201 = vpop.permute.xlu0 %1200
      %1202 = vrot.lane.b32.xlu0 %v1139, 32
      %v1203 = vpop.permute.xlu0 %1202
      %1204 = vrot.lane.b32.xlu0 %v1141, 32
      %v1205 = vpop.permute.xlu0 %1204
      %vm1238 = vcmask 326912
      %1239 = vst.msk [vmem:[#allocation3] sm:$0xff] %vm1238, %v1143
      %1240 = vst.msk [vmem:[#allocation3 + $0x8] sm:$0xff] %vm1238, %v1145
      %1241 = vst.msk [vmem:[#allocation3 + $0x10] sm:$0xff] %vm1238, %v1147
      %1242 = vst.msk [vmem:[#allocation3 + $0x18] sm:$0xff] %vm1238, %v1149
      %1243 = vst.msk [vmem:[#allocation3 + $0x20] sm:$0xff] %vm1238, %v1151
      %1244 = vst.msk [vmem:[#allocation3 + $0x28] sm:$0xff] %vm1238, %v1153
      %1245 = vst.msk [vmem:[#allocation3 + $0x30] sm:$0xff] %vm1238, %v1155
      %1246 = vst.msk [vmem:[#allocation3 + $0x38] sm:$0xff] %vm1238, %v1157
      %1247 = vst.msk [vmem:[#allocation3 + $0x40] sm:$0xff] %vm1238, %v1159
      %1248 = vst.msk [vmem:[#allocation3 + $0x48] sm:$0xff] %vm1238, %v1161
      %1249 = vst.msk [vmem:[#allocation3 + $0x50] sm:$0xff] %vm1238, %v1163
      %1250 = vst.msk [vmem:[#allocation3 + $0x58] sm:$0xff] %vm1238, %v1165
      %1251 = vst.msk [vmem:[#allocation3 + $0x60] sm:$0xff] %vm1238, %v1167
      %1252 = vst.msk [vmem:[#allocation3 + $0x68] sm:$0xff] %vm1238, %v1169
      %1253 = vst.msk [vmem:[#allocation3 + $0x70] sm:$0xff] %vm1238, %v1171
      %1254 = vst.msk [vmem:[#allocation3 + $0x78] sm:$0xff] %vm1238, %v1173
      %1255 = vst.msk [vmem:[#allocation3 + $0x80] sm:$0xff] %vm1238, %v1175
      %1256 = vst.msk [vmem:[#allocation3 + $0x88] sm:$0xff] %vm1238, %v1177
      %1257 = vst.msk [vmem:[#allocation3 + $0x90] sm:$0xff] %vm1238, %v1179
      %1258 = vst.msk [vmem:[#allocation3 + $0x98] sm:$0xff] %vm1238, %v1181
      %1259 = vst.msk [vmem:[#allocation3 + $0xa0] sm:$0xff] %vm1238, %v1183
      %1260 = vst.msk [vmem:[#allocation3 + $0xa8] sm:$0xff] %vm1238, %v1185
      %1261 = vst.msk [vmem:[#allocation3 + $0xb0] sm:$0xff] %vm1238, %v1187
      %1262 = vst.msk [vmem:[#allocation3 + $0xb8] sm:$0xff] %vm1238, %v1189
      %1263 = vst.msk [vmem:[#allocation3 + $0xc0] sm:$0xff] %vm1238, %v1191
      %1264 = vst.msk [vmem:[#allocation3 + $0xc8] sm:$0xff] %vm1238, %v1193
      %1265 = vst.msk [vmem:[#allocation3 + $0xd0] sm:$0xff] %vm1238, %v1195
      %1266 = vst.msk [vmem:[#allocation3 + $0xd8] sm:$0xff] %vm1238, %v1197
      %1267 = vst.msk [vmem:[#allocation3 + $0xe0] sm:$0xff] %vm1238, %v1199
      %1268 = vst.msk [vmem:[#allocation3 + $0xe8] sm:$0xff] %vm1238, %v1201
      %1269 = vst.msk [vmem:[#allocation3 + $0xf0] sm:$0xff] %vm1238, %v1203
      %1270 = vst.msk [vmem:[#allocation3 + $0xf8] sm:$0xff] %vm1238, %v1205
      %v1271 = vrot.slane %v499, 2
      %v1272 = vrot.slane %v500, 2
      %v1273 = vsel %vm795, %v1271, %v1272
      %v1274 = vrot.slane %v501, 2
      %v1275 = vsel %vm795, %v1272, %v1274
      %1276 = vrot.lane.b32.xlu0 %v803, 40
      %v1277 = vpop.permute.xlu0 %1276
      %1278 = vrot.lane.b32.xlu0 %v805, 40
      %v1279 = vpop.permute.xlu0 %1278
      %1280 = vrot.lane.b32.xlu0 %v808, 40
      %v1281 = vpop.permute.xlu0 %1280
      %1282 = vrot.lane.b32.xlu0 %v810, 40
      %v1283 = vpop.permute.xlu0 %1282
      %1284 = vrot.lane.b32.xlu0 %v813, 40
      %v1285 = vpop.permute.xlu0 %1284
      %1286 = vrot.lane.b32.xlu0 %v815, 40
      %v1287 = vpop.permute.xlu0 %1286
      %1288 = vrot.lane.b32.xlu0 %v818, 40
      %v1289 = vpop.permute.xlu0 %1288
      %1290 = vrot.lane.b32.xlu0 %v820, 40
      %v1291 = vpop.permute.xlu0 %1290
      %1292 = vrot.lane.b32.xlu0 %v823, 40
      %v1293 = vpop.permute.xlu0 %1292
      %1294 = vrot.lane.b32.xlu0 %v825, 40
      %v1295 = vpop.permute.xlu0 %1294
      %1296 = vrot.lane.b32.xlu0 %v828, 40
      %v1297 = vpop.permute.xlu0 %1296
      %1298 = vrot.lane.b32.xlu0 %v830, 40
      %v1299 = vpop.permute.xlu0 %1298
      %1300 = vrot.lane.b32.xlu0 %v833, 40
      %v1301 = vpop.permute.xlu0 %1300
      %1302 = vrot.lane.b32.xlu0 %v835, 40
      %v1303 = vpop.permute.xlu0 %1302
      %1304 = vrot.lane.b32.xlu0 %v838, 40
      %v1305 = vpop.permute.xlu0 %1304
      %1306 = vrot.lane.b32.xlu0 %v840, 40
      %v1307 = vpop.permute.xlu0 %1306
      %1308 = vrot.lane.b32.xlu0 %v843, 40
      %v1309 = vpop.permute.xlu0 %1308
      %1310 = vrot.lane.b32.xlu0 %v845, 40
      %v1311 = vpop.permute.xlu0 %1310
      %1312 = vrot.lane.b32.xlu0 %v848, 40
      %v1313 = vpop.permute.xlu0 %1312
      %1314 = vrot.lane.b32.xlu0 %v850, 40
      %v1315 = vpop.permute.xlu0 %1314
      %1316 = vrot.lane.b32.xlu0 %v853, 40
      %v1317 = vpop.permute.xlu0 %1316
      %1318 = vrot.lane.b32.xlu0 %v855, 40
      %v1319 = vpop.permute.xlu0 %1318
      %1320 = vrot.lane.b32.xlu0 %v858, 40
      %v1321 = vpop.permute.xlu0 %1320
      %1322 = vrot.lane.b32.xlu0 %v860, 40
      %v1323 = vpop.permute.xlu0 %1322
      %1324 = vrot.lane.b32.xlu0 %v863, 40
      %v1325 = vpop.permute.xlu0 %1324
      %1326 = vrot.lane.b32.xlu0 %v865, 40
      %v1327 = vpop.permute.xlu0 %1326
      %1328 = vrot.lane.b32.xlu0 %v868, 40
      %v1329 = vpop.permute.xlu0 %1328
      %1330 = vrot.lane.b32.xlu0 %v870, 40
      %v1331 = vpop.permute.xlu0 %1330
      %1332 = vrot.lane.b32.xlu0 %v873, 40
      %v1333 = vpop.permute.xlu0 %1332
      %1334 = vrot.lane.b32.xlu0 %v875, 40
      %v1335 = vpop.permute.xlu0 %1334
      %1336 = vrot.lane.b32.xlu0 %v1273, 40
      %v1337 = vpop.permute.xlu0 %1336
      %1338 = vrot.lane.b32.xlu0 %v1275, 40
      %v1339 = vpop.permute.xlu0 %1338
      %vm1372 = vcmask 392512
      %1373 = vst.msk [vmem:[#allocation3] sm:$0xff] %vm1372, %v1277
      %1374 = vst.msk [vmem:[#allocation3 + $0x8] sm:$0xff] %vm1372, %v1279
      %1375 = vst.msk [vmem:[#allocation3 + $0x10] sm:$0xff] %vm1372, %v1281
      %1376 = vst.msk [vmem:[#allocation3 + $0x18] sm:$0xff] %vm1372, %v1283
      %1377 = vst.msk [vmem:[#allocation3 + $0x20] sm:$0xff] %vm1372, %v1285
      %1378 = vst.msk [vmem:[#allocation3 + $0x28] sm:$0xff] %vm1372, %v1287
      %1379 = vst.msk [vmem:[#allocation3 + $0x30] sm:$0xff] %vm1372, %v1289
      %1380 = vst.msk [vmem:[#allocation3 + $0x38] sm:$0xff] %vm1372, %v1291
      %1381 = vst.msk [vmem:[#allocation3 + $0x40] sm:$0xff] %vm1372, %v1293
      %1382 = vst.msk [vmem:[#allocation3 + $0x48] sm:$0xff] %vm1372, %v1295
      %1383 = vst.msk [vmem:[#allocation3 + $0x50] sm:$0xff] %vm1372, %v1297
      %1384 = vst.msk [vmem:[#allocation3 + $0x58] sm:$0xff] %vm1372, %v1299
      %1385 = vst.msk [vmem:[#allocation3 + $0x60] sm:$0xff] %vm1372, %v1301
      %1386 = vst.msk [vmem:[#allocation3 + $0x68] sm:$0xff] %vm1372, %v1303
      %1387 = vst.msk [vmem:[#allocation3 + $0x70] sm:$0xff] %vm1372, %v1305
      %1388 = vst.msk [vmem:[#allocation3 + $0x78] sm:$0xff] %vm1372, %v1307
      %1389 = vst.msk [vmem:[#allocation3 + $0x80] sm:$0xff] %vm1372, %v1309
      %1390 = vst.msk [vmem:[#allocation3 + $0x88] sm:$0xff] %vm1372, %v1311
      %1391 = vst.msk [vmem:[#allocation3 + $0x90] sm:$0xff] %vm1372, %v1313
      %1392 = vst.msk [vmem:[#allocation3 + $0x98] sm:$0xff] %vm1372, %v1315
      %1393 = vst.msk [vmem:[#allocation3 + $0xa0] sm:$0xff] %vm1372, %v1317
      %1394 = vst.msk [vmem:[#allocation3 + $0xa8] sm:$0xff] %vm1372, %v1319
      %1395 = vst.msk [vmem:[#allocation3 + $0xb0] sm:$0xff] %vm1372, %v1321
      %1396 = vst.msk [vmem:[#allocation3 + $0xb8] sm:$0xff] %vm1372, %v1323
      %1397 = vst.msk [vmem:[#allocation3 + $0xc0] sm:$0xff] %vm1372, %v1325
      %1398 = vst.msk [vmem:[#allocation3 + $0xc8] sm:$0xff] %vm1372, %v1327
      %1399 = vst.msk [vmem:[#allocation3 + $0xd0] sm:$0xff] %vm1372, %v1329
      %1400 = vst.msk [vmem:[#allocation3 + $0xd8] sm:$0xff] %vm1372, %v1331
      %1401 = vst.msk [vmem:[#allocation3 + $0xe0] sm:$0xff] %vm1372, %v1333
      %1402 = vst.msk [vmem:[#allocation3 + $0xe8] sm:$0xff] %vm1372, %v1335
      %1403 = vst.msk [vmem:[#allocation3 + $0xf0] sm:$0xff] %vm1372, %v1337
      %1404 = vst.msk [vmem:[#allocation3 + $0xf8] sm:$0xff] %vm1372, %v1339
      %1407 = vrot.lane.b32.xlu0 %v457, 48
      %v1408 = vpop.permute.xlu0 %1407
      %1409 = vrot.lane.b32.xlu0 %v458, 48
      %v1410 = vpop.permute.xlu0 %1409
      %1411 = vrot.lane.b32.xlu0 %v460, 48
      %v1412 = vpop.permute.xlu0 %1411
      %1413 = vrot.lane.b32.xlu0 %v461, 48
      %v1414 = vpop.permute.xlu0 %1413
      %1415 = vrot.lane.b32.xlu0 %v463, 48
      %v1416 = vpop.permute.xlu0 %1415
      %1417 = vrot.lane.b32.xlu0 %v464, 48
      %v1418 = vpop.permute.xlu0 %1417
      %1419 = vrot.lane.b32.xlu0 %v466, 48
      %v1420 = vpop.permute.xlu0 %1419
      %1421 = vrot.lane.b32.xlu0 %v467, 48
      %v1422 = vpop.permute.xlu0 %1421
      %1423 = vrot.lane.b32.xlu0 %v469, 48
      %v1424 = vpop.permute.xlu0 %1423
      %1425 = vrot.lane.b32.xlu0 %v470, 48
      %v1426 = vpop.permute.xlu0 %1425
      %1427 = vrot.lane.b32.xlu0 %v472, 48
      %v1428 = vpop.permute.xlu0 %1427
      %1429 = vrot.lane.b32.xlu0 %v473, 48
      %v1430 = vpop.permute.xlu0 %1429
      %1431 = vrot.lane.b32.xlu0 %v475, 48
      %v1432 = vpop.permute.xlu0 %1431
      %1433 = vrot.lane.b32.xlu0 %v476, 48
      %v1434 = vpop.permute.xlu0 %1433
      %1435 = vrot.lane.b32.xlu0 %v478, 48
      %v1436 = vpop.permute.xlu0 %1435
      %1437 = vrot.lane.b32.xlu0 %v479, 48
      %v1438 = vpop.permute.xlu0 %1437
      %1439 = vrot.lane.b32.xlu0 %v481, 48
      %v1440 = vpop.permute.xlu0 %1439
      %1441 = vrot.lane.b32.xlu0 %v482, 48
      %v1442 = vpop.permute.xlu0 %1441
      %1443 = vrot.lane.b32.xlu0 %v484, 48
      %v1444 = vpop.permute.xlu0 %1443
      %1445 = vrot.lane.b32.xlu0 %v485, 48
      %v1446 = vpop.permute.xlu0 %1445
      %1447 = vrot.lane.b32.xlu0 %v487, 48
      %v1448 = vpop.permute.xlu0 %1447
      %1449 = vrot.lane.b32.xlu0 %v488, 48
      %v1450 = vpop.permute.xlu0 %1449
      %1451 = vrot.lane.b32.xlu0 %v490, 48
      %v1452 = vpop.permute.xlu0 %1451
      %1453 = vrot.lane.b32.xlu0 %v491, 48
      %v1454 = vpop.permute.xlu0 %1453
      %1455 = vrot.lane.b32.xlu0 %v493, 48
      %v1456 = vpop.permute.xlu0 %1455
      %1457 = vrot.lane.b32.xlu0 %v494, 48
      %v1458 = vpop.permute.xlu0 %1457
      %1459 = vrot.lane.b32.xlu0 %v496, 48
      %v1460 = vpop.permute.xlu0 %1459
      %1461 = vrot.lane.b32.xlu0 %v497, 48
      %v1462 = vpop.permute.xlu0 %1461
      %1463 = vrot.lane.b32.xlu0 %v499, 48
      %v1464 = vpop.permute.xlu0 %1463
      %1465 = vrot.lane.b32.xlu0 %v500, 48
      %v1466 = vpop.permute.xlu0 %1465
      %1467 = vrot.lane.b32.xlu0 %v502, 48
      %v1468 = vpop.permute.xlu0 %1467
      %1469 = vrot.lane.b32.xlu0 %v503, 48
      %v1470 = vpop.permute.xlu0 %1469
      %vm1503 = vcmask 458112
      %1504 = vst.msk [vmem:[#allocation3] sm:$0xff] %vm1503, %v1408
      %1505 = vst.msk [vmem:[#allocation3 + $0x8] sm:$0xff] %vm1503, %v1410
      %1506 = vst.msk [vmem:[#allocation3 + $0x10] sm:$0xff] %vm1503, %v1412
      %1507 = vst.msk [vmem:[#allocation3 + $0x18] sm:$0xff] %vm1503, %v1414
      %1508 = vst.msk [vmem:[#allocation3 + $0x20] sm:$0xff] %vm1503, %v1416
      %1509 = vst.msk [vmem:[#allocation3 + $0x28] sm:$0xff] %vm1503, %v1418
      %1510 = vst.msk [vmem:[#allocation3 + $0x30] sm:$0xff] %vm1503, %v1420
      %1511 = vst.msk [vmem:[#allocation3 + $0x38] sm:$0xff] %vm1503, %v1422
      %1512 = vst.msk [vmem:[#allocation3 + $0x40] sm:$0xff] %vm1503, %v1424
      %1513 = vst.msk [vmem:[#allocation3 + $0x48] sm:$0xff] %vm1503, %v1426
      %1514 = vst.msk [vmem:[#allocation3 + $0x50] sm:$0xff] %vm1503, %v1428
      %1515 = vst.msk [vmem:[#allocation3 + $0x58] sm:$0xff] %vm1503, %v1430
      %1516 = vst.msk [vmem:[#allocation3 + $0x60] sm:$0xff] %vm1503, %v1432
      %1517 = vst.msk [vmem:[#allocation3 + $0x68] sm:$0xff] %vm1503, %v1434
      %1518 = vst.msk [vmem:[#allocation3 + $0x70] sm:$0xff] %vm1503, %v1436
      %1519 = vst.msk [vmem:[#allocation3 + $0x78] sm:$0xff] %vm1503, %v1438
      %1520 = vst.msk [vmem:[#allocation3 + $0x80] sm:$0xff] %vm1503, %v1440
      %1521 = vst.msk [vmem:[#allocation3 + $0x88] sm:$0xff] %vm1503, %v1442
      %1522 = vst.msk [vmem:[#allocation3 + $0x90] sm:$0xff] %vm1503, %v1444
      %1523 = vst.msk [vmem:[#allocation3 + $0x98] sm:$0xff] %vm1503, %v1446
      %1524 = vst.msk [vmem:[#allocation3 + $0xa0] sm:$0xff] %vm1503, %v1448
      %1525 = vst.msk [vmem:[#allocation3 + $0xa8] sm:$0xff] %vm1503, %v1450
      %1526 = vst.msk [vmem:[#allocation3 + $0xb0] sm:$0xff] %vm1503, %v1452
      %1527 = vst.msk [vmem:[#allocation3 + $0xb8] sm:$0xff] %vm1503, %v1454
      %1528 = vst.msk [vmem:[#allocation3 + $0xc0] sm:$0xff] %vm1503, %v1456
      %1529 = vst.msk [vmem:[#allocation3 + $0xc8] sm:$0xff] %vm1503, %v1458
      %1530 = vst.msk [vmem:[#allocation3 + $0xd0] sm:$0xff] %vm1503, %v1460
      %1531 = vst.msk [vmem:[#allocation3 + $0xd8] sm:$0xff] %vm1503, %v1462
      %1532 = vst.msk [vmem:[#allocation3 + $0xe0] sm:$0xff] %vm1503, %v1464
      %1533 = vst.msk [vmem:[#allocation3 + $0xe8] sm:$0xff] %vm1503, %v1466
      %1534 = vst.msk [vmem:[#allocation3 + $0xf0] sm:$0xff] %vm1503, %v1468
      %1535 = vst.msk [vmem:[#allocation3 + $0xf8] sm:$0xff] %vm1503, %v1470
      %v1537 = vrot.slane %v502, 1
      %v1538 = vrot.slane %v503, 1
      %v1539 = vsel %vm585, %v1537, %v1538
      %v1540 = vrot.slane %v504, 1
      %v1541 = vsel %vm585, %v1538, %v1540
      %1542 = vrot.lane.b32.xlu0 %v598, 56
      %v1543 = vpop.permute.xlu0 %1542
      %1544 = vrot.lane.b32.xlu0 %v600, 56
      %v1545 = vpop.permute.xlu0 %1544
      %1546 = vrot.lane.b32.xlu0 %v603, 56
      %v1547 = vpop.permute.xlu0 %1546
      %1548 = vrot.lane.b32.xlu0 %v605, 56
      %v1549 = vpop.permute.xlu0 %1548
      %1550 = vrot.lane.b32.xlu0 %v608, 56
      %v1551 = vpop.permute.xlu0 %1550
      %1552 = vrot.lane.b32.xlu0 %v610, 56
      %v1553 = vpop.permute.xlu0 %1552
      %1554 = vrot.lane.b32.xlu0 %v613, 56
      %v1555 = vpop.permute.xlu0 %1554
      %1556 = vrot.lane.b32.xlu0 %v615, 56
      %v1557 = vpop.permute.xlu0 %1556
      %1558 = vrot.lane.b32.xlu0 %v618, 56
      %v1559 = vpop.permute.xlu0 %1558
      %1560 = vrot.lane.b32.xlu0 %v620, 56
      %v1561 = vpop.permute.xlu0 %1560
      %1562 = vrot.lane.b32.xlu0 %v623, 56
      %v1563 = vpop.permute.xlu0 %1562
      %1564 = vrot.lane.b32.xlu0 %v625, 56
      %v1565 = vpop.permute.xlu0 %1564
      %1566 = vrot.lane.b32.xlu0 %v628, 56
      %v1567 = vpop.permute.xlu0 %1566
      %1568 = vrot.lane.b32.xlu0 %v630, 56
      %v1569 = vpop.permute.xlu0 %1568
      %1570 = vrot.lane.b32.xlu0 %v633, 56
      %v1571 = vpop.permute.xlu0 %1570
      %1572 = vrot.lane.b32.xlu0 %v635, 56
      %v1573 = vpop.permute.xlu0 %1572
      %1574 = vrot.lane.b32.xlu0 %v638, 56
      %v1575 = vpop.permute.xlu0 %1574
      %1576 = vrot.lane.b32.xlu0 %v640, 56
      %v1577 = vpop.permute.xlu0 %1576
      %1578 = vrot.lane.b32.xlu0 %v643, 56
      %v1579 = vpop.permute.xlu0 %1578
      %1580 = vrot.lane.b32.xlu0 %v645, 56
      %v1581 = vpop.permute.xlu0 %1580
      %1582 = vrot.lane.b32.xlu0 %v648, 56
      %v1583 = vpop.permute.xlu0 %1582
      %1584 = vrot.lane.b32.xlu0 %v650, 56
      %v1585 = vpop.permute.xlu0 %1584
      %1586 = vrot.lane.b32.xlu0 %v653, 56
      %v1587 = vpop.permute.xlu0 %1586
      %1588 = vrot.lane.b32.xlu0 %v655, 56
      %v1589 = vpop.permute.xlu0 %1588
      %1590 = vrot.lane.b32.xlu0 %v658, 56
      %v1591 = vpop.permute.xlu0 %1590
      %1592 = vrot.lane.b32.xlu0 %v660, 56
      %v1593 = vpop.permute.xlu0 %1592
      %1594 = vrot.lane.b32.xlu0 %v663, 56
      %v1595 = vpop.permute.xlu0 %1594
      %1596 = vrot.lane.b32.xlu0 %v665, 56
      %v1597 = vpop.permute.xlu0 %1596
      %1598 = vrot.lane.b32.xlu0 %v1139, 56
      %v1599 = vpop.permute.xlu0 %1598
      %1600 = vrot.lane.b32.xlu0 %v1141, 56
      %v1601 = vpop.permute.xlu0 %1600
      %1602 = vrot.lane.b32.xlu0 %v1539, 56
      %v1603 = vpop.permute.xlu0 %1602
      %1604 = vrot.lane.b32.xlu0 %v1541, 56
      %v1605 = vpop.permute.xlu0 %1604
      %vm1638 = vcmask 523712
      %1639 = vst.msk [vmem:[#allocation3] sm:$0xff] %vm1638, %v1543
      %1640 = vst.msk [vmem:[#allocation3 + $0x8] sm:$0xff] %vm1638, %v1545
      %1641 = vst.msk [vmem:[#allocation3 + $0x10] sm:$0xff] %vm1638, %v1547
      %1642 = vst.msk [vmem:[#allocation3 + $0x18] sm:$0xff] %vm1638, %v1549
      %1643 = vst.msk [vmem:[#allocation3 + $0x20] sm:$0xff] %vm1638, %v1551
      %1644 = vst.msk [vmem:[#allocation3 + $0x28] sm:$0xff] %vm1638, %v1553
      %1645 = vst.msk [vmem:[#allocation3 + $0x30] sm:$0xff] %vm1638, %v1555
      %1646 = vst.msk [vmem:[#allocation3 + $0x38] sm:$0xff] %vm1638, %v1557
      %1647 = vst.msk [vmem:[#allocation3 + $0x40] sm:$0xff] %vm1638, %v1559
      %1648 = vst.msk [vmem:[#allocation3 + $0x48] sm:$0xff] %vm1638, %v1561
      %1649 = vst.msk [vmem:[#allocation3 + $0x50] sm:$0xff] %vm1638, %v1563
      %1650 = vst.msk [vmem:[#allocation3 + $0x58] sm:$0xff] %vm1638, %v1565
      %1651 = vst.msk [vmem:[#allocation3 + $0x60] sm:$0xff] %vm1638, %v1567
      %1652 = vst.msk [vmem:[#allocation3 + $0x68] sm:$0xff] %vm1638, %v1569
      %1653 = vst.msk [vmem:[#allocation3 + $0x70] sm:$0xff] %vm1638, %v1571
      %1654 = vst.msk [vmem:[#allocation3 + $0x78] sm:$0xff] %vm1638, %v1573
      %1655 = vst.msk [vmem:[#allocation3 + $0x80] sm:$0xff] %vm1638, %v1575
      %1656 = vst.msk [vmem:[#allocation3 + $0x88] sm:$0xff] %vm1638, %v1577
      %1657 = vst.msk [vmem:[#allocation3 + $0x90] sm:$0xff] %vm1638, %v1579
      %1658 = vst.msk [vmem:[#allocation3 + $0x98] sm:$0xff] %vm1638, %v1581
      %1659 = vst.msk [vmem:[#allocation3 + $0xa0] sm:$0xff] %vm1638, %v1583
      %1660 = vst.msk [vmem:[#allocation3 + $0xa8] sm:$0xff] %vm1638, %v1585
      %1661 = vst.msk [vmem:[#allocation3 + $0xb0] sm:$0xff] %vm1638, %v1587
      %1662 = vst.msk [vmem:[#allocation3 + $0xb8] sm:$0xff] %vm1638, %v1589
      %1663 = vst.msk [vmem:[#allocation3 + $0xc0] sm:$0xff] %vm1638, %v1591
      %1664 = vst.msk [vmem:[#allocation3 + $0xc8] sm:$0xff] %vm1638, %v1593
      %1665 = vst.msk [vmem:[#allocation3 + $0xd0] sm:$0xff] %vm1638, %v1595
      %1666 = vst.msk [vmem:[#allocation3 + $0xd8] sm:$0xff] %vm1638, %v1597
      %1667 = vst.msk [vmem:[#allocation3 + $0xe0] sm:$0xff] %vm1638, %v1599
      %1668 = vst.msk [vmem:[#allocation3 + $0xe8] sm:$0xff] %vm1638, %v1601
      %1669 = vst.msk [vmem:[#allocation3 + $0xf0] sm:$0xff] %vm1638, %v1603
      %1670 = vst.msk [vmem:[#allocation3 + $0xf8] sm:$0xff] %vm1638, %v1605
      %v1671 = vrot.slane %v502, 2
      %v1672 = vrot.slane %v503, 2
      %v1673 = vsel %vm795, %v1671, %v1672
      %v1674 = vrot.slane %v504, 2
      %v1675 = vsel %vm795, %v1672, %v1674
      %1676 = vrot.lane.b32.xlu0 %v808, 64
      %v1677 = vpop.permute.xlu0 %1676
      %1678 = vrot.lane.b32.xlu0 %v810, 64
      %v1679 = vpop.permute.xlu0 %1678
      %1680 = vrot.lane.b32.xlu0 %v813, 64
      %v1681 = vpop.permute.xlu0 %1680
      %1682 = vrot.lane.b32.xlu0 %v815, 64
      %v1683 = vpop.permute.xlu0 %1682
      %1684 = vrot.lane.b32.xlu0 %v818, 64
      %v1685 = vpop.permute.xlu0 %1684
      %1686 = vrot.lane.b32.xlu0 %v820, 64
      %v1687 = vpop.permute.xlu0 %1686
      %1688 = vrot.lane.b32.xlu0 %v823, 64
      %v1689 = vpop.permute.xlu0 %1688
      %1690 = vrot.lane.b32.xlu0 %v825, 64
      %v1691 = vpop.permute.xlu0 %1690
      %1692 = vrot.lane.b32.xlu0 %v828, 64
      %v1693 = vpop.permute.xlu0 %1692
      %1694 = vrot.lane.b32.xlu0 %v830, 64
      %v1695 = vpop.permute.xlu0 %1694
      %1696 = vrot.lane.b32.xlu0 %v833, 64
      %v1697 = vpop.permute.xlu0 %1696
      %1698 = vrot.lane.b32.xlu0 %v835, 64
      %v1699 = vpop.permute.xlu0 %1698
      %1700 = vrot.lane.b32.xlu0 %v838, 64
      %v1701 = vpop.permute.xlu0 %1700
      %1702 = vrot.lane.b32.xlu0 %v840, 64
      %v1703 = vpop.permute.xlu0 %1702
      %1704 = vrot.lane.b32.xlu0 %v843, 64
      %v1705 = vpop.permute.xlu0 %1704
      %1706 = vrot.lane.b32.xlu0 %v845, 64
      %v1707 = vpop.permute.xlu0 %1706
      %1708 = vrot.lane.b32.xlu0 %v848, 64
      %v1709 = vpop.permute.xlu0 %1708
      %1710 = vrot.lane.b32.xlu0 %v850, 64
      %v1711 = vpop.permute.xlu0 %1710
      %1712 = vrot.lane.b32.xlu0 %v853, 64
      %v1713 = vpop.permute.xlu0 %1712
      %1714 = vrot.lane.b32.xlu0 %v855, 64
      %v1715 = vpop.permute.xlu0 %1714
      %1716 = vrot.lane.b32.xlu0 %v858, 64
      %v1717 = vpop.permute.xlu0 %1716
      %1718 = vrot.lane.b32.xlu0 %v860, 64
      %v1719 = vpop.permute.xlu0 %1718
      %1720 = vrot.lane.b32.xlu0 %v863, 64
      %v1721 = vpop.permute.xlu0 %1720
      %1722 = vrot.lane.b32.xlu0 %v865, 64
      %v1723 = vpop.permute.xlu0 %1722
      %1724 = vrot.lane.b32.xlu0 %v868, 64
      %v1725 = vpop.permute.xlu0 %1724
      %1726 = vrot.lane.b32.xlu0 %v870, 64
      %v1727 = vpop.permute.xlu0 %1726
      %1728 = vrot.lane.b32.xlu0 %v873, 64
      %v1729 = vpop.permute.xlu0 %1728
      %1730 = vrot.lane.b32.xlu0 %v875, 64
      %v1731 = vpop.permute.xlu0 %1730
      %1732 = vrot.lane.b32.xlu0 %v1273, 64
      %v1733 = vpop.permute.xlu0 %1732
      %1734 = vrot.lane.b32.xlu0 %v1275, 64
      %v1735 = vpop.permute.xlu0 %1734
      %1736 = vrot.lane.b32.xlu0 %v1673, 64
      %v1737 = vpop.permute.xlu0 %1736
      %1738 = vrot.lane.b32.xlu0 %v1675, 64
      %v1739 = vpop.permute.xlu0 %1738
      %vm1772 = vcmask 589312
      %1773 = vst.msk [vmem:[#allocation3] sm:$0xff] %vm1772, %v1677
      %1774 = vst.msk [vmem:[#allocation3 + $0x8] sm:$0xff] %vm1772, %v1679
      %1775 = vst.msk [vmem:[#allocation3 + $0x10] sm:$0xff] %vm1772, %v1681
      %1776 = vst.msk [vmem:[#allocation3 + $0x18] sm:$0xff] %vm1772, %v1683
      %1777 = vst.msk [vmem:[#allocation3 + $0x20] sm:$0xff] %vm1772, %v1685
      %1778 = vst.msk [vmem:[#allocation3 + $0x28] sm:$0xff] %vm1772, %v1687
      %1779 = vst.msk [vmem:[#allocation3 + $0x30] sm:$0xff] %vm1772, %v1689
      %1780 = vst.msk [vmem:[#allocation3 + $0x38] sm:$0xff] %vm1772, %v1691
      %1781 = vst.msk [vmem:[#allocation3 + $0x40] sm:$0xff] %vm1772, %v1693
      %1782 = vst.msk [vmem:[#allocation3 + $0x48] sm:$0xff] %vm1772, %v1695
      %1783 = vst.msk [vmem:[#allocation3 + $0x50] sm:$0xff] %vm1772, %v1697
      %1784 = vst.msk [vmem:[#allocation3 + $0x58] sm:$0xff] %vm1772, %v1699
      %1785 = vst.msk [vmem:[#allocation3 + $0x60] sm:$0xff] %vm1772, %v1701
      %1786 = vst.msk [vmem:[#allocation3 + $0x68] sm:$0xff] %vm1772, %v1703
      %1787 = vst.msk [vmem:[#allocation3 + $0x70] sm:$0xff] %vm1772, %v1705
      %1788 = vst.msk [vmem:[#allocation3 + $0x78] sm:$0xff] %vm1772, %v1707
      %1789 = vst.msk [vmem:[#allocation3 + $0x80] sm:$0xff] %vm1772, %v1709
      %1790 = vst.msk [vmem:[#allocation3 + $0x88] sm:$0xff] %vm1772, %v1711
      %1791 = vst.msk [vmem:[#allocation3 + $0x90] sm:$0xff] %vm1772, %v1713
      %1792 = vst.msk [vmem:[#allocation3 + $0x98] sm:$0xff] %vm1772, %v1715
      %1793 = vst.msk [vmem:[#allocation3 + $0xa0] sm:$0xff] %vm1772, %v1717
      %1794 = vst.msk [vmem:[#allocation3 + $0xa8] sm:$0xff] %vm1772, %v1719
      %1795 = vst.msk [vmem:[#allocation3 + $0xb0] sm:$0xff] %vm1772, %v1721
      %1796 = vst.msk [vmem:[#allocation3 + $0xb8] sm:$0xff] %vm1772, %v1723
      %1797 = vst.msk [vmem:[#allocation3 + $0xc0] sm:$0xff] %vm1772, %v1725
      %1798 = vst.msk [vmem:[#allocation3 + $0xc8] sm:$0xff] %vm1772, %v1727
      %1799 = vst.msk [vmem:[#allocation3 + $0xd0] sm:$0xff] %vm1772, %v1729
      %1800 = vst.msk [vmem:[#allocation3 + $0xd8] sm:$0xff] %vm1772, %v1731
      %1801 = vst.msk [vmem:[#allocation3 + $0xe0] sm:$0xff] %vm1772, %v1733
      %1802 = vst.msk [vmem:[#allocation3 + $0xe8] sm:$0xff] %vm1772, %v1735
      %1803 = vst.msk [vmem:[#allocation3 + $0xf0] sm:$0xff] %vm1772, %v1737
      %1804 = vst.msk [vmem:[#allocation3 + $0xf8] sm:$0xff] %vm1772, %v1739
      %v1805 = vld [vmem:[#allocation3] sm:$0xff]
      %v1806 = vld [vmem:[#allocation3 + $0x8] sm:$0xff]
      %v1807 = vld [vmem:[#allocation3 + $0x10] sm:$0xff]
      %v1808 = vld [vmem:[#allocation3 + $0x18] sm:$0xff]
      %v1809 = vld [vmem:[#allocation3 + $0x20] sm:$0xff]
      %v1810 = vld [vmem:[#allocation3 + $0x28] sm:$0xff]
      %v1811 = vld [vmem:[#allocation3 + $0x30] sm:$0xff]
      %v1812 = vld [vmem:[#allocation3 + $0x38] sm:$0xff]
      %v1813 = vld [vmem:[#allocation3 + $0x40] sm:$0xff]
      %v1814 = vld [vmem:[#allocation3 + $0x48] sm:$0xff]
      %v1815 = vld [vmem:[#allocation3 + $0x50] sm:$0xff]
      %v1816 = vld [vmem:[#allocation3 + $0x58] sm:$0xff]
      %v1817 = vld [vmem:[#allocation3 + $0x60] sm:$0xff]
      %v1818 = vld [vmem:[#allocation3 + $0x68] sm:$0xff]
      %v1819 = vld [vmem:[#allocation3 + $0x70] sm:$0xff]
      %v1820 = vld [vmem:[#allocation3 + $0x78] sm:$0xff]
      %v1821 = vld [vmem:[#allocation3 + $0x80] sm:$0xff]
      %v1822 = vld [vmem:[#allocation3 + $0x88] sm:$0xff]
      %v1823 = vld [vmem:[#allocation3 + $0x90] sm:$0xff]
      %v1824 = vld [vmem:[#allocation3 + $0x98] sm:$0xff]
      %v1825 = vld [vmem:[#allocation3 + $0xa0] sm:$0xff]
      %v1826 = vld [vmem:[#allocation3 + $0xa8] sm:$0xff]
      %v1827 = vld [vmem:[#allocation3 + $0xb0] sm:$0xff]
      %v1828 = vld [vmem:[#allocation3 + $0xb8] sm:$0xff]
      %v1829 = vld [vmem:[#allocation3 + $0xc0] sm:$0xff]
      %v1830 = vld [vmem:[#allocation3 + $0xc8] sm:$0xff]
      %v1831 = vld [vmem:[#allocation3 + $0xd0] sm:$0xff]
      %v1832 = vld [vmem:[#allocation3 + $0xd8] sm:$0xff]
      %v1833 = vld [vmem:[#allocation3 + $0xe0] sm:$0xff]
      %v1834 = vld [vmem:[#allocation3 + $0xe8] sm:$0xff]
      %v1835 = vld [vmem:[#allocation3 + $0xf0] sm:$0xff]
      %v1836 = vld [vmem:[#allocation3 + $0xf8] sm:$0xff]
      %v1837 = vld [vmem:[%s3] sm:$0xff]
      %v1838 = vld [vmem:[%s3 + $0x8] sm:$0xff]
      %v1839 = vld [vmem:[%s3 + $0x10] sm:$0xff]
      %v1840 = vld [vmem:[%s3 + $0x18] sm:$0xff]
      %v1841 = vld [vmem:[%s3 + $0x20] sm:$0xff]
      %v1842 = vld [vmem:[%s3 + $0x28] sm:$0xff]
      %v1843 = vld [vmem:[%s3 + $0x30] sm:$0xff]
      %v1844 = vld [vmem:[%s3 + $0x38] sm:$0xff]
      %v1845 = vld [vmem:[%s3 + $0x40] sm:$0xff]
      %vm1846 = vcmask 588800
      %v1848 = vsel %vm1846, %v1805, 0
      %v1851 = vsel %vm1846, %v1806, 0
      %v1854 = vsel %vm1846, %v1807, 0
      %v1857 = vsel %vm1846, %v1808, 0
      %v1860 = vsel %vm1846, %v1809, 0
      %v1863 = vsel %vm1846, %v1810, 0
      %v1866 = vsel %vm1846, %v1811, 0
      %v1869 = vsel %vm1846, %v1812, 0
      %v1872 = vsel %vm1846, %v1813, 0
      %v1875 = vsel %vm1846, %v1814, 0
      %v1878 = vsel %vm1846, %v1815, 0
      %v1881 = vsel %vm1846, %v1816, 0
      %v1884 = vsel %vm1846, %v1817, 0
      %v1887 = vsel %vm1846, %v1818, 0
      %v1890 = vsel %vm1846, %v1819, 0
      %v1893 = vsel %vm1846, %v1820, 0
      %v1896 = vsel %vm1846, %v1821, 0
      %v1899 = vsel %vm1846, %v1822, 0
      %v1902 = vsel %vm1846, %v1823, 0
      %v1905 = vsel %vm1846, %v1824, 0
      %v1908 = vsel %vm1846, %v1825, 0
      %v1911 = vsel %vm1846, %v1826, 0
      %v1914 = vsel %vm1846, %v1827, 0
      %v1917 = vsel %vm1846, %v1828, 0
      %v1920 = vsel %vm1846, %v1829, 0
      %v1923 = vsel %vm1846, %v1830, 0
      %v1926 = vsel %vm1846, %v1831, 0
      %v1929 = vsel %vm1846, %v1832, 0
      %v1932 = vsel %vm1846, %v1833, 0
      %v1935 = vsel %vm1846, %v1834, 0
      %v1938 = vsel %vm1846, %v1835, 0
      %v1941 = vsel %vm1846, %v1836, 0
      %1943 = vmatpush.msra.mxu0 0.0
      %1944 = vmatpush.msra.mxu0 0.0
      %1945 = vmatpush.msra.mxu0 0.0
      %1946 = vmatpush.msra.mxu0 0.0
      %1947 = vmatpush.msra.mxu0 0.0
      %1948 = vmatpush.msra.mxu0 0.0
      %1949 = vmatpush.msra.mxu0 0.0
      %1950 = vmatpush.msra.mxu0 %v1845
      %1951 = vmatpush.msra.mxu0 %v1844
      %1952 = vmatpush.msra.mxu0 %v1843
      %1953 = vmatpush.msra.mxu0 %v1842
      %1954 = vmatpush.msra.mxu0 %v1841
      %1955 = vmatpush.msra.mxu0 %v1840
      %1956 = vmatpush.msra.mxu0 %v1839
      %1957 = vmatpush.msra.mxu0 %v1838
      %1958 = vmatpush.msra.mxu0 %v1837
      %1959 = vmatmul.f32.gmra.mxu0 %v1848
      %v1960 = vpop.f32.mrf.mxu0
      %v1961 = vadd.f32 0.0, %v1960
      %1962 = vmatmul.f32.gmra.mxu0 %v1851
      %v1963 = vpop.f32.mrf.mxu0
      %v1964 = vadd.f32 0.0, %v1963
      %1965 = vmatmul.f32.gmra.mxu0 %v1854
      %v1966 = vpop.f32.mrf.mxu0
      %v1967 = vadd.f32 0.0, %v1966
      %1968 = vmatmul.f32.gmra.mxu0 %v1857
      %v1969 = vpop.f32.mrf.mxu0
      %v1970 = vadd.f32 0.0, %v1969
      %1971 = vmatmul.f32.gmra.mxu0 %v1860
      %v1972 = vpop.f32.mrf.mxu0
      %v1973 = vadd.f32 0.0, %v1972
      %1974 = vmatmul.f32.gmra.mxu0 %v1863
      %v1975 = vpop.f32.mrf.mxu0
      %v1976 = vadd.f32 0.0, %v1975
      %1977 = vmatmul.f32.gmra.mxu0 %v1866
      %v1978 = vpop.f32.mrf.mxu0
      %v1979 = vadd.f32 0.0, %v1978
      %1980 = vmatmul.f32.gmra.mxu0 %v1869
      %v1981 = vpop.f32.mrf.mxu0
      %v1982 = vadd.f32 0.0, %v1981
      %1983 = vmatmul.f32.gmra.mxu0 %v1872
      %v1984 = vpop.f32.mrf.mxu0
      %v1985 = vadd.f32 0.0, %v1984
      %1986 = vmatmul.f32.gmra.mxu0 %v1875
      %v1987 = vpop.f32.mrf.mxu0
      %v1988 = vadd.f32 0.0, %v1987
      %1989 = vmatmul.f32.gmra.mxu0 %v1878
      %v1990 = vpop.f32.mrf.mxu0
      %v1991 = vadd.f32 0.0, %v1990
      %1992 = vmatmul.f32.gmra.mxu0 %v1881
      %v1993 = vpop.f32.mrf.mxu0
      %v1994 = vadd.f32 0.0, %v1993
      %1995 = vmatmul.f32.gmra.mxu0 %v1884
      %v1996 = vpop.f32.mrf.mxu0
      %v1997 = vadd.f32 0.0, %v1996
      %1998 = vmatmul.f32.gmra.mxu0 %v1887
      %v1999 = vpop.f32.mrf.mxu0
      %v2000 = vadd.f32 0.0, %v1999
      %2001 = vmatmul.f32.gmra.mxu0 %v1890
      %v2002 = vpop.f32.mrf.mxu0
      %v2003 = vadd.f32 0.0, %v2002
      %2004 = vmatmul.f32.gmra.mxu0 %v1893
      %v2005 = vpop.f32.mrf.mxu0
      %v2006 = vadd.f32 0.0, %v2005
      %2007 = vmatmul.f32.gmra.mxu0 %v1896
      %v2008 = vpop.f32.mrf.mxu0
      %v2009 = vadd.f32 0.0, %v2008
      %2010 = vmatmul.f32.gmra.mxu0 %v1899
      %v2011 = vpop.f32.mrf.mxu0
      %v2012 = vadd.f32 0.0, %v2011
      %2013 = vmatmul.f32.gmra.mxu0 %v1902
      %v2014 = vpop.f32.mrf.mxu0
      %v2015 = vadd.f32 0.0, %v2014
      %2016 = vmatmul.f32.gmra.mxu0 %v1905
      %v2017 = vpop.f32.mrf.mxu0
      %v2018 = vadd.f32 0.0, %v2017
      %2019 = vmatmul.f32.gmra.mxu0 %v1908
      %v2020 = vpop.f32.mrf.mxu0
      %v2021 = vadd.f32 0.0, %v2020
      %2022 = vmatmul.f32.gmra.mxu0 %v1911
      %v2023 = vpop.f32.mrf.mxu0
      %v2024 = vadd.f32 0.0, %v2023
      %2025 = vmatmul.f32.gmra.mxu0 %v1914
      %v2026 = vpop.f32.mrf.mxu0
      %v2027 = vadd.f32 0.0, %v2026
      %2028 = vmatmul.f32.gmra.mxu0 %v1917
      %v2029 = vpop.f32.mrf.mxu0
      %v2030 = vadd.f32 0.0, %v2029
      %2031 = vmatmul.f32.gmra.mxu0 %v1920
      %v2032 = vpop.f32.mrf.mxu0
      %v2033 = vadd.f32 0.0, %v2032
      %2034 = vmatmul.f32.gmra.mxu0 %v1923
      %v2035 = vpop.f32.mrf.mxu0
      %v2036 = vadd.f32 0.0, %v2035
      %2037 = vmatmul.f32.gmra.mxu0 %v1926
      %v2038 = vpop.f32.mrf.mxu0
      %v2039 = vadd.f32 0.0, %v2038
      %2040 = vmatmul.f32.gmra.mxu0 %v1929
      %v2041 = vpop.f32.mrf.mxu0
      %v2042 = vadd.f32 0.0, %v2041
      %2043 = vmatmul.f32.gmra.mxu0 %v1932
      %v2044 = vpop.f32.mrf.mxu0
      %v2045 = vadd.f32 0.0, %v2044
      %2046 = vmatmul.f32.gmra.mxu0 %v1935
      %v2047 = vpop.f32.mrf.mxu0
      %v2048 = vadd.f32 0.0, %v2047
      %2049 = vmatmul.f32.gmra.mxu0 %v1938
      %v2050 = vpop.f32.mrf.mxu0
      %v2051 = vadd.f32 0.0, %v2050
      %2052 = vmatmul.f32.gmra.mxu0 %v1941
      %v2053 = vpop.f32.mrf.mxu0
      %v2054 = vadd.f32 0.0, %v2053
      %2055 = vdwg.mxu0
      %v2056 = vsel %vm372, %v1961, 0.0
      %v2057 = vsel %vm372, %v1964, 0.0
      %v2058 = vadd.f32 %v2056, %v2057
      %v2059 = vsel %vm372, %v1967, 0.0
      %v2060 = vadd.f32 %v2058, %v2059
      %v2061 = vsel %vm372, %v1970, 0.0
      %v2062 = vadd.f32 %v2060, %v2061
      %v2063 = vsel %vm372, %v1973, 0.0
      %v2064 = vadd.f32 %v2062, %v2063
      %v2065 = vsel %vm372, %v1976, 0.0
      %v2066 = vadd.f32 %v2064, %v2065
      %v2067 = vsel %vm372, %v1979, 0.0
      %v2068 = vadd.f32 %v2066, %v2067
      %v2069 = vsel %vm372, %v1982, 0.0
      %v2070 = vadd.f32 %v2068, %v2069
      %v2071 = vsel %vm372, %v1985, 0.0
      %v2072 = vadd.f32 %v2070, %v2071
      %v2073 = vsel %vm372, %v1988, 0.0
      %v2074 = vadd.f32 %v2072, %v2073
      %v2075 = vsel %vm372, %v1991, 0.0
      %v2076 = vadd.f32 %v2074, %v2075
      %v2077 = vsel %vm372, %v1994, 0.0
      %v2078 = vadd.f32 %v2076, %v2077
      %v2079 = vsel %vm372, %v1997, 0.0
      %v2080 = vadd.f32 %v2078, %v2079
      %v2081 = vsel %vm372, %v2000, 0.0
      %v2082 = vadd.f32 %v2080, %v2081
      %v2083 = vsel %vm372, %v2003, 0.0
      %v2084 = vadd.f32 %v2082, %v2083
      %v2085 = vsel %vm372, %v2006, 0.0
      %v2086 = vadd.f32 %v2084, %v2085
      %v2087 = vsel %vm372, %v2009, 0.0
      %v2088 = vadd.f32 %v2086, %v2087
      %v2089 = vsel %vm372, %v2012, 0.0
      %v2090 = vadd.f32 %v2088, %v2089
      %v2091 = vsel %vm372, %v2015, 0.0
      %v2092 = vadd.f32 %v2090, %v2091
      %v2093 = vsel %vm372, %v2018, 0.0
      %v2094 = vadd.f32 %v2092, %v2093
      %v2095 = vsel %vm372, %v2021, 0.0
      %v2096 = vadd.f32 %v2094, %v2095
      %v2097 = vsel %vm372, %v2024, 0.0
      %v2098 = vadd.f32 %v2096, %v2097
      %v2099 = vsel %vm372, %v2027, 0.0
      %v2100 = vadd.f32 %v2098, %v2099
      %v2101 = vsel %vm372, %v2030, 0.0
      %v2102 = vadd.f32 %v2100, %v2101
      %v2103 = vsel %vm372, %v2033, 0.0
      %v2104 = vadd.f32 %v2102, %v2103
      %v2105 = vsel %vm372, %v2036, 0.0
      %v2106 = vadd.f32 %v2104, %v2105
      %v2107 = vsel %vm372, %v2039, 0.0
      %v2108 = vadd.f32 %v2106, %v2107
      %v2109 = vsel %vm372, %v2042, 0.0
      %v2110 = vadd.f32 %v2108, %v2109
      %v2111 = vsel %vm372, %v2045, 0.0
      %v2112 = vadd.f32 %v2110, %v2111
      %v2113 = vsel %vm372, %v2048, 0.0
      %v2114 = vadd.f32 %v2112, %v2113
      %v2115 = vsel %vm372, %v2051, 0.0
      %v2116 = vadd.f32 %v2114, %v2115
      %v2117 = vsel %vm372, %v2054, 0.0
      %v2118 = vadd.f32 %v2116, %v2117
      %v2119 = vrot.slane %v2118, 4
      %v2120 = vadd.f32 %v2118, %v2119
      %v2121 = vrot.slane %v2120, 2
      %v2122 = vadd.f32 %v2120, %v2121
      %v2123 = vrot.slane %v2122, 1
      %v2124 = vadd.f32 %v2122, %v2123
      %2125 = vst.msk [vmem:[%s235] sm:$0x1] %vm381, %v2124
      %v2126 = vmul.f32 %v1961, %v1961
      %v2127 = vmul.f32 %v1964, %v1964
      %v2128 = vmul.f32 %v1967, %v1967
      %v2129 = vmul.f32 %v1970, %v1970
      %v2130 = vmul.f32 %v1973, %v1973
      %v2131 = vmul.f32 %v1976, %v1976
      %v2132 = vmul.f32 %v1979, %v1979
      %v2133 = vmul.f32 %v1982, %v1982
      %v2134 = vmul.f32 %v1985, %v1985
      %v2135 = vmul.f32 %v1988, %v1988
      %v2136 = vmul.f32 %v1991, %v1991
      %v2137 = vmul.f32 %v1994, %v1994
      %v2138 = vmul.f32 %v1997, %v1997
      %v2139 = vmul.f32 %v2000, %v2000
      %v2140 = vmul.f32 %v2003, %v2003
      %v2141 = vmul.f32 %v2006, %v2006
      %v2142 = vmul.f32 %v2009, %v2009
      %v2143 = vmul.f32 %v2012, %v2012
      %v2144 = vmul.f32 %v2015, %v2015
      %v2145 = vmul.f32 %v2018, %v2018
      %v2146 = vmul.f32 %v2021, %v2021
      %v2147 = vmul.f32 %v2024, %v2024
      %v2148 = vmul.f32 %v2027, %v2027
      %v2149 = vmul.f32 %v2030, %v2030
      %v2150 = vmul.f32 %v2033, %v2033
      %v2151 = vmul.f32 %v2036, %v2036
      %v2152 = vmul.f32 %v2039, %v2039
      %v2153 = vmul.f32 %v2042, %v2042
      %v2154 = vmul.f32 %v2045, %v2045
      %v2155 = vmul.f32 %v2048, %v2048
      %v2156 = vmul.f32 %v2051, %v2051
      %v2157 = vmul.f32 %v2054, %v2054
      %v2158 = vsel %vm372, %v2126, 0.0
      %v2159 = vsel %vm372, %v2127, 0.0
      %v2160 = vadd.f32 %v2158, %v2159
      %v2161 = vsel %vm372, %v2128, 0.0
      %v2162 = vadd.f32 %v2160, %v2161
      %v2163 = vsel %vm372, %v2129, 0.0
      %v2164 = vadd.f32 %v2162, %v2163
      %v2165 = vsel %vm372, %v2130, 0.0
      %v2166 = vadd.f32 %v2164, %v2165
      %v2167 = vsel %vm372, %v2131, 0.0
      %v2168 = vadd.f32 %v2166, %v2167
      %v2169 = vsel %vm372, %v2132, 0.0
      %v2170 = vadd.f32 %v2168, %v2169
      %v2171 = vsel %vm372, %v2133, 0.0
      %v2172 = vadd.f32 %v2170, %v2171
      %v2173 = vsel %vm372, %v2134, 0.0
      %v2174 = vadd.f32 %v2172, %v2173
      %v2175 = vsel %vm372, %v2135, 0.0
      %v2176 = vadd.f32 %v2174, %v2175
      %v2177 = vsel %vm372, %v2136, 0.0
      %v2178 = vadd.f32 %v2176, %v2177
      %v2179 = vsel %vm372, %v2137, 0.0
      %v2180 = vadd.f32 %v2178, %v2179
      %v2181 = vsel %vm372, %v2138, 0.0
      %v2182 = vadd.f32 %v2180, %v2181
      %v2183 = vsel %vm372, %v2139, 0.0
      %v2184 = vadd.f32 %v2182, %v2183
      %v2185 = vsel %vm372, %v2140, 0.0
      %v2186 = vadd.f32 %v2184, %v2185
      %v2187 = vsel %vm372, %v2141, 0.0
      %v2188 = vadd.f32 %v2186, %v2187
      %v2189 = vsel %vm372, %v2142, 0.0
      %v2190 = vadd.f32 %v2188, %v2189
      %v2191 = vsel %vm372, %v2143, 0.0
      %v2192 = vadd.f32 %v2190, %v2191
      %v2193 = vsel %vm372, %v2144, 0.0
      %v2194 = vadd.f32 %v2192, %v2193
      %v2195 = vsel %vm372, %v2145, 0.0
      %v2196 = vadd.f32 %v2194, %v2195
      %v2197 = vsel %vm372, %v2146, 0.0
      %v2198 = vadd.f32 %v2196, %v2197
      %v2199 = vsel %vm372, %v2147, 0.0
      %v2200 = vadd.f32 %v2198, %v2199
      %v2201 = vsel %vm372, %v2148, 0.0
      %v2202 = vadd.f32 %v2200, %v2201
      %v2203 = vsel %vm372, %v2149, 0.0
      %v2204 = vadd.f32 %v2202, %v2203
      %v2205 = vsel %vm372, %v2150, 0.0
      %v2206 = vadd.f32 %v2204, %v2205
      %v2207 = vsel %vm372, %v2151, 0.0
      %v2208 = vadd.f32 %v2206, %v2207
      %v2209 = vsel %vm372, %v2152, 0.0
      %v2210 = vadd.f32 %v2208, %v2209
      %v2211 = vsel %vm372, %v2153, 0.0
      %v2212 = vadd.f32 %v2210, %v2211
      %v2213 = vsel %vm372, %v2154, 0.0
      %v2214 = vadd.f32 %v2212, %v2213
      %v2215 = vsel %vm372, %v2155, 0.0
      %v2216 = vadd.f32 %v2214, %v2215
      %v2217 = vsel %vm372, %v2156, 0.0
      %v2218 = vadd.f32 %v2216, %v2217
      %v2219 = vsel %vm372, %v2157, 0.0
      %v2220 = vadd.f32 %v2218, %v2219
      %v2221 = vrot.slane %v2220, 4
      %v2222 = vadd.f32 %v2220, %v2221
      %v2223 = vrot.slane %v2222, 2
      %v2224 = vadd.f32 %v2222, %v2223
      %v2225 = vrot.slane %v2224, 1
      %v2226 = vadd.f32 %v2224, %v2225
      %2227 = vst.msk [vmem:[%s235 + $0x1] sm:$0x1] %vm381, %v2226
      %2228 = vst.msk [vmem:[%s231] sm:$0xff] %vm372, %v1961
      %2229 = vst.msk [vmem:[%s231 + $0x8] sm:$0xff] %vm372, %v1964
      %2230 = vst.msk [vmem:[%s231 + $0x10] sm:$0xff] %vm372, %v1967
      %2231 = vst.msk [vmem:[%s231 + $0x18] sm:$0xff] %vm372, %v1970
      %2232 = vst.msk [vmem:[%s231 + $0x20] sm:$0xff] %vm372, %v1973
      %2233 = vst.msk [vmem:[%s231 + $0x28] sm:$0xff] %vm372, %v1976
      %2234 = vst.msk [vmem:[%s231 + $0x30] sm:$0xff] %vm372, %v1979
      %2235 = vst.msk [vmem:[%s231 + $0x38] sm:$0xff] %vm372, %v1982
      %2236 = vst.msk [vmem:[%s231 + $0x40] sm:$0xff] %vm372, %v1985
      %2237 = vst.msk [vmem:[%s231 + $0x48] sm:$0xff] %vm372, %v1988
      %2238 = vst.msk [vmem:[%s231 + $0x50] sm:$0xff] %vm372, %v1991
      %2239 = vst.msk [vmem:[%s231 + $0x58] sm:$0xff] %vm372, %v1994
      %2240 = vst.msk [vmem:[%s231 + $0x60] sm:$0xff] %vm372, %v1997
      %2241 = vst.msk [vmem:[%s231 + $0x68] sm:$0xff] %vm372, %v2000
      %2242 = vst.msk [vmem:[%s231 + $0x70] sm:$0xff] %vm372, %v2003
      %2243 = vst.msk [vmem:[%s231 + $0x78] sm:$0xff] %vm372, %v2006
      %2244 = vst.msk [vmem:[%s231 + $0x80] sm:$0xff] %vm372, %v2009
      %2245 = vst.msk [vmem:[%s231 + $0x88] sm:$0xff] %vm372, %v2012
      %2246 = vst.msk [vmem:[%s231 + $0x90] sm:$0xff] %vm372, %v2015
      %2247 = vst.msk [vmem:[%s231 + $0x98] sm:$0xff] %vm372, %v2018
      %2248 = vst.msk [vmem:[%s231 + $0xa0] sm:$0xff] %vm372, %v2021
      %2249 = vst.msk [vmem:[%s231 + $0xa8] sm:$0xff] %vm372, %v2024
      %2250 = vst.msk [vmem:[%s231 + $0xb0] sm:$0xff] %vm372, %v2027
      %2251 = vst.msk [vmem:[%s231 + $0xb8] sm:$0xff] %vm372, %v2030
      %2252 = vst.msk [vmem:[%s231 + $0xc0] sm:$0xff] %vm372, %v2033
      %2253 = vst.msk [vmem:[%s231 + $0xc8] sm:$0xff] %vm372, %v2036
      %2254 = vst.msk [vmem:[%s231 + $0xd0] sm:$0xff] %vm372, %v2039
      %2255 = vst.msk [vmem:[%s231 + $0xd8] sm:$0xff] %vm372, %v2042
      %2256 = vst.msk [vmem:[%s231 + $0xe0] sm:$0xff] %vm372, %v2045
      %2257 = vst.msk [vmem:[%s231 + $0xe8] sm:$0xff] %vm372, %v2048
      %2258 = vst.msk [vmem:[%s231 + $0xf0] sm:$0xff] %vm372, %v2051
      %2259 = vst.msk [vmem:[%s231 + $0xf8] sm:$0xff] %vm372, %v2054
      %p2260 = scmp.lt.s32.totalorder %s17, 1
      %s2261 = scalar_select %p2260, %s17, 1
      %s2262 = smul.addr %s2261, 32
      %s2263 = smul.addr %s2262, 8
      %s2264 = scalar_lea.vmem %s4, %s2263
      %p2265 = scmp.lt.s32.totalorder %s17, 1
      %s2266 = scalar_select %p2265, %s17, 1
      %s2267 = smul.addr %s2266, 2
      %s2268 = scalar_lea.vmem %s5, %s2267
      // Predicated region
      $region37: #{basic_block.4} parent=35 // pred_check
        %p2269 = pneg %p124
      $region38: #{basic_block.4} parent=35 // pred_check_branch
        %2271 = sbr.rel (%p2269) target = $region40
      $region39: #{basic_block.4} parent=35 // pred_region
        _
      $region40: #{basic_block.4} parent=35 // pred_fallthru
        _
      // Predicated region
      $region41: #{basic_block.4} parent=35 // pred_check
        %p2272 = pneg %p150
      $region42: #{basic_block.4} parent=35 // pred_check_branch
        %2274 = sbr.rel (%p2272) target = $region44
      $region43: #{basic_block.4} parent=35 // pred_region
        _
      $region44: #{basic_block.4} parent=35 // pred_fallthru
        _
    $region36: #{basic_block.4} parent=5 // pred_fallthru
      _
    %p2275 = scmp.le.s32.totalorder 2, %s12
    // Predicated region
    $region45: #{basic_block.4} parent=5 // pred_check
      %p2276 = pneg %p2275
    $region46: #{basic_block.4} parent=5 // pred_check_branch
      %2278 = sbr.rel (%p2276) target = $region48
    $region47: #{basic_block.4} parent=5 // pred_region
      %s2279 = ssub.s32 %s12, 2
      // Predicated region
      $region49: #{basic_block.4} parent=47 // pred_check
        %p2280 = pneg %p130
      $region50: #{basic_block.4} parent=47 // pred_check_branch
        %2282 = sbr.rel (%p2280) target = $region52
      $region51: #{basic_block.4} parent=47 // pred_region
        %p2283 = scmp.lt.s32.totalorder %s18, 1
        %s2284 = scalar_select %p2283, %s18, 1
        %s2285 = smul.addr %s2284, 32
        %s2286 = smul.addr %s2285, 8
        %s2287 = scalar_lea.vmem %s4, %s2286
      $region52: #{basic_block.4} parent=47 // pred_fallthru
        _
      // Predicated region
      $region53: #{basic_block.4} parent=47 // pred_check
        %p2288 = pneg %p156
      $region54: #{basic_block.4} parent=47 // pred_check_branch
        %2290 = sbr.rel (%p2288) target = $region56
      $region55: #{basic_block.4} parent=47 // pred_region
        %p2291 = scmp.lt.s32.totalorder %s18, 1
        %s2292 = scalar_select %p2291, %s18, 1
        %s2293 = smul.addr %s2292, 2
        %s2294 = scalar_lea.vmem %s5, %s2293
      $region56: #{basic_block.4} parent=47 // pred_fallthru
        _
    $region48: #{basic_block.4} parent=5 // pred_fallthru
      _
  $region6: #{basic_block.4} parent=0 // loop_footer
    %s16 = sadd.s32 1, %s12
  $region7: #{basic_block.4} parent=0 // loop_footer_branch
    %11 = sbr.rel target = $region3
  $region8: #{basic_block.4} parent=0 // loop_exit
    _

</llo_original>
